<compile_context>
chip_gen: v5e
topology: v5e:2x2
jax: 0.10.0
libtpu: 0.0.40
codegen_flags: <defaults>
</compile_context>

<pallas_src>
import functools

import jax
import jax.numpy as jnp
from jax.experimental import pallas as pl
from jax.experimental.pallas import tpu as pltpu

LANES = 128
LEAKY_SLOPE = 0.2
BN_EPS = 1e-5
VMEM_LIMIT = 32 * 1024 * 1024


def _ceil_to(x, m):
    return (x + m - 1) // m * m


def _pad_last(x, c_pad):
    c = x.shape[-1]
    if c == c_pad:
        return x
    return jnp.pad(x, [(0, 0)] * (x.ndim - 1) + [(0, c_pad - c)])


# ----------------------------------------------------------------------------
# Kernel 1: conv1 (k=4, stride=2, pad=3, dilation=2) rewritten as a dense
# stride-1 valid 4x4 conv on the odd-subsampled input, fused with bias,
# LeakyReLU and BN1 batch statistics.  One grid step = one batch element.
# ----------------------------------------------------------------------------
def _conv1_kernel(x_ref, w_ref, b_ref, y_ref, st_ref, xpad_ref, acc_ref,
                  *, k, ho, wo, h_in, w_in):
    # x_ref   : (1, h_in, w_in, Cin) f32   odd rows/cols of x (channel padded)
    # w_ref   : (k*k, Cin, Cout) bf16      per-tap weight matrices
    # b_ref   : (1, Cout) f32              conv bias
    # y_ref   : (ho*wo, Cout) bf16         conv1 + bias + LeakyReLU
    # st_ref  : (8, Cout) f32              rows 0/1 = sum / sum-of-squares
    # xpad_ref: (ho+k-1, wo+9, Cin) f32    zero-padded staging buffer
    # acc_ref : (ho*wo, Cout) f32          single VMEM accumulator
    cin = x_ref.shape[-1]

    # Stage the zero-padded image once.  The data block sits at width offset 8
    # (sublane-tile aligned store); the zero halo is only ever read.
    xpad_ref[...] = jnp.zeros_like(xpad_ref)
    xpad_ref[2:2 + h_in, 8:8 + w_in, :] = x_ref[0]

    # One MXU dot per tap: M = ho*wo, K = Cin, N = Cout, f32 accumulation.
    acc_ref[...] = jnp.zeros_like(acc_ref)
    for kh in range(k):
        for kw in range(k):
            slab = xpad_ref[kh:kh + ho, kw + 6:kw + 6 + wo, :]
            slab = slab.reshape(ho * wo, cin).astype(jnp.bfloat16)
            acc_ref[...] += jnp.dot(slab, w_ref[kh * k + kw],
                                    preferred_element_type=jnp.float32)

    # Fused epilogue: bias + LeakyReLU; BN1 statistics of the exact
    # (bf16-rounded) values the next kernel will read.
    y = acc_ref[...] + b_ref[...]
    y = jnp.where(y >= 0, y, LEAKY_SLOPE * y)
    y_store = y.astype(y_ref.dtype)
    y_ref[...] = y_store

    yf = y_store.astype(jnp.float32)
    s0 = jnp.sum(yf, axis=0, keepdims=True)
    s1 = jnp.sum(yf * yf, axis=0, keepdims=True)
    row = jax.lax.broadcasted_iota(jnp.int32, st_ref.shape, 0)
    st_ref[...] = jnp.where(row == 0, s0, 0.0) + jnp.where(row == 1, s1, 0.0)


def conv1_fused(xo, w_taps, bias, *, k, ho, wo):
    n, h_in, w_in, cin = xo.shape
    kk, cin2, cout = w_taps.shape
    assert kk == k * k and cin2 == cin
    r = ho * wo
    kernel = functools.partial(_conv1_kernel, k=k, ho=ho, wo=wo,
                               h_in=h_in, w_in=w_in)
    return pl.pallas_call(
        kernel,
        grid=(n,),
        in_specs=[
            pl.BlockSpec((1, h_in, w_in, cin), lambda i: (i, 0, 0, 0)),
            pl.BlockSpec((kk, cin, cout), lambda i: (0, 0, 0)),
            pl.BlockSpec((1, cout), lambda i: (0, 0)),
        ],
        out_specs=[
            pl.BlockSpec((r, cout), lambda i: (i, 0)),
            pl.BlockSpec((8, cout), lambda i: (i, 0)),
        ],
        out_shape=[
            jax.ShapeDtypeStruct((n * r, cout), jnp.bfloat16),
            jax.ShapeDtypeStruct((n * 8, cout), jnp.float32),
        ],
        scratch_shapes=[
            pltpu.VMEM((ho + k - 1, wo + 9, cin), jnp.float32),
            pltpu.VMEM((r, cout), jnp.float32),
        ],
        compiler_params=pltpu.CompilerParams(
            dimension_semantics=("parallel",), vmem_limit_bytes=VMEM_LIMIT),
    )(xo, w_taps, bias)


# ----------------------------------------------------------------------------
# Kernel 2: BN1 affine + zero padding + conv2 (k=3, stride=1, pad=1) + bias,
# with BN2 batch statistics.  One grid step = one batch element.
# ----------------------------------------------------------------------------
def _conv2_kernel(y1_ref, sc1_ref, sh1_ref, w_ref, b_ref, y_ref, st_ref,
                  zpad_ref, acc_ref, *, k, ho, wo):
    # y1_ref  : (ho*wo, Cmid) bf16   conv1 output (pre-BN1)
    # sc1/sh1 : (1, Cmid) f32        BN1 scale / shift
    # w_ref   : (k*k, Cmid, Cout) bf16
    # b_ref   : (1, Cout) f32
    # y_ref   : (ho*wo, Cout) f32    conv2 + bias (pre-BN2)
    # st_ref  : (8, Cout) f32
    # zpad_ref: (ho+2, wo+9, Cmid) f32
    # acc_ref : (ho*wo, Cout) f32
    cmid = y1_ref.shape[-1]

    # BN1 affine fused here; zero-pad geometry staged in VMEM (data block at
    # width offset 8 -> aligned tile store, halo only read).
    z = y1_ref[...].astype(jnp.float32) * sc1_ref[...] + sh1_ref[...]
    zpad_ref[...] = jnp.zeros_like(zpad_ref)
    zpad_ref[1:1 + ho, 8:8 + wo, :] = z.reshape(ho, wo, cmid)

    acc_ref[...] = jnp.zeros_like(acc_ref)
    for kh in range(k):
        for kw in range(k):
            slab = zpad_ref[kh:kh + ho, kw + 7:kw + 7 + wo, :]
            slab = slab.reshape(ho * wo, cmid).astype(jnp.bfloat16)
            acc_ref[...] += jnp.dot(slab, w_ref[kh * k + kw],
                                    preferred_element_type=jnp.float32)

    y = acc_ref[...] + b_ref[...]
    y_ref[...] = y
    s0 = jnp.sum(y, axis=0, keepdims=True)
    s1 = jnp.sum(y * y, axis=0, keepdims=True)
    row = jax.lax.broadcasted_iota(jnp.int32, st_ref.shape, 0)
    st_ref[...] = jnp.where(row == 0, s0, 0.0) + jnp.where(row == 1, s1, 0.0)


def conv2_fused(y1, sc1, sh1, w_taps, bias, *, k, ho, wo, n):
    r = ho * wo
    cmid = y1.shape[-1]
    kk, cmid2, cout = w_taps.shape
    assert kk == k * k and cmid2 == cmid
    kernel = functools.partial(_conv2_kernel, k=k, ho=ho, wo=wo)
    return pl.pallas_call(
        kernel,
        grid=(n,),
        in_specs=[
            pl.BlockSpec((r, cmid), lambda i: (i, 0)),
            pl.BlockSpec((1, cmid), lambda i: (0, 0)),
            pl.BlockSpec((1, cmid), lambda i: (0, 0)),
            pl.BlockSpec((kk, cmid, cout), lambda i: (0, 0, 0)),
            pl.BlockSpec((1, cout), lambda i: (0, 0)),
        ],
        out_specs=[
            pl.BlockSpec((r, cout), lambda i: (i, 0)),
            pl.BlockSpec((8, cout), lambda i: (i, 0)),
        ],
        out_shape=[
            jax.ShapeDtypeStruct((n * r, cout), jnp.float32),
            jax.ShapeDtypeStruct((n * 8, cout), jnp.float32),
        ],
        scratch_shapes=[
            pltpu.VMEM((ho + 2, wo + 9, cmid), jnp.float32),
            pltpu.VMEM((r, cout), jnp.float32),
        ],
        compiler_params=pltpu.CompilerParams(
            dimension_semantics=("parallel",), vmem_limit_bytes=VMEM_LIMIT),
    )(y1, sc1, sh1, w_taps, bias)


# ----------------------------------------------------------------------------
# Kernel 3: BN2 affine + LeakyReLU + channel un-padding (only o_c channels are
# written -> no 128-lane f32 write amplification).
# ----------------------------------------------------------------------------
def _bn_leaky_slice_kernel(y_ref, sc_ref, sh_ref, o_ref):
    o_c = o_ref.shape[-1]
    y = y_ref[...] * sc_ref[...] + sh_ref[...]
    y = jnp.where(y >= 0, y, LEAKY_SLOPE * y)
    o_ref[...] = y[:, :o_c].astype(o_ref.dtype)


def bn2_leaky_out(y2, scale, shift, *, o_c, n, r):
    cp = y2.shape[-1]
    return pl.pallas_call(
        _bn_leaky_slice_kernel,
        grid=(n,),
        in_specs=[
            pl.BlockSpec((r, cp), lambda i: (i, 0)),
            pl.BlockSpec((1, cp), lambda i: (0, 0)),
            pl.BlockSpec((1, cp), lambda i: (0, 0)),
        ],
        out_specs=pl.BlockSpec((r, o_c), lambda i: (i, 0)),
        out_shape=jax.ShapeDtypeStruct((n * r, o_c), jnp.float32),
        compiler_params=pltpu.CompilerParams(
            dimension_semantics=("parallel",), vmem_limit_bytes=VMEM_LIMIT),
    )(y2, scale, shift)


# ----------------------------------------------------------------------------
# BN finalisation: per-channel (mean, var) -> (scale, shift).  Tiny vectors.
# ----------------------------------------------------------------------------
def bn_scale_shift(stats, gamma_p, beta_p, count):
    c = stats.shape[-1]
    st = stats.reshape(-1, 8, c)
    total = jnp.sum(st[:, 0, :], axis=0)
    totsq = jnp.sum(st[:, 1, :], axis=0)
    mean = total / count
    var = jnp.maximum(totsq / count - mean * mean, 0.0)     # biased var (PyTorch BN)
    scale = gamma_p / jnp.sqrt(var + BN_EPS)
    shift = beta_p - mean * scale
    return (scale.reshape(1, c).astype(jnp.float32),
            shift.reshape(1, c).astype(jnp.float32))


# ----------------------------------------------------------------------------
# Parameters (deterministic synthetic init) and kernel-layout preparation.
# ----------------------------------------------------------------------------
def init_params(key, in_c, o_c):
    ks = jax.random.split(key, 8)
    return {
        "w1": jax.random.normal(ks[0], (4, 4, in_c, in_c), jnp.float32) / jnp.sqrt(16.0 * in_c),
        "b1": 0.1 * jax.random.normal(ks[1], (in_c,), jnp.float32),
        "gamma1": 1.0 + 0.1 * jax.random.normal(ks[2], (in_c,), jnp.float32),
        "beta1": 0.1 * jax.random.normal(ks[3], (in_c,), jnp.float32),
        "w2": jax.random.normal(ks[4], (3, 3, in_c, o_c), jnp.float32) / jnp.sqrt(9.0 * in_c),
        "b2": 0.1 * jax.random.normal(ks[5], (o_c,), jnp.float32),
        "gamma2": 1.0 + 0.1 * jax.random.normal(ks[6], (o_c,), jnp.float32),
        "beta2": 0.1 * jax.random.normal(ks[7], (o_c,), jnp.float32),
    }


def _prep_conv(w, b, c_in_pad, c_out_pad):
    k = w.shape[0]
    wp = jnp.zeros((k, k, c_in_pad, c_out_pad), jnp.float32)
    wp = wp.at[:, :, : w.shape[2], : w.shape[3]].set(w)
    w_taps = wp.reshape(k * k, c_in_pad, c_out_pad).astype(jnp.bfloat16)
    bp = jnp.zeros((1, c_out_pad), jnp.float32).at[0, : b.shape[0]].set(b)
    return w_taps, bp


def _prep_bn(gamma, beta, c_pad):
    g = jnp.ones((c_pad,), jnp.float32).at[: gamma.shape[0]].set(gamma)
    bt = jnp.zeros((c_pad,), jnp.float32).at[: beta.shape[0]].set(beta)
    return g, bt


# ----------------------------------------------------------------------------
# conv_block forward (NCHW in, NCHW out), training-mode BatchNorm semantics.
# ----------------------------------------------------------------------------
def conv_block_forward(params, x_nchw, o_c):
    x = jnp.transpose(x_nchw, (0, 2, 3, 1)).astype(jnp.float32)     # NHWC
    n, h, w, in_c = x.shape
    cp_in = max(LANES, _ceil_to(in_c, LANES))
    cp_mid = cp_in                                                  # conv1: in_c -> in_c
    cp_out = max(LANES, _ceil_to(o_c, LANES))

    ho = (h - 1) // 2 + 1
    wo = (w - 1) // 2 + 1
    r = ho * wo
    count = n * r
    # TODO(synk): general spatial sizes need row tiling / masked tails.
    assert wo % 8 == 0 and r % 8 == 0, "demo path requires wo, ho*wo multiples of 8"

    # conv1: with stride == dilation == 2 every tap reads only odd rows/cols of
    # x, so conv1 is a dense stride-1 4x4 valid conv on the odd-subsampled
    # input embedded in a zero field.  The single wrapper producer below is
    # just that subsample (+ channel pad, a no-op once in_c is lane aligned);
    # the zero-pad geometry and bf16 cast happen inside the conv1 kernel.
    xo = _pad_last(x[:, 1::2, 1::2, :], cp_in)
    # TODO(synk): fold the stride-2 subsample into the kernel with
    # pl.ds(..., stride=2) reads to remove this last wrapper producer.

    w1_taps, b1 = _prep_conv(params["w1"], params["b1"], cp_in, cp_mid)
    y1, st1 = conv1_fused(xo, w1_taps, b1, k=4, ho=ho, wo=wo)

    g1, be1 = _prep_bn(params["gamma1"], params["beta1"], cp_mid)
    sc1, sh1 = bn_scale_shift(st1, g1, be1, count)

    # conv2: BN1 affine + zero padding fused into the conv kernel -> the mid
    # activation never takes an extra HBM round trip.
    w2_taps, b2 = _prep_conv(params["w2"], params["b2"], cp_mid, cp_out)
    y2, st2 = conv2_fused(y1, sc1, sh1, w2_taps, b2, k=3, ho=ho, wo=wo, n=n)

    g2, be2 = _prep_bn(params["gamma2"], params["beta2"], cp_out)
    sc2, sh2 = bn_scale_shift(st2, g2, be2, count)

    # BN2 + LeakyReLU + channel un-padding fused; only the compact
    # (n, ho, wo, o_c) tensor is written.
    out = bn2_leaky_out(y2, sc2, sh2, o_c=o_c, n=n, r=r)
    out = out.reshape(n, ho, wo, o_c)
    # TODO(synk): emit NCHW directly from the kernel (in-kernel transpose) to
    # remove this small compact-tensor transpose.
    return jnp.transpose(out, (0, 3, 1, 2))                         # NHWC -> NCHW


# ----------------------------------------------------------------------------
# main
# ----------------------------------------------------------------------------
if __name__ == "__main__":
    in_c, o_c = 4, 8
    n, h, w = 2, 16, 16

    key = jax.random.PRNGKey(0)
    pkey, xkey = jax.random.split(key)
    params = init_params(pkey, in_c, o_c)
    x = jax.random.normal(xkey, (n, in_c, h, w), jnp.float32)

    fwd = jax.jit(functools.partial(conv_block_forward, o_c=o_c))
    out = jax.block_until_ready(fwd(params, x))

    assert out.shape == (n, o_c, h // 2, w // 2), out.shape
    assert bool(jnp.all(jnp.isfinite(out)))
    print("KERNEL_OK")
</pallas_src>

<mosaic_0001>
module attributes {stable_mosaic.version = 11 : i64} {
  func.func @_conv1_kernel(%arg0: i32, %arg1: memref<1x8x8x128xf32, #tpu.memory_space<vmem>>, %arg2: memref<16x128x128xbf16, #tpu.memory_space<vmem>>, %arg3: memref<1x128xf32, #tpu.memory_space<vmem>>, %arg4: memref<64x128xbf16, #tpu.memory_space<vmem>>, %arg5: memref<8x128xf32, #tpu.memory_space<vmem>>, %arg6: memref<11x17x128xf32, #tpu.memory_space<vmem>>, %arg7: memref<64x128xf32, #tpu.memory_space<vmem>>) attributes {dimension_semantics = [#tpu.dimension_semantics<parallel>], iteration_bounds = array<i64: 2>, scalar_prefetch = 0 : i64, scratch_operands = 2 : i64, tpu.core_type = #tpu.core_type<tc>, window_params = [{transform_indices = @transform_0, window_bounds = array<i64: 1, 8, 8, 128>}, {pipeline_mode = #tpu.pipeline_mode<synchronous>, transform_indices = @transform_1, window_bounds = array<i64: 16, 128, 128>}, {pipeline_mode = #tpu.pipeline_mode<synchronous>, transform_indices = @transform_2, window_bounds = array<i64: 1, 128>}, {transform_indices = @transform_3, window_bounds = array<i64: 64, 128>}, {transform_indices = @transform_4, window_bounds = array<i64: 8, 128>}]} {
    %cst = arith.constant 0.000000e+00 : f32
    %0 = vector.broadcast %cst : f32 to vector<11x17x128xf32>
    %c0 = arith.constant 0 : index
    %c0_0 = arith.constant 0 : index
    %c0_1 = arith.constant 0 : index
    %1 = vector.load %arg6[%c0, %c0_0, %c0_1] : memref<11x17x128xf32, #tpu.memory_space<vmem>>, vector<11x17x128xf32>
    tpu.vector_store %arg6[%c0, %c0_0, %c0_1], %0 {strides = array<i32>} : memref<11x17x128xf32, #tpu.memory_space<vmem>>, vector<11x17x128xf32>,
    %c0_2 = arith.constant 0 : index
    %c0_3 = arith.constant 0 : index
    %c0_4 = arith.constant 0 : index
    %c0_5 = arith.constant 0 : index
    %2 = vector.load %arg1[%c0_2, %c0_3, %c0_4, %c0_5] : memref<1x8x8x128xf32, #tpu.memory_space<vmem>>, vector<1x8x8x128xf32>
    %3 = vector.shape_cast %2 : vector<1x8x8x128xf32> to vector<8x8x128xf32>
    %c2 = arith.constant 2 : index
    %c8 = arith.constant 8 : index
    %c0_6 = arith.constant 0 : index
    %4 = vector.load %arg6[%c2, %c8, %c0_6] : memref<11x17x128xf32, #tpu.memory_space<vmem>>, vector<8x8x128xf32>
    tpu.vector_store %arg6[%c2, %c8, %c0_6], %3 {strides = array<i32>} : memref<11x17x128xf32, #tpu.memory_space<vmem>>, vector<8x8x128xf32>,
    %cst_7 = arith.constant 0.000000e+00 : f32
    %5 = vector.broadcast %cst_7 : f32 to vector<64x128xf32>
    %c0_8 = arith.constant 0 : index
    %c0_9 = arith.constant 0 : index
    %6 = vector.load %arg7[%c0_8, %c0_9] : memref<64x128xf32, #tpu.memory_space<vmem>>, vector<64x128xf32>
    tpu.vector_store %arg7[%c0_8, %c0_9], %5 {strides = array<i32>} : memref<64x128xf32, #tpu.memory_space<vmem>>, vector<64x128xf32>,
    %c0_10 = arith.constant 0 : index
    %c6 = arith.constant 6 : index
    %c0_11 = arith.constant 0 : index
    %7 = vector.load %arg6[%c0_10, %c6, %c0_11] : memref<11x17x128xf32, #tpu.memory_space<vmem>>, vector<8x8x128xf32>
    %8 = vector.shape_cast %7 : vector<8x8x128xf32> to vector<64x128xf32>
    %9 = arith.truncf %8 : vector<64x128xf32> to vector<64x128xbf16>
    %c0_12 = arith.constant 0 : index
    %c0_13 = arith.constant 0 : index
    %10 = vector.load %arg7[%c0_12, %c0_13] : memref<64x128xf32, #tpu.memory_space<vmem>>, vector<64x128xf32>
    %c0_14 = arith.constant 0 : index
    %c0_15 = arith.constant 0 : index
    %c0_16 = arith.constant 0 : index
    %11 = vector.load %arg2[%c0_14, %c0_15, %c0_16] : memref<16x128x128xbf16, #tpu.memory_space<vmem>>, vector<1x128x128xbf16>
    %12 = vector.shape_cast %11 : vector<1x128x128xbf16> to vector<128x128xbf16>
    %cst_17 = arith.constant dense<0.000000e+00> : vector<64x128xf32>
    %13 = tpu.matmul %9, %12, %cst_17 {dimension_numbers = #tpu.dot_dimension_numbers<[1], [0], [0], [1], [0, 0, 1, 1], [], []>} : vector<64x128xbf16>, vector<128x128xbf16>, vector<64x128xf32> -> vector<64x128xf32>
    %14 = arith.addf %10, %13 : vector<64x128xf32>
    %c0_18 = arith.constant 0 : index
    %c0_19 = arith.constant 0 : index
    %15 = vector.load %arg7[%c0_18, %c0_19] : memref<64x128xf32, #tpu.memory_space<vmem>>, vector<64x128xf32>
    tpu.vector_store %arg7[%c0_18, %c0_19], %14 {strides = array<i32>} : memref<64x128xf32, #tpu.memory_space<vmem>>, vector<64x128xf32>,
    %c0_20 = arith.constant 0 : index
    %c7 = arith.constant 7 : index
    %c0_21 = arith.constant 0 : index
    %16 = vector.load %arg6[%c0_20, %c7, %c0_21] : memref<11x17x128xf32, #tpu.memory_space<vmem>>, vector<8x8x128xf32>
    %17 = vector.shape_cast %16 : vector<8x8x128xf32> to vector<64x128xf32>
    %18 = arith.truncf %17 : vector<64x128xf32> to vector<64x128xbf16>
    %c0_22 = arith.constant 0 : index
    %c0_23 = arith.constant 0 : index
    %19 = vector.load %arg7[%c0_22, %c0_23] : memref<64x128xf32, #tpu.memory_space<vmem>>, vector<64x128xf32>
    %c1 = arith.constant 1 : index
    %c0_24 = arith.constant 0 : index
    %c0_25 = arith.constant 0 : index
    %20 = vector.load %arg2[%c1, %c0_24, %c0_25] : memref<16x128x128xbf16, #tpu.memory_space<vmem>>, vector<1x128x128xbf16>
    %21 = vector.shape_cast %20 : vector<1x128x128xbf16> to vector<128x128xbf16>
    %cst_26 = arith.constant dense<0.000000e+00> : vector<64x128xf32>
    %22 = tpu.matmul %18, %21, %cst_26 {dimension_numbers = #tpu.dot_dimension_numbers<[1], [0], [0], [1], [0, 0, 1, 1], [], []>} : vector<64x128xbf16>, vector<128x128xbf16>, vector<64x128xf32> -> vector<64x128xf32>
    %23 = arith.addf %19, %22 : vector<64x128xf32>
    %c0_27 = arith.constant 0 : index
    %c0_28 = arith.constant 0 : index
    %24 = vector.load %arg7[%c0_27, %c0_28] : memref<64x128xf32, #tpu.memory_space<vmem>>, vector<64x128xf32>
    tpu.vector_store %arg7[%c0_27, %c0_28], %23 {strides = array<i32>} : memref<64x128xf32, #tpu.memory_space<vmem>>, vector<64x128xf32>,
    %c0_29 = arith.constant 0 : index
    %c8_30 = arith.constant 8 : index
    %c0_31 = arith.constant 0 : index
    %25 = vector.load %arg6[%c0_29, %c8_30, %c0_31] : memref<11x17x128xf32, #tpu.memory_space<vmem>>, vector<8x8x128xf32>
    %26 = vector.shape_cast %25 : vector<8x8x128xf32> to vector<64x128xf32>
    %27 = arith.truncf %26 : vector<64x128xf32> to vector<64x128xbf16>
    %c0_32 = arith.constant 0 : index
    %c0_33 = arith.constant 0 : index
    %28 = vector.load %arg7[%c0_32, %c0_33] : memref<64x128xf32, #tpu.memory_space<vmem>>, vector<64x128xf32>
    %c2_34 = arith.constant 2 : index
    %c0_35 = arith.constant 0 : index
    %c0_36 = arith.constant 0 : index
    %29 = vector.load %arg2[%c2_34, %c0_35, %c0_36] : memref<16x128x128xbf16, #tpu.memory_space<vmem>>, vector<1x128x128xbf16>
    %30 = vector.shape_cast %29 : vector<1x128x128xbf16> to vector<128x128xbf16>
    %cst_37 = arith.constant dense<0.000000e+00> : vector<64x128xf32>
    %31 = tpu.matmul %27, %30, %cst_37 {dimension_numbers = #tpu.dot_dimension_numbers<[1], [0], [0], [1], [0, 0, 1, 1], [], []>} : vector<64x128xbf16>, vector<128x128xbf16>, vector<64x128xf32> -> vector<64x128xf32>
    %32 = arith.addf %28, %31 : vector<64x128xf32>
    %c0_38 = arith.constant 0 : index
    %c0_39 = arith.constant 0 : index
    %33 = vector.load %arg7[%c0_38, %c0_39] : memref<64x128xf32, #tpu.memory_space<vmem>>, vector<64x128xf32>
    tpu.vector_store %arg7[%c0_38, %c0_39], %32 {strides = array<i32>} : memref<64x128xf32, #tpu.memory_space<vmem>>, vector<64x128xf32>,
    %c0_40 = arith.constant 0 : index
    %c9 = arith.constant 9 : index
    %c0_41 = arith.constant 0 : index
    %34 = vector.load %arg6[%c0_40, %c9, %c0_41] : memref<11x17x128xf32, #tpu.memory_space<vmem>>, vector<8x8x128xf32>
    %35 = vector.shape_cast %34 : vector<8x8x128xf32> to vector<64x128xf32>
    %36 = arith.truncf %35 : vector<64x128xf32> to vector<64x128xbf16>
    %c0_42 = arith.constant 0 : index
    %c0_43 = arith.constant 0 : index
    %37 = vector.load %arg7[%c0_42, %c0_43] : memref<64x128xf32, #tpu.memory_space<vmem>>, vector<64x128xf32>
    %c3 = arith.constant 3 : index
    %c0_44 = arith.constant 0 : index
    %c0_45 = arith.constant 0 : index
    %38 = vector.load %arg2[%c3, %c0_44, %c0_45] : memref<16x128x128xbf16, #tpu.memory_space<vmem>>, vector<1x128x128xbf16>
    %39 = vector.shape_cast %38 : vector<1x128x128xbf16> to vector<128x128xbf16>
    %cst_46 = arith.constant dense<0.000000e+00> : vector<64x128xf32>
    %40 = tpu.matmul %36, %39, %cst_46 {dimension_numbers = #tpu.dot_dimension_numbers<[1], [0], [0], [1], [0, 0, 1, 1], [], []>} : vector<64x128xbf16>, vector<128x128xbf16>, vector<64x128xf32> -> vector<64x128xf32>
    %41 = arith.addf %37, %40 : vector<64x128xf32>
    %c0_47 = arith.constant 0 : index
    %c0_48 = arith.constant 0 : index
    %42 = vector.load %arg7[%c0_47, %c0_48] : memref<64x128xf32, #tpu.memory_space<vmem>>, vector<64x128xf32>
    tpu.vector_store %arg7[%c0_47, %c0_48], %41 {strides = array<i32>} : memref<64x128xf32, #tpu.memory_space<vmem>>, vector<64x128xf32>,
    %c1_49 = arith.constant 1 : index
    %c6_50 = arith.constant 6 : index
    %c0_51 = arith.constant 0 : index
    %43 = vector.load %arg6[%c1_49, %c6_50, %c0_51] : memref<11x17x128xf32, #tpu.memory_space<vmem>>, vector<8x8x128xf32>
    %44 = vector.shape_cast %43 : vector<8x8x128xf32> to vector<64x128xf32>
    %45 = arith.truncf %44 : vector<64x128xf32> to vector<64x128xbf16>
    %c0_52 = arith.constant 0 : index
    %c0_53 = arith.constant 0 : index
    %46 = vector.load %arg7[%c0_52, %c0_53] : memref<64x128xf32, #tpu.memory_space<vmem>>, vector<64x128xf32>
    %c4 = arith.constant 4 : index
    %c0_54 = arith.constant 0 : index
    %c0_55 = arith.constant 0 : index
    %47 = vector.load %arg2[%c4, %c0_54, %c0_55] : memref<16x128x128xbf16, #tpu.memory_space<vmem>>, vector<1x128x128xbf16>
    %48 = vector.shape_cast %47 : vector<1x128x128xbf16> to vector<128x128xbf16>
    %cst_56 = arith.constant dense<0.000000e+00> : vector<64x128xf32>
    %49 = tpu.matmul %45, %48, %cst_56 {dimension_numbers = #tpu.dot_dimension_numbers<[1], [0], [0], [1], [0, 0, 1, 1], [], []>} : vector<64x128xbf16>, vector<128x128xbf16>, vector<64x128xf32> -> vector<64x128xf32>
    %50 = arith.addf %46, %49 : vector<64x128xf32>
    %c0_57 = arith.constant 0 : index
    %c0_58 = arith.constant 0 : index
    %51 = vector.load %arg7[%c0_57, %c0_58] : memref<64x128xf32, #tpu.memory_space<vmem>>, vector<64x128xf32>
    tpu.vector_store %arg7[%c0_57, %c0_58], %50 {strides = array<i32>} : memref<64x128xf32, #tpu.memory_space<vmem>>, vector<64x128xf32>,
    %c1_59 = arith.constant 1 : index
    %c7_60 = arith.constant 7 : index
    %c0_61 = arith.constant 0 : index
    %52 = vector.load %arg6[%c1_59, %c7_60, %c0_61] : memref<11x17x128xf32, #tpu.memory_space<vmem>>, vector<8x8x128xf32>
    %53 = vector.shape_cast %52 : vector<8x8x128xf32> to vector<64x128xf32>
    %54 = arith.truncf %53 : vector<64x128xf32> to vector<64x128xbf16>
    %c0_62 = arith.constant 0 : index
    %c0_63 = arith.constant 0 : index
    %55 = vector.load %arg7[%c0_62, %c0_63] : memref<64x128xf32, #tpu.memory_space<vmem>>, vector<64x128xf32>
    %c5 = arith.constant 5 : index
    %c0_64 = arith.constant 0 : index
    %c0_65 = arith.constant 0 : index
    %56 = vector.load %arg2[%c5, %c0_64, %c0_65] : memref<16x128x128xbf16, #tpu.memory_space<vmem>>, vector<1x128x128xbf16>
    %57 = vector.shape_cast %56 : vector<1x128x128xbf16> to vector<128x128xbf16>
    %cst_66 = arith.constant dense<0.000000e+00> : vector<64x128xf32>
    %58 = tpu.matmul %54, %57, %cst_66 {dimension_numbers = #tpu.dot_dimension_numbers<[1], [0], [0], [1], [0, 0, 1, 1], [], []>} : vector<64x128xbf16>, vector<128x128xbf16>, vector<64x128xf32> -> vector<64x128xf32>
    %59 = arith.addf %55, %58 : vector<64x128xf32>
    %c0_67 = arith.constant 0 : index
    %c0_68 = arith.constant 0 : index
    %60 = vector.load %arg7[%c0_67, %c0_68] : memref<64x128xf32, #tpu.memory_space<vmem>>, vector<64x128xf32>
    tpu.vector_store %arg7[%c0_67, %c0_68], %59 {strides = array<i32>} : memref<64x128xf32, #tpu.memory_space<vmem>>, vector<64x128xf32>,
    %c1_69 = arith.constant 1 : index
    %c8_70 = arith.constant 8 : index
    %c0_71 = arith.constant 0 : index
    %61 = vector.load %arg6[%c1_69, %c8_70, %c0_71] : memref<11x17x128xf32, #tpu.memory_space<vmem>>, vector<8x8x128xf32>
    %62 = vector.shape_cast %61 : vector<8x8x128xf32> to vector<64x128xf32>
    %63 = arith.truncf %62 : vector<64x128xf32> to vector<64x128xbf16>
    %c0_72 = arith.constant 0 : index
    %c0_73 = arith.constant 0 : index
    %64 = vector.load %arg7[%c0_72, %c0_73] : memref<64x128xf32, #tpu.memory_space<vmem>>, vector<64x128xf32>
    %c6_74 = arith.constant 6 : index
    %c0_75 = arith.constant 0 : index
    %c0_76 = arith.constant 0 : index
    %65 = vector.load %arg2[%c6_74, %c0_75, %c0_76] : memref<16x128x128xbf16, #tpu.memory_space<vmem>>, vector<1x128x128xbf16>
    %66 = vector.shape_cast %65 : vector<1x128x128xbf16> to vector<128x128xbf16>
    %cst_77 = arith.constant dense<0.000000e+00> : vector<64x128xf32>
    %67 = tpu.matmul %63, %66, %cst_77 {dimension_numbers = #tpu.dot_dimension_numbers<[1], [0], [0], [1], [0, 0, 1, 1], [], []>} : vector<64x128xbf16>, vector<128x128xbf16>, vector<64x128xf32> -> vector<64x128xf32>
    %68 = arith.addf %64, %67 : vector<64x128xf32>
    %c0_78 = arith.constant 0 : index
    %c0_79 = arith.constant 0 : index
    %69 = vector.load %arg7[%c0_78, %c0_79] : memref<64x128xf32, #tpu.memory_space<vmem>>, vector<64x128xf32>
    tpu.vector_store %arg7[%c0_78, %c0_79], %68 {strides = array<i32>} : memref<64x128xf32, #tpu.memory_space<vmem>>, vector<64x128xf32>,
    %c1_80 = arith.constant 1 : index
    %c9_81 = arith.constant 9 : index
    %c0_82 = arith.constant 0 : index
    %70 = vector.load %arg6[%c1_80, %c9_81, %c0_82] : memref<11x17x128xf32, #tpu.memory_space<vmem>>, vector<8x8x128xf32>
    %71 = vector.shape_cast %70 : vector<8x8x128xf32> to vector<64x128xf32>
    %72 = arith.truncf %71 : vector<64x128xf32> to vector<64x128xbf16>
    %c0_83 = arith.constant 0 : index
    %c0_84 = arith.constant 0 : index
    %73 = vector.load %arg7[%c0_83, %c0_84] : memref<64x128xf32, #tpu.memory_space<vmem>>, vector<64x128xf32>
    %c7_85 = arith.constant 7 : index
    %c0_86 = arith.constant 0 : index
    %c0_87 = arith.constant 0 : index
    %74 = vector.load %arg2[%c7_85, %c0_86, %c0_87] : memref<16x128x128xbf16, #tpu.memory_space<vmem>>, vector<1x128x128xbf16>
    %75 = vector.shape_cast %74 : vector<1x128x128xbf16> to vector<128x128xbf16>
    %cst_88 = arith.constant dense<0.000000e+00> : vector<64x128xf32>
    %76 = tpu.matmul %72, %75, %cst_88 {dimension_numbers = #tpu.dot_dimension_numbers<[1], [0], [0], [1], [0, 0, 1, 1], [], []>} : vector<64x128xbf16>, vector<128x128xbf16>, vector<64x128xf32> -> vector<64x128xf32>
    %77 = arith.addf %73, %76 : vector<64x128xf32>
    %c0_89 = arith.constant 0 : index
    %c0_90 = arith.constant 0 : index
    %78 = vector.load %arg7[%c0_89, %c0_90] : memref<64x128xf32, #tpu.memory_space<vmem>>, vector<64x128xf32>
    tpu.vector_store %arg7[%c0_89, %c0_90], %77 {strides = array<i32>} : memref<64x128xf32, #tpu.memory_space<vmem>>, vector<64x128xf32>,
    %c2_91 = arith.constant 2 : index
    %c6_92 = arith.constant 6 : index
    %c0_93 = arith.constant 0 : index
    %79 = vector.load %arg6[%c2_91, %c6_92, %c0_93] : memref<11x17x128xf32, #tpu.memory_space<vmem>>, vector<8x8x128xf32>
    %80 = vector.shape_cast %79 : vector<8x8x128xf32> to vector<64x128xf32>
    %81 = arith.truncf %80 : vector<64x128xf32> to vector<64x128xbf16>
    %c0_94 = arith.constant 0 : index
    %c0_95 = arith.constant 0 : index
    %82 = vector.load %arg7[%c0_94, %c0_95] : memref<64x128xf32, #tpu.memory_space<vmem>>, vector<64x128xf32>
    %c8_96 = arith.constant 8 : index
    %c0_97 = arith.constant 0 : index
    %c0_98 = arith.constant 0 : index
    %83 = vector.load %arg2[%c8_96, %c0_97, %c0_98] : memref<16x128x128xbf16, #tpu.memory_space<vmem>>, vector<1x128x128xbf16>
    %84 = vector.shape_cast %83 : vector<1x128x128xbf16> to vector<128x128xbf16>
    %cst_99 = arith.constant dense<0.000000e+00> : vector<64x128xf32>
    %85 = tpu.matmul %81, %84, %cst_99 {dimension_numbers = #tpu.dot_dimension_numbers<[1], [0], [0], [1], [0, 0, 1, 1], [], []>} : vector<64x128xbf16>, vector<128x128xbf16>, vector<64x128xf32> -> vector<64x128xf32>
    %86 = arith.addf %82, %85 : vector<64x128xf32>
    %c0_100 = arith.constant 0 : index
    %c0_101 = arith.constant 0 : index
    %87 = vector.load %arg7[%c0_100, %c0_101] : memref<64x128xf32, #tpu.memory_space<vmem>>, vector<64x128xf32>
    tpu.vector_store %arg7[%c0_100, %c0_101], %86 {strides = array<i32>} : memref<64x128xf32, #tpu.memory_space<vmem>>, vector<64x128xf32>,
    %c2_102 = arith.constant 2 : index
    %c7_103 = arith.constant 7 : index
    %c0_104 = arith.constant 0 : index
    %88 = vector.load %arg6[%c2_102, %c7_103, %c0_104] : memref<11x17x128xf32, #tpu.memory_space<vmem>>, vector<8x8x128xf32>
    %89 = vector.shape_cast %88 : vector<8x8x128xf32> to vector<64x128xf32>
    %90 = arith.truncf %89 : vector<64x128xf32> to vector<64x128xbf16>
    %c0_105 = arith.constant 0 : index
    %c0_106 = arith.constant 0 : index
    %91 = vector.load %arg7[%c0_105, %c0_106] : memref<64x128xf32, #tpu.memory_space<vmem>>, vector<64x128xf32>
    %c9_107 = arith.constant 9 : index
    %c0_108 = arith.constant 0 : index
    %c0_109 = arith.constant 0 : index
    %92 = vector.load %arg2[%c9_107, %c0_108, %c0_109] : memref<16x128x128xbf16, #tpu.memory_space<vmem>>, vector<1x128x128xbf16>
    %93 = vector.shape_cast %92 : vector<1x128x128xbf16> to vector<128x128xbf16>
    %cst_110 = arith.constant dense<0.000000e+00> : vector<64x128xf32>
    %94 = tpu.matmul %90, %93, %cst_110 {dimension_numbers = #tpu.dot_dimension_numbers<[1], [0], [0], [1], [0, 0, 1, 1], [], []>} : vector<64x128xbf16>, vector<128x128xbf16>, vector<64x128xf32> -> vector<64x128xf32>
    %95 = arith.addf %91, %94 : vector<64x128xf32>
    %c0_111 = arith.constant 0 : index
    %c0_112 = arith.constant 0 : index
    %96 = vector.load %arg7[%c0_111, %c0_112] : memref<64x128xf32, #tpu.memory_space<vmem>>, vector<64x128xf32>
    tpu.vector_store %arg7[%c0_111, %c0_112], %95 {strides = array<i32>} : memref<64x128xf32, #tpu.memory_space<vmem>>, vector<64x128xf32>,
    %c2_113 = arith.constant 2 : index
    %c8_114 = arith.constant 8 : index
    %c0_115 = arith.constant 0 : index
    %97 = vector.load %arg6[%c2_113, %c8_114, %c0_115] : memref<11x17x128xf32, #tpu.memory_space<vmem>>, vector<8x8x128xf32>
    %98 = vector.shape_cast %97 : vector<8x8x128xf32> to vector<64x128xf32>
    %99 = arith.truncf %98 : vector<64x128xf32> to vector<64x128xbf16>
    %c0_116 = arith.constant 0 : index
    %c0_117 = arith.constant 0 : index
    %100 = vector.load %arg7[%c0_116, %c0_117] : memref<64x128xf32, #tpu.memory_space<vmem>>, vector<64x128xf32>
    %c10 = arith.constant 10 : index
    %c0_118 = arith.constant 0 : index
    %c0_119 = arith.constant 0 : index
    %101 = vector.load %arg2[%c10, %c0_118, %c0_119] : memref<16x128x128xbf16, #tpu.memory_space<vmem>>, vector<1x128x128xbf16>
    %102 = vector.shape_cast %101 : vector<1x128x128xbf16> to vector<128x128xbf16>
    %cst_120 = arith.constant dense<0.000000e+00> : vector<64x128xf32>
    %103 = tpu.matmul %99, %102, %cst_120 {dimension_numbers = #tpu.dot_dimension_numbers<[1], [0], [0], [1], [0, 0, 1, 1], [], []>} : vector<64x128xbf16>, vector<128x128xbf16>, vector<64x128xf32> -> vector<64x128xf32>
    %104 = arith.addf %100, %103 : vector<64x128xf32>
    %c0_121 = arith.constant 0 : index
    %c0_122 = arith.constant 0 : index
    %105 = vector.load %arg7[%c0_121, %c0_122] : memref<64x128xf32, #tpu.memory_space<vmem>>, vector<64x128xf32>
    tpu.vector_store %arg7[%c0_121, %c0_122], %104 {strides = array<i32>} : memref<64x128xf32, #tpu.memory_space<vmem>>, vector<64x128xf32>,
    %c2_123 = arith.constant 2 : index
    %c9_124 = arith.constant 9 : index
    %c0_125 = arith.constant 0 : index
    %106 = vector.load %arg6[%c2_123, %c9_124, %c0_125] : memref<11x17x128xf32, #tpu.memory_space<vmem>>, vector<8x8x128xf32>
    %107 = vector.shape_cast %106 : vector<8x8x128xf32> to vector<64x128xf32>
    %108 = arith.truncf %107 : vector<64x128xf32> to vector<64x128xbf16>
    %c0_126 = arith.constant 0 : index
    %c0_127 = arith.constant 0 : index
    %109 = vector.load %arg7[%c0_126, %c0_127] : memref<64x128xf32, #tpu.memory_space<vmem>>, vector<64x128xf32>
    %c11 = arith.constant 11 : index
    %c0_128 = arith.constant 0 : index
    %c0_129 = arith.constant 0 : index
    %110 = vector.load %arg2[%c11, %c0_128, %c0_129] : memref<16x128x128xbf16, #tpu.memory_space<vmem>>, vector<1x128x128xbf16>
    %111 = vector.shape_cast %110 : vector<1x128x128xbf16> to vector<128x128xbf16>
    %cst_130 = arith.constant dense<0.000000e+00> : vector<64x128xf32>
    %112 = tpu.matmul %108, %111, %cst_130 {dimension_numbers = #tpu.dot_dimension_numbers<[1], [0], [0], [1], [0, 0, 1, 1], [], []>} : vector<64x128xbf16>, vector<128x128xbf16>, vector<64x128xf32> -> vector<64x128xf32>
    %113 = arith.addf %109, %112 : vector<64x128xf32>
    %c0_131 = arith.constant 0 : index
    %c0_132 = arith.constant 0 : index
    %114 = vector.load %arg7[%c0_131, %c0_132] : memref<64x128xf32, #tpu.memory_space<vmem>>, vector<64x128xf32>
    tpu.vector_store %arg7[%c0_131, %c0_132], %113 {strides = array<i32>} : memref<64x128xf32, #tpu.memory_space<vmem>>, vector<64x128xf32>,
    %c3_133 = arith.constant 3 : index
    %c6_134 = arith.constant 6 : index
    %c0_135 = arith.constant 0 : index
    %115 = vector.load %arg6[%c3_133, %c6_134, %c0_135] : memref<11x17x128xf32, #tpu.memory_space<vmem>>, vector<8x8x128xf32>
    %116 = vector.shape_cast %115 : vector<8x8x128xf32> to vector<64x128xf32>
    %117 = arith.truncf %116 : vector<64x128xf32> to vector<64x128xbf16>
    %c0_136 = arith.constant 0 : index
    %c0_137 = arith.constant 0 : index
    %118 = vector.load %arg7[%c0_136, %c0_137] : memref<64x128xf32, #tpu.memory_space<vmem>>, vector<64x128xf32>
    %c12 = arith.constant 12 : index
    %c0_138 = arith.constant 0 : index
    %c0_139 = arith.constant 0 : index
    %119 = vector.load %arg2[%c12, %c0_138, %c0_139] : memref<16x128x128xbf16, #tpu.memory_space<vmem>>, vector<1x128x128xbf16>
    %120 = vector.shape_cast %119 : vector<1x128x128xbf16> to vector<128x128xbf16>
    %cst_140 = arith.constant dense<0.000000e+00> : vector<64x128xf32>
    %121 = tpu.matmul %117, %120, %cst_140 {dimension_numbers = #tpu.dot_dimension_numbers<[1], [0], [0], [1], [0, 0, 1, 1], [], []>} : vector<64x128xbf16>, vector<128x128xbf16>, vector<64x128xf32> -> vector<64x128xf32>
    %122 = arith.addf %118, %121 : vector<64x128xf32>
    %c0_141 = arith.constant 0 : index
    %c0_142 = arith.constant 0 : index
    %123 = vector.load %arg7[%c0_141, %c0_142] : memref<64x128xf32, #tpu.memory_space<vmem>>, vector<64x128xf32>
    tpu.vector_store %arg7[%c0_141, %c0_142], %122 {strides = array<i32>} : memref<64x128xf32, #tpu.memory_space<vmem>>, vector<64x128xf32>,
    %c3_143 = arith.constant 3 : index
    %c7_144 = arith.constant 7 : index
    %c0_145 = arith.constant 0 : index
    %124 = vector.load %arg6[%c3_143, %c7_144, %c0_145] : memref<11x17x128xf32, #tpu.memory_space<vmem>>, vector<8x8x128xf32>
    %125 = vector.shape_cast %124 : vector<8x8x128xf32> to vector<64x128xf32>
    %126 = arith.truncf %125 : vector<64x128xf32> to vector<64x128xbf16>
    %c0_146 = arith.constant 0 : index
    %c0_147 = arith.constant 0 : index
    %127 = vector.load %arg7[%c0_146, %c0_147] : memref<64x128xf32, #tpu.memory_space<vmem>>, vector<64x128xf32>
    %c13 = arith.constant 13 : index
    %c0_148 = arith.constant 0 : index
    %c0_149 = arith.constant 0 : index
    %128 = vector.load %arg2[%c13, %c0_148, %c0_149] : memref<16x128x128xbf16, #tpu.memory_space<vmem>>, vector<1x128x128xbf16>
    %129 = vector.shape_cast %128 : vector<1x128x128xbf16> to vector<128x128xbf16>
    %cst_150 = arith.constant dense<0.000000e+00> : vector<64x128xf32>
    %130 = tpu.matmul %126, %129, %cst_150 {dimension_numbers = #tpu.dot_dimension_numbers<[1], [0], [0], [1], [0, 0, 1, 1], [], []>} : vector<64x128xbf16>, vector<128x128xbf16>, vector<64x128xf32> -> vector<64x128xf32>
    %131 = arith.addf %127, %130 : vector<64x128xf32>
    %c0_151 = arith.constant 0 : index
    %c0_152 = arith.constant 0 : index
    %132 = vector.load %arg7[%c0_151, %c0_152] : memref<64x128xf32, #tpu.memory_space<vmem>>, vector<64x128xf32>
    tpu.vector_store %arg7[%c0_151, %c0_152], %131 {strides = array<i32>} : memref<64x128xf32, #tpu.memory_space<vmem>>, vector<64x128xf32>,
    %c3_153 = arith.constant 3 : index
    %c8_154 = arith.constant 8 : index
    %c0_155 = arith.constant 0 : index
    %133 = vector.load %arg6[%c3_153, %c8_154, %c0_155] : memref<11x17x128xf32, #tpu.memory_space<vmem>>, vector<8x8x128xf32>
    %134 = vector.shape_cast %133 : vector<8x8x128xf32> to vector<64x128xf32>
    %135 = arith.truncf %134 : vector<64x128xf32> to vector<64x128xbf16>
    %c0_156 = arith.constant 0 : index
    %c0_157 = arith.constant 0 : index
    %136 = vector.load %arg7[%c0_156, %c0_157] : memref<64x128xf32, #tpu.memory_space<vmem>>, vector<64x128xf32>
    %c14 = arith.constant 14 : index
    %c0_158 = arith.constant 0 : index
    %c0_159 = arith.constant 0 : index
    %137 = vector.load %arg2[%c14, %c0_158, %c0_159] : memref<16x128x128xbf16, #tpu.memory_space<vmem>>, vector<1x128x128xbf16>
    %138 = vector.shape_cast %137 : vector<1x128x128xbf16> to vector<128x128xbf16>
    %cst_160 = arith.constant dense<0.000000e+00> : vector<64x128xf32>
    %139 = tpu.matmul %135, %138, %cst_160 {dimension_numbers = #tpu.dot_dimension_numbers<[1], [0], [0], [1], [0, 0, 1, 1], [], []>} : vector<64x128xbf16>, vector<128x128xbf16>, vector<64x128xf32> -> vector<64x128xf32>
    %140 = arith.addf %136, %139 : vector<64x128xf32>
    %c0_161 = arith.constant 0 : index
    %c0_162 = arith.constant 0 : index
    %141 = vector.load %arg7[%c0_161, %c0_162] : memref<64x128xf32, #tpu.memory_space<vmem>>, vector<64x128xf32>
    tpu.vector_store %arg7[%c0_161, %c0_162], %140 {strides = array<i32>} : memref<64x128xf32, #tpu.memory_space<vmem>>, vector<64x128xf32>,
    %c3_163 = arith.constant 3 : index
    %c9_164 = arith.constant 9 : index
    %c0_165 = arith.constant 0 : index
    %142 = vector.load %arg6[%c3_163, %c9_164, %c0_165] : memref<11x17x128xf32, #tpu.memory_space<vmem>>, vector<8x8x128xf32>
    %143 = vector.shape_cast %142 : vector<8x8x128xf32> to vector<64x128xf32>
    %144 = arith.truncf %143 : vector<64x128xf32> to vector<64x128xbf16>
    %c0_166 = arith.constant 0 : index
    %c0_167 = arith.constant 0 : index
    %145 = vector.load %arg7[%c0_166, %c0_167] : memref<64x128xf32, #tpu.memory_space<vmem>>, vector<64x128xf32>
    %c15 = arith.constant 15 : index
    %c0_168 = arith.constant 0 : index
    %c0_169 = arith.constant 0 : index
    %146 = vector.load %arg2[%c15, %c0_168, %c0_169] : memref<16x128x128xbf16, #tpu.memory_space<vmem>>, vector<1x128x128xbf16>
    %147 = vector.shape_cast %146 : vector<1x128x128xbf16> to vector<128x128xbf16>
    %cst_170 = arith.constant dense<0.000000e+00> : vector<64x128xf32>
    %148 = tpu.matmul %144, %147, %cst_170 {dimension_numbers = #tpu.dot_dimension_numbers<[1], [0], [0], [1], [0, 0, 1, 1], [], []>} : vector<64x128xbf16>, vector<128x128xbf16>, vector<64x128xf32> -> vector<64x128xf32>
    %149 = arith.addf %145, %148 : vector<64x128xf32>
    %c0_171 = arith.constant 0 : index
    %c0_172 = arith.constant 0 : index
    %150 = vector.load %arg7[%c0_171, %c0_172] : memref<64x128xf32, #tpu.memory_space<vmem>>, vector<64x128xf32>
    tpu.vector_store %arg7[%c0_171, %c0_172], %149 {strides = array<i32>} : memref<64x128xf32, #tpu.memory_space<vmem>>, vector<64x128xf32>,
    %c0_173 = arith.constant 0 : index
    %c0_174 = arith.constant 0 : index
    %151 = vector.load %arg7[%c0_173, %c0_174] : memref<64x128xf32, #tpu.memory_space<vmem>>, vector<64x128xf32>
    %c0_175 = arith.constant 0 : index
    %c0_176 = arith.constant 0 : index
    %152 = vector.load %arg3[%c0_175, %c0_176] : memref<1x128xf32, #tpu.memory_space<vmem>>, vector<1x128xf32>
    %153 = vector.broadcast %152 : vector<1x128xf32> to vector<64x128xf32>
    %154 = arith.addf %151, %153 : vector<64x128xf32>
    %cst_177 = arith.constant 0.000000e+00 : f32
    %155 = vector.broadcast %cst_177 : f32 to vector<64x128xf32>
    %156 = arith.cmpf oge, %154, %155 : vector<64x128xf32>
    %cst_178 = arith.constant 2.000000e-01 : f32
    %157 = vector.broadcast %cst_178 : f32 to vector<64x128xf32>
    %158 = arith.mulf %157, %154 : vector<64x128xf32>
    %159 = arith.select %156, %154, %158 : vector<64x128xi1>, vector<64x128xf32>
    %160 = arith.truncf %159 : vector<64x128xf32> to vector<64x128xbf16>
    %c0_179 = arith.constant 0 : index
    %c0_180 = arith.constant 0 : index
    %161 = vector.load %arg4[%c0_179, %c0_180] : memref<64x128xbf16, #tpu.memory_space<vmem>>, vector<64x128xbf16>
    tpu.vector_store %arg4[%c0_179, %c0_180], %160 {strides = array<i32>} : memref<64x128xbf16, #tpu.memory_space<vmem>>, vector<64x128xbf16>,
    %162 = arith.extf %160 : vector<64x128xbf16> to vector<64x128xf32>
    %cst_181 = arith.constant dense<0.000000e+00> : vector<128xf32>
    %163 = vector.multi_reduction <add>, %162, %cst_181 [0] : vector<64x128xf32> to vector<128xf32>
    %164 = vector.shape_cast %163 : vector<128xf32> to vector<1x128xf32>
    %165 = arith.mulf %162, %162 : vector<64x128xf32>
    %cst_182 = arith.constant dense<0.000000e+00> : vector<128xf32>
    %166 = vector.multi_reduction <add>, %165, %cst_182 [0] : vector<64x128xf32> to vector<128xf32>
    %167 = vector.shape_cast %166 : vector<128xf32> to vector<1x128xf32>
    %168 = tpu.iota {dimensions = array<i32: 0>} : vector<8x128xi32>
    %c0_i32 = arith.constant 0 : i32
    %169 = vector.broadcast %c0_i32 : i32 to vector<8x128xi32>
    %170 = arith.cmpi eq, %168, %169 : vector<8x128xi32>
    %cst_183 = arith.constant 0.000000e+00 : f32
    %171 = vector.shape_cast %164 : vector<1x128xf32> to vector<1x128xf32>
    %172 = vector.broadcast %171 : vector<1x128xf32> to vector<8x128xf32>
    %173 = vector.broadcast %cst_183 : f32 to vector<8x128xf32>
    %174 = arith.select %170, %172, %173 : vector<8x128xi1>, vector<8x128xf32>
    %c1_i32 = arith.constant 1 : i32
    %175 = vector.broadcast %c1_i32 : i32 to vector<8x128xi32>
    %176 = arith.cmpi eq, %168, %175 : vector<8x128xi32>
    %cst_184 = arith.constant 0.000000e+00 : f32
    %177 = vector.shape_cast %167 : vector<1x128xf32> to vector<1x128xf32>
    %178 = vector.broadcast %177 : vector<1x128xf32> to vector<8x128xf32>
    %179 = vector.broadcast %cst_184 : f32 to vector<8x128xf32>
    %180 = arith.select %176, %178, %179 : vector<8x128xi1>, vector<8x128xf32>
    %181 = arith.addf %174, %180 : vector<8x128xf32>
    %c0_185 = arith.constant 0 : index
    %c0_186 = arith.constant 0 : index
    %182 = vector.load %arg5[%c0_185, %c0_186] : memref<8x128xf32, #tpu.memory_space<vmem>>, vector<8x128xf32>
    tpu.vector_store %arg5[%c0_185, %c0_186], %181 {strides = array<i32>} : memref<8x128xf32, #tpu.memory_space<vmem>>, vector<8x128xf32>,
    return
  }
  func.func @transform_0(%arg0: i32) -> (i32, i32, i32, i32) {
    %c0_i32 = arith.constant 0 : i32
    %c0_i32_0 = arith.constant 0 : i32
    %c0_i32_1 = arith.constant 0 : i32
    %c0_i32_2 = arith.constant 0 : i32
    return %arg0, %c0_i32, %c0_i32_0, %c0_i32_1 : i32, i32, i32, i32
  }
  func.func @transform_1(%arg0: i32) -> (i32, i32, i32) {
    %c0_i32 = arith.constant 0 : i32
    %c0_i32_0 = arith.constant 0 : i32
    %c0_i32_1 = arith.constant 0 : i32
    %c0_i32_2 = arith.constant 0 : i32
    return %c0_i32, %c0_i32_0, %c0_i32_1 : i32, i32, i32
  }
  func.func @transform_2(%arg0: i32) -> (i32, i32) {
    %c0_i32 = arith.constant 0 : i32
    %c0_i32_0 = arith.constant 0 : i32
    %c0_i32_1 = arith.constant 0 : i32
    return %c0_i32, %c0_i32_0 : i32, i32
  }
  func.func @transform_3(%arg0: i32) -> (i32, i32) {
    %c0_i32 = arith.constant 0 : i32
    %c0_i32_0 = arith.constant 0 : i32
    return %arg0, %c0_i32 : i32, i32
  }
  func.func @transform_4(%arg0: i32) -> (i32, i32) {
    %c0_i32 = arith.constant 0 : i32
    %c0_i32_0 = arith.constant 0 : i32
    return %arg0, %c0_i32 : i32, i32
  }
}

module attributes {stable_mosaic.version = 11 : i64} {
  func.func @_conv2_kernel(%arg0: i32, %arg1: memref<64x128xbf16, #tpu.memory_space<vmem>>, %arg2: memref<1x128xf32, #tpu.memory_space<vmem>>, %arg3: memref<1x128xf32, #tpu.memory_space<vmem>>, %arg4: memref<9x128x128xbf16, #tpu.memory_space<vmem>>, %arg5: memref<1x128xf32, #tpu.memory_space<vmem>>, %arg6: memref<64x128xf32, #tpu.memory_space<vmem>>, %arg7: memref<8x128xf32, #tpu.memory_space<vmem>>, %arg8: memref<10x17x128xf32, #tpu.memory_space<vmem>>, %arg9: memref<64x128xf32, #tpu.memory_space<vmem>>) attributes {dimension_semantics = [#tpu.dimension_semantics<parallel>], iteration_bounds = array<i64: 2>, scalar_prefetch = 0 : i64, scratch_operands = 2 : i64, tpu.core_type = #tpu.core_type<tc>, window_params = [{transform_indices = @transform_0, window_bounds = array<i64: 64, 128>}, {pipeline_mode = #tpu.pipeline_mode<synchronous>, transform_indices = @transform_1, window_bounds = array<i64: 1, 128>}, {pipeline_mode = #tpu.pipeline_mode<synchronous>, transform_indices = @transform_2, window_bounds = array<i64: 1, 128>}, {pipeline_mode = #tpu.pipeline_mode<synchronous>, transform_indices = @transform_3, window_bounds = array<i64: 9, 128, 128>}, {pipeline_mode = #tpu.pipeline_mode<synchronous>, transform_indices = @transform_4, window_bounds = array<i64: 1, 128>}, {transform_indices = @transform_5, window_bounds = array<i64: 64, 128>}, {transform_indices = @transform_6, window_bounds = array<i64: 8, 128>}]} {
    %c0 = arith.constant 0 : index
    %c0_0 = arith.constant 0 : index
    %0 = vector.load %arg1[%c0, %c0_0] : memref<64x128xbf16, #tpu.memory_space<vmem>>, vector<64x128xbf16>
    %1 = arith.extf %0 : vector<64x128xbf16> to vector<64x128xf32>
    %c0_1 = arith.constant 0 : index
    %c0_2 = arith.constant 0 : index
    %2 = vector.load %arg2[%c0_1, %c0_2] : memref<1x128xf32, #tpu.memory_space<vmem>>, vector<1x128xf32>
    %3 = vector.broadcast %2 : vector<1x128xf32> to vector<64x128xf32>
    %4 = arith.mulf %1, %3 : vector<64x128xf32>
    %c0_3 = arith.constant 0 : index
    %c0_4 = arith.constant 0 : index
    %5 = vector.load %arg3[%c0_3, %c0_4] : memref<1x128xf32, #tpu.memory_space<vmem>>, vector<1x128xf32>
    %6 = vector.broadcast %5 : vector<1x128xf32> to vector<64x128xf32>
    %7 = arith.addf %4, %6 : vector<64x128xf32>
    %cst = arith.constant 0.000000e+00 : f32
    %8 = vector.broadcast %cst : f32 to vector<10x17x128xf32>
    %c0_5 = arith.constant 0 : index
    %c0_6 = arith.constant 0 : index
    %c0_7 = arith.constant 0 : index
    %9 = vector.load %arg8[%c0_5, %c0_6, %c0_7] : memref<10x17x128xf32, #tpu.memory_space<vmem>>, vector<10x17x128xf32>
    tpu.vector_store %arg8[%c0_5, %c0_6, %c0_7], %8 {strides = array<i32>} : memref<10x17x128xf32, #tpu.memory_space<vmem>>, vector<10x17x128xf32>,
    %10 = vector.shape_cast %7 : vector<64x128xf32> to vector<8x8x128xf32>
    %c1 = arith.constant 1 : index
    %c8 = arith.constant 8 : index
    %c0_8 = arith.constant 0 : index
    %11 = vector.load %arg8[%c1, %c8, %c0_8] : memref<10x17x128xf32, #tpu.memory_space<vmem>>, vector<8x8x128xf32>
    tpu.vector_store %arg8[%c1, %c8, %c0_8], %10 {strides = array<i32>} : memref<10x17x128xf32, #tpu.memory_space<vmem>>, vector<8x8x128xf32>,
    %cst_9 = arith.constant 0.000000e+00 : f32
    %12 = vector.broadcast %cst_9 : f32 to vector<64x128xf32>
    %c0_10 = arith.constant 0 : index
    %c0_11 = arith.constant 0 : index
    %13 = vector.load %arg9[%c0_10, %c0_11] : memref<64x128xf32, #tpu.memory_space<vmem>>, vector<64x128xf32>
    tpu.vector_store %arg9[%c0_10, %c0_11], %12 {strides = array<i32>} : memref<64x128xf32, #tpu.memory_space<vmem>>, vector<64x128xf32>,
    %c0_12 = arith.constant 0 : index
    %c7 = arith.constant 7 : index
    %c0_13 = arith.constant 0 : index
    %14 = vector.load %arg8[%c0_12, %c7, %c0_13] : memref<10x17x128xf32, #tpu.memory_space<vmem>>, vector<8x8x128xf32>
    %15 = vector.shape_cast %14 : vector<8x8x128xf32> to vector<64x128xf32>
    %16 = arith.truncf %15 : vector<64x128xf32> to vector<64x128xbf16>
    %c0_14 = arith.constant 0 : index
    %c0_15 = arith.constant 0 : index
    %17 = vector.load %arg9[%c0_14, %c0_15] : memref<64x128xf32, #tpu.memory_space<vmem>>, vector<64x128xf32>
    %c0_16 = arith.constant 0 : index
    %c0_17 = arith.constant 0 : index
    %c0_18 = arith.constant 0 : index
    %18 = vector.load %arg4[%c0_16, %c0_17, %c0_18] : memref<9x128x128xbf16, #tpu.memory_space<vmem>>, vector<1x128x128xbf16>
    %19 = vector.shape_cast %18 : vector<1x128x128xbf16> to vector<128x128xbf16>
    %cst_19 = arith.constant dense<0.000000e+00> : vector<64x128xf32>
    %20 = tpu.matmul %16, %19, %cst_19 {dimension_numbers = #tpu.dot_dimension_numbers<[1], [0], [0], [1], [0, 0, 1, 1], [], []>} : vector<64x128xbf16>, vector<128x128xbf16>, vector<64x128xf32> -> vector<64x128xf32>
    %21 = arith.addf %17, %20 : vector<64x128xf32>
    %c0_20 = arith.constant 0 : index
    %c0_21 = arith.constant 0 : index
    %22 = vector.load %arg9[%c0_20, %c0_21] : memref<64x128xf32, #tpu.memory_space<vmem>>, vector<64x128xf32>
    tpu.vector_store %arg9[%c0_20, %c0_21], %21 {strides = array<i32>} : memref<64x128xf32, #tpu.memory_space<vmem>>, vector<64x128xf32>,
    %c0_22 = arith.constant 0 : index
    %c8_23 = arith.constant 8 : index
    %c0_24 = arith.constant 0 : index
    %23 = vector.load %arg8[%c0_22, %c8_23, %c0_24] : memref<10x17x128xf32, #tpu.memory_space<vmem>>, vector<8x8x128xf32>
    %24 = vector.shape_cast %23 : vector<8x8x128xf32> to vector<64x128xf32>
    %25 = arith.truncf %24 : vector<64x128xf32> to vector<64x128xbf16>
    %c0_25 = arith.constant 0 : index
    %c0_26 = arith.constant 0 : index
    %26 = vector.load %arg9[%c0_25, %c0_26] : memref<64x128xf32, #tpu.memory_space<vmem>>, vector<64x128xf32>
    %c1_27 = arith.constant 1 : index
    %c0_28 = arith.constant 0 : index
    %c0_29 = arith.constant 0 : index
    %27 = vector.load %arg4[%c1_27, %c0_28, %c0_29] : memref<9x128x128xbf16, #tpu.memory_space<vmem>>, vector<1x128x128xbf16>
    %28 = vector.shape_cast %27 : vector<1x128x128xbf16> to vector<128x128xbf16>
    %cst_30 = arith.constant dense<0.000000e+00> : vector<64x128xf32>
    %29 = tpu.matmul %25, %28, %cst_30 {dimension_numbers = #tpu.dot_dimension_numbers<[1], [0], [0], [1], [0, 0, 1, 1], [], []>} : vector<64x128xbf16>, vector<128x128xbf16>, vector<64x128xf32> -> vector<64x128xf32>
    %30 = arith.addf %26, %29 : vector<64x128xf32>
    %c0_31 = arith.constant 0 : index
    %c0_32 = arith.constant 0 : index
    %31 = vector.load %arg9[%c0_31, %c0_32] : memref<64x128xf32, #tpu.memory_space<vmem>>, vector<64x128xf32>
    tpu.vector_store %arg9[%c0_31, %c0_32], %30 {strides = array<i32>} : memref<64x128xf32, #tpu.memory_space<vmem>>, vector<64x128xf32>,
    %c0_33 = arith.constant 0 : index
    %c9 = arith.constant 9 : index
    %c0_34 = arith.constant 0 : index
    %32 = vector.load %arg8[%c0_33, %c9, %c0_34] : memref<10x17x128xf32, #tpu.memory_space<vmem>>, vector<8x8x128xf32>
    %33 = vector.shape_cast %32 : vector<8x8x128xf32> to vector<64x128xf32>
    %34 = arith.truncf %33 : vector<64x128xf32> to vector<64x128xbf16>
    %c0_35 = arith.constant 0 : index
    %c0_36 = arith.constant 0 : index
    %35 = vector.load %arg9[%c0_35, %c0_36] : memref<64x128xf32, #tpu.memory_space<vmem>>, vector<64x128xf32>
    %c2 = arith.constant 2 : index
    %c0_37 = arith.constant 0 : index
    %c0_38 = arith.constant 0 : index
    %36 = vector.load %arg4[%c2, %c0_37, %c0_38] : memref<9x128x128xbf16, #tpu.memory_space<vmem>>, vector<1x128x128xbf16>
    %37 = vector.shape_cast %36 : vector<1x128x128xbf16> to vector<128x128xbf16>
    %cst_39 = arith.constant dense<0.000000e+00> : vector<64x128xf32>
    %38 = tpu.matmul %34, %37, %cst_39 {dimension_numbers = #tpu.dot_dimension_numbers<[1], [0], [0], [1], [0, 0, 1, 1], [], []>} : vector<64x128xbf16>, vector<128x128xbf16>, vector<64x128xf32> -> vector<64x128xf32>
    %39 = arith.addf %35, %38 : vector<64x128xf32>
    %c0_40 = arith.constant 0 : index
    %c0_41 = arith.constant 0 : index
    %40 = vector.load %arg9[%c0_40, %c0_41] : memref<64x128xf32, #tpu.memory_space<vmem>>, vector<64x128xf32>
    tpu.vector_store %arg9[%c0_40, %c0_41], %39 {strides = array<i32>} : memref<64x128xf32, #tpu.memory_space<vmem>>, vector<64x128xf32>,
    %c1_42 = arith.constant 1 : index
    %c7_43 = arith.constant 7 : index
    %c0_44 = arith.constant 0 : index
    %41 = vector.load %arg8[%c1_42, %c7_43, %c0_44] : memref<10x17x128xf32, #tpu.memory_space<vmem>>, vector<8x8x128xf32>
    %42 = vector.shape_cast %41 : vector<8x8x128xf32> to vector<64x128xf32>
    %43 = arith.truncf %42 : vector<64x128xf32> to vector<64x128xbf16>
    %c0_45 = arith.constant 0 : index
    %c0_46 = arith.constant 0 : index
    %44 = vector.load %arg9[%c0_45, %c0_46] : memref<64x128xf32, #tpu.memory_space<vmem>>, vector<64x128xf32>
    %c3 = arith.constant 3 : index
    %c0_47 = arith.constant 0 : index
    %c0_48 = arith.constant 0 : index
    %45 = vector.load %arg4[%c3, %c0_47, %c0_48] : memref<9x128x128xbf16, #tpu.memory_space<vmem>>, vector<1x128x128xbf16>
    %46 = vector.shape_cast %45 : vector<1x128x128xbf16> to vector<128x128xbf16>
    %cst_49 = arith.constant dense<0.000000e+00> : vector<64x128xf32>
    %47 = tpu.matmul %43, %46, %cst_49 {dimension_numbers = #tpu.dot_dimension_numbers<[1], [0], [0], [1], [0, 0, 1, 1], [], []>} : vector<64x128xbf16>, vector<128x128xbf16>, vector<64x128xf32> -> vector<64x128xf32>
    %48 = arith.addf %44, %47 : vector<64x128xf32>
    %c0_50 = arith.constant 0 : index
    %c0_51 = arith.constant 0 : index
    %49 = vector.load %arg9[%c0_50, %c0_51] : memref<64x128xf32, #tpu.memory_space<vmem>>, vector<64x128xf32>
    tpu.vector_store %arg9[%c0_50, %c0_51], %48 {strides = array<i32>} : memref<64x128xf32, #tpu.memory_space<vmem>>, vector<64x128xf32>,
    %c1_52 = arith.constant 1 : index
    %c8_53 = arith.constant 8 : index
    %c0_54 = arith.constant 0 : index
    %50 = vector.load %arg8[%c1_52, %c8_53, %c0_54] : memref<10x17x128xf32, #tpu.memory_space<vmem>>, vector<8x8x128xf32>
    %51 = vector.shape_cast %50 : vector<8x8x128xf32> to vector<64x128xf32>
    %52 = arith.truncf %51 : vector<64x128xf32> to vector<64x128xbf16>
    %c0_55 = arith.constant 0 : index
    %c0_56 = arith.constant 0 : index
    %53 = vector.load %arg9[%c0_55, %c0_56] : memref<64x128xf32, #tpu.memory_space<vmem>>, vector<64x128xf32>
    %c4 = arith.constant 4 : index
    %c0_57 = arith.constant 0 : index
    %c0_58 = arith.constant 0 : index
    %54 = vector.load %arg4[%c4, %c0_57, %c0_58] : memref<9x128x128xbf16, #tpu.memory_space<vmem>>, vector<1x128x128xbf16>
    %55 = vector.shape_cast %54 : vector<1x128x128xbf16> to vector<128x128xbf16>
    %cst_59 = arith.constant dense<0.000000e+00> : vector<64x128xf32>
    %56 = tpu.matmul %52, %55, %cst_59 {dimension_numbers = #tpu.dot_dimension_numbers<[1], [0], [0], [1], [0, 0, 1, 1], [], []>} : vector<64x128xbf16>, vector<128x128xbf16>, vector<64x128xf32> -> vector<64x128xf32>
    %57 = arith.addf %53, %56 : vector<64x128xf32>
    %c0_60 = arith.constant 0 : index
    %c0_61 = arith.constant 0 : index
    %58 = vector.load %arg9[%c0_60, %c0_61] : memref<64x128xf32, #tpu.memory_space<vmem>>, vector<64x128xf32>
    tpu.vector_store %arg9[%c0_60, %c0_61], %57 {strides = array<i32>} : memref<64x128xf32, #tpu.memory_space<vmem>>, vector<64x128xf32>,
    %c1_62 = arith.constant 1 : index
    %c9_63 = arith.constant 9 : index
    %c0_64 = arith.constant 0 : index
    %59 = vector.load %arg8[%c1_62, %c9_63, %c0_64] : memref<10x17x128xf32, #tpu.memory_space<vmem>>, vector<8x8x128xf32>
    %60 = vector.shape_cast %59 : vector<8x8x128xf32> to vector<64x128xf32>
    %61 = arith.truncf %60 : vector<64x128xf32> to vector<64x128xbf16>
    %c0_65 = arith.constant 0 : index
    %c0_66 = arith.constant 0 : index
    %62 = vector.load %arg9[%c0_65, %c0_66] : memref<64x128xf32, #tpu.memory_space<vmem>>, vector<64x128xf32>
    %c5 = arith.constant 5 : index
    %c0_67 = arith.constant 0 : index
    %c0_68 = arith.constant 0 : index
    %63 = vector.load %arg4[%c5, %c0_67, %c0_68] : memref<9x128x128xbf16, #tpu.memory_space<vmem>>, vector<1x128x128xbf16>
    %64 = vector.shape_cast %63 : vector<1x128x128xbf16> to vector<128x128xbf16>
    %cst_69 = arith.constant dense<0.000000e+00> : vector<64x128xf32>
    %65 = tpu.matmul %61, %64, %cst_69 {dimension_numbers = #tpu.dot_dimension_numbers<[1], [0], [0], [1], [0, 0, 1, 1], [], []>} : vector<64x128xbf16>, vector<128x128xbf16>, vector<64x128xf32> -> vector<64x128xf32>
    %66 = arith.addf %62, %65 : vector<64x128xf32>
    %c0_70 = arith.constant 0 : index
    %c0_71 = arith.constant 0 : index
    %67 = vector.load %arg9[%c0_70, %c0_71] : memref<64x128xf32, #tpu.memory_space<vmem>>, vector<64x128xf32>
    tpu.vector_store %arg9[%c0_70, %c0_71], %66 {strides = array<i32>} : memref<64x128xf32, #tpu.memory_space<vmem>>, vector<64x128xf32>,
    %c2_72 = arith.constant 2 : index
    %c7_73 = arith.constant 7 : index
    %c0_74 = arith.constant 0 : index
    %68 = vector.load %arg8[%c2_72, %c7_73, %c0_74] : memref<10x17x128xf32, #tpu.memory_space<vmem>>, vector<8x8x128xf32>
    %69 = vector.shape_cast %68 : vector<8x8x128xf32> to vector<64x128xf32>
    %70 = arith.truncf %69 : vector<64x128xf32> to vector<64x128xbf16>
    %c0_75 = arith.constant 0 : index
    %c0_76 = arith.constant 0 : index
    %71 = vector.load %arg9[%c0_75, %c0_76] : memref<64x128xf32, #tpu.memory_space<vmem>>, vector<64x128xf32>
    %c6 = arith.constant 6 : index
    %c0_77 = arith.constant 0 : index
    %c0_78 = arith.constant 0 : index
    %72 = vector.load %arg4[%c6, %c0_77, %c0_78] : memref<9x128x128xbf16, #tpu.memory_space<vmem>>, vector<1x128x128xbf16>
    %73 = vector.shape_cast %72 : vector<1x128x128xbf16> to vector<128x128xbf16>
    %cst_79 = arith.constant dense<0.000000e+00> : vector<64x128xf32>
    %74 = tpu.matmul %70, %73, %cst_79 {dimension_numbers = #tpu.dot_dimension_numbers<[1], [0], [0], [1], [0, 0, 1, 1], [], []>} : vector<64x128xbf16>, vector<128x128xbf16>, vector<64x128xf32> -> vector<64x128xf32>
    %75 = arith.addf %71, %74 : vector<64x128xf32>
    %c0_80 = arith.constant 0 : index
    %c0_81 = arith.constant 0 : index
    %76 = vector.load %arg9[%c0_80, %c0_81] : memref<64x128xf32, #tpu.memory_space<vmem>>, vector<64x128xf32>
    tpu.vector_store %arg9[%c0_80, %c0_81], %75 {strides = array<i32>} : memref<64x128xf32, #tpu.memory_space<vmem>>, vector<64x128xf32>,
    %c2_82 = arith.constant 2 : index
    %c8_83 = arith.constant 8 : index
    %c0_84 = arith.constant 0 : index
    %77 = vector.load %arg8[%c2_82, %c8_83, %c0_84] : memref<10x17x128xf32, #tpu.memory_space<vmem>>, vector<8x8x128xf32>
    %78 = vector.shape_cast %77 : vector<8x8x128xf32> to vector<64x128xf32>
    %79 = arith.truncf %78 : vector<64x128xf32> to vector<64x128xbf16>
    %c0_85 = arith.constant 0 : index
    %c0_86 = arith.constant 0 : index
    %80 = vector.load %arg9[%c0_85, %c0_86] : memref<64x128xf32, #tpu.memory_space<vmem>>, vector<64x128xf32>
    %c7_87 = arith.constant 7 : index
    %c0_88 = arith.constant 0 : index
    %c0_89 = arith.constant 0 : index
    %81 = vector.load %arg4[%c7_87, %c0_88, %c0_89] : memref<9x128x128xbf16, #tpu.memory_space<vmem>>, vector<1x128x128xbf16>
    %82 = vector.shape_cast %81 : vector<1x128x128xbf16> to vector<128x128xbf16>
    %cst_90 = arith.constant dense<0.000000e+00> : vector<64x128xf32>
    %83 = tpu.matmul %79, %82, %cst_90 {dimension_numbers = #tpu.dot_dimension_numbers<[1], [0], [0], [1], [0, 0, 1, 1], [], []>} : vector<64x128xbf16>, vector<128x128xbf16>, vector<64x128xf32> -> vector<64x128xf32>
    %84 = arith.addf %80, %83 : vector<64x128xf32>
    %c0_91 = arith.constant 0 : index
    %c0_92 = arith.constant 0 : index
    %85 = vector.load %arg9[%c0_91, %c0_92] : memref<64x128xf32, #tpu.memory_space<vmem>>, vector<64x128xf32>
    tpu.vector_store %arg9[%c0_91, %c0_92], %84 {strides = array<i32>} : memref<64x128xf32, #tpu.memory_space<vmem>>, vector<64x128xf32>,
    %c2_93 = arith.constant 2 : index
    %c9_94 = arith.constant 9 : index
    %c0_95 = arith.constant 0 : index
    %86 = vector.load %arg8[%c2_93, %c9_94, %c0_95] : memref<10x17x128xf32, #tpu.memory_space<vmem>>, vector<8x8x128xf32>
    %87 = vector.shape_cast %86 : vector<8x8x128xf32> to vector<64x128xf32>
    %88 = arith.truncf %87 : vector<64x128xf32> to vector<64x128xbf16>
    %c0_96 = arith.constant 0 : index
    %c0_97 = arith.constant 0 : index
    %89 = vector.load %arg9[%c0_96, %c0_97] : memref<64x128xf32, #tpu.memory_space<vmem>>, vector<64x128xf32>
    %c8_98 = arith.constant 8 : index
    %c0_99 = arith.constant 0 : index
    %c0_100 = arith.constant 0 : index
    %90 = vector.load %arg4[%c8_98, %c0_99, %c0_100] : memref<9x128x128xbf16, #tpu.memory_space<vmem>>, vector<1x128x128xbf16>
    %91 = vector.shape_cast %90 : vector<1x128x128xbf16> to vector<128x128xbf16>
    %cst_101 = arith.constant dense<0.000000e+00> : vector<64x128xf32>
    %92 = tpu.matmul %88, %91, %cst_101 {dimension_numbers = #tpu.dot_dimension_numbers<[1], [0], [0], [1], [0, 0, 1, 1], [], []>} : vector<64x128xbf16>, vector<128x128xbf16>, vector<64x128xf32> -> vector<64x128xf32>
    %93 = arith.addf %89, %92 : vector<64x128xf32>
    %c0_102 = arith.constant 0 : index
    %c0_103 = arith.constant 0 : index
    %94 = vector.load %arg9[%c0_102, %c0_103] : memref<64x128xf32, #tpu.memory_space<vmem>>, vector<64x128xf32>
    tpu.vector_store %arg9[%c0_102, %c0_103], %93 {strides = array<i32>} : memref<64x128xf32, #tpu.memory_space<vmem>>, vector<64x128xf32>,
    %c0_104 = arith.constant 0 : index
    %c0_105 = arith.constant 0 : index
    %95 = vector.load %arg9[%c0_104, %c0_105] : memref<64x128xf32, #tpu.memory_space<vmem>>, vector<64x128xf32>
    %c0_106 = arith.constant 0 : index
    %c0_107 = arith.constant 0 : index
    %96 = vector.load %arg5[%c0_106, %c0_107] : memref<1x128xf32, #tpu.memory_space<vmem>>, vector<1x128xf32>
    %97 = vector.broadcast %96 : vector<1x128xf32> to vector<64x128xf32>
    %98 = arith.addf %95, %97 : vector<64x128xf32>
    %c0_108 = arith.constant 0 : index
    %c0_109 = arith.constant 0 : index
    %99 = vector.load %arg6[%c0_108, %c0_109] : memref<64x128xf32, #tpu.memory_space<vmem>>, vector<64x128xf32>
    tpu.vector_store %arg6[%c0_108, %c0_109], %98 {strides = array<i32>} : memref<64x128xf32, #tpu.memory_space<vmem>>, vector<64x128xf32>,
    %cst_110 = arith.constant dense<0.000000e+00> : vector<128xf32>
    %100 = vector.multi_reduction <add>, %98, %cst_110 [0] : vector<64x128xf32> to vector<128xf32>
    %101 = vector.shape_cast %100 : vector<128xf32> to vector<1x128xf32>
    %102 = arith.mulf %98, %98 : vector<64x128xf32>
    %cst_111 = arith.constant dense<0.000000e+00> : vector<128xf32>
    %103 = vector.multi_reduction <add>, %102, %cst_111 [0] : vector<64x128xf32> to vector<128xf32>
    %104 = vector.shape_cast %103 : vector<128xf32> to vector<1x128xf32>
    %105 = tpu.iota {dimensions = array<i32: 0>} : vector<8x128xi32>
    %c0_i32 = arith.constant 0 : i32
    %106 = vector.broadcast %c0_i32 : i32 to vector<8x128xi32>
    %107 = arith.cmpi eq, %105, %106 : vector<8x128xi32>
    %cst_112 = arith.constant 0.000000e+00 : f32
    %108 = vector.shape_cast %101 : vector<1x128xf32> to vector<1x128xf32>
    %109 = vector.broadcast %108 : vector<1x128xf32> to vector<8x128xf32>
    %110 = vector.broadcast %cst_112 : f32 to vector<8x128xf32>
    %111 = arith.select %107, %109, %110 : vector<8x128xi1>, vector<8x128xf32>
    %c1_i32 = arith.constant 1 : i32
    %112 = vector.broadcast %c1_i32 : i32 to vector<8x128xi32>
    %113 = arith.cmpi eq, %105, %112 : vector<8x128xi32>
    %cst_113 = arith.constant 0.000000e+00 : f32
    %114 = vector.shape_cast %104 : vector<1x128xf32> to vector<1x128xf32>
    %115 = vector.broadcast %114 : vector<1x128xf32> to vector<8x128xf32>
    %116 = vector.broadcast %cst_113 : f32 to vector<8x128xf32>
    %117 = arith.select %113, %115, %116 : vector<8x128xi1>, vector<8x128xf32>
    %118 = arith.addf %111, %117 : vector<8x128xf32>
    %c0_114 = arith.constant 0 : index
    %c0_115 = arith.constant 0 : index
    %119 = vector.load %arg7[%c0_114, %c0_115] : memref<8x128xf32, #tpu.memory_space<vmem>>, vector<8x128xf32>
    tpu.vector_store %arg7[%c0_114, %c0_115], %118 {strides = array<i32>} : memref<8x128xf32, #tpu.memory_space<vmem>>, vector<8x128xf32>,
    return
  }
  func.func @transform_0(%arg0: i32) -> (i32, i32) {
    %c0_i32 = arith.constant 0 : i32
    %c0_i32_0 = arith.constant 0 : i32
    return %arg0, %c0_i32 : i32, i32
  }
  func.func @transform_1(%arg0: i32) -> (i32, i32) {
    %c0_i32 = arith.constant 0 : i32
    %c0_i32_0 = arith.constant 0 : i32
    %c0_i32_1 = arith.constant 0 : i32
    return %c0_i32, %c0_i32_0 : i32, i32
  }
  func.func @transform_2(%arg0: i32) -> (i32, i32) {
    %c0_i32 = arith.constant 0 : i32
    %c0_i32_0 = arith.constant 0 : i32
    %c0_i32_1 = arith.constant 0 : i32
    return %c0_i32, %c0_i32_0 : i32, i32
  }
  func.func @transform_3(%arg0: i32) -> (i32, i32, i32) {
    %c0_i32 = arith.constant 0 : i32
    %c0_i32_0 = arith.constant 0 : i32
    %c0_i32_1 = arith.constant 0 : i32
    %c0_i32_2 = arith.constant 0 : i32
    return %c0_i32, %c0_i32_0, %c0_i32_1 : i32, i32, i32
  }
  func.func @transform_4(%arg0: i32) -> (i32, i32) {
    %c0_i32 = arith.constant 0 : i32
    %c0_i32_0 = arith.constant 0 : i32
    %c0_i32_1 = arith.constant 0 : i32
    return %c0_i32, %c0_i32_0 : i32, i32
  }
  func.func @transform_5(%arg0: i32) -> (i32, i32) {
    %c0_i32 = arith.constant 0 : i32
    %c0_i32_0 = arith.constant 0 : i32
    return %arg0, %c0_i32 : i32, i32
  }
  func.func @transform_6(%arg0: i32) -> (i32, i32) {
    %c0_i32 = arith.constant 0 : i32
    %c0_i32_0 = arith.constant 0 : i32
    return %arg0, %c0_i32 : i32, i32
  }
}

module attributes {stable_mosaic.version = 11 : i64} {
  func.func @_bn_leaky_slice_kernel(%arg0: i32, %arg1: memref<64x128xf32, #tpu.memory_space<vmem>>, %arg2: memref<1x128xf32, #tpu.memory_space<vmem>>, %arg3: memref<1x128xf32, #tpu.memory_space<vmem>>, %arg4: memref<64x8xf32, #tpu.memory_space<vmem>>) attributes {dimension_semantics = [#tpu.dimension_semantics<parallel>], iteration_bounds = array<i64: 2>, scalar_prefetch = 0 : i64, scratch_operands = 0 : i64, tpu.core_type = #tpu.core_type<tc>, window_params = [{transform_indices = @transform_0, window_bounds = array<i64: 64, 128>}, {pipeline_mode = #tpu.pipeline_mode<synchronous>, transform_indices = @transform_1, window_bounds = array<i64: 1, 128>}, {pipeline_mode = #tpu.pipeline_mode<synchronous>, transform_indices = @transform_2, window_bounds = array<i64: 1, 128>}, {transform_indices = @transform_3, window_bounds = array<i64: 64, 8>}]} {
    %c0 = arith.constant 0 : index
    %c0_0 = arith.constant 0 : index
    %0 = vector.load %arg1[%c0, %c0_0] : memref<64x128xf32, #tpu.memory_space<vmem>>, vector<64x128xf32>
    %c0_1 = arith.constant 0 : index
    %c0_2 = arith.constant 0 : index
    %1 = vector.load %arg2[%c0_1, %c0_2] : memref<1x128xf32, #tpu.memory_space<vmem>>, vector<1x128xf32>
    %2 = vector.broadcast %1 : vector<1x128xf32> to vector<64x128xf32>
    %3 = arith.mulf %0, %2 : vector<64x128xf32>
    %c0_3 = arith.constant 0 : index
    %c0_4 = arith.constant 0 : index
    %4 = vector.load %arg3[%c0_3, %c0_4] : memref<1x128xf32, #tpu.memory_space<vmem>>, vector<1x128xf32>
    %5 = vector.broadcast %4 : vector<1x128xf32> to vector<64x128xf32>
    %6 = arith.addf %3, %5 : vector<64x128xf32>
    %cst = arith.constant 0.000000e+00 : f32
    %7 = vector.broadcast %cst : f32 to vector<64x128xf32>
    %8 = arith.cmpf oge, %6, %7 : vector<64x128xf32>
    %cst_5 = arith.constant 2.000000e-01 : f32
    %9 = vector.broadcast %cst_5 : f32 to vector<64x128xf32>
    %10 = arith.mulf %9, %6 : vector<64x128xf32>
    %11 = arith.select %8, %6, %10 : vector<64x128xi1>, vector<64x128xf32>
    %12 = vector.extract_strided_slice %11 {offsets = [0, 0], sizes = [64, 8], strides = [1, 1]} : vector<64x128xf32> to vector<64x8xf32>
    %c0_6 = arith.constant 0 : index
    %c0_7 = arith.constant 0 : index
    %13 = vector.load %arg4[%c0_6, %c0_7] : memref<64x8xf32, #tpu.memory_space<vmem>>, vector<64x8xf32>
    tpu.vector_store %arg4[%c0_6, %c0_7], %12 {strides = array<i32>} : memref<64x8xf32, #tpu.memory_space<vmem>>, vector<64x8xf32>,
    return
  }
  func.func @transform_0(%arg0: i32) -> (i32, i32) {
    %c0_i32 = arith.constant 0 : i32
    %c0_i32_0 = arith.constant 0 : i32
    return %arg0, %c0_i32 : i32, i32
  }
  func.func @transform_1(%arg0: i32) -> (i32, i32) {
    %c0_i32 = arith.constant 0 : i32
    %c0_i32_0 = arith.constant 0 : i32
    %c0_i32_1 = arith.constant 0 : i32
    return %c0_i32, %c0_i32_0 : i32, i32
  }
  func.func @transform_2(%arg0: i32) -> (i32, i32) {
    %c0_i32 = arith.constant 0 : i32
    %c0_i32_0 = arith.constant 0 : i32
    %c0_i32_1 = arith.constant 0 : i32
    return %c0_i32, %c0_i32_0 : i32, i32
  }
  func.func @transform_3(%arg0: i32) -> (i32, i32) {
    %c0_i32 = arith.constant 0 : i32
    %c0_i32_0 = arith.constant 0 : i32
    return %arg0, %c0_i32 : i32, i32
  }
}

</mosaic_0001>

<llo_original>
// kernel: conv_block_forward.5
$region0: #{conv_block_forward.5}
  #allocation0 [shape = 'u32[]', space=smem, size = 0x4, offset = 0x4, fixed_abs, tag = 'smem constant byte address 0x4 - core index']
  #allocation1 [shape = 'u32[72,128]{1,0:T(1,128)}', space=vmem, size = 0x9000, scoped, tag = 'internal scratch']
  %s0 = inlined_call_operand.vmem [shape: f32[128,128], index: 0, kind: input, shape index: {}]
  %s1 = inlined_call_operand.vmem [shape: f32[1,128], index: 1, kind: input, shape index: {}]
  %s2 = inlined_call_operand.vmem [shape: f32[1,128], index: 2, kind: input, shape index: {}]
  %s3 = inlined_call_operand.vmem [shape: f32[128,8], index: 3, kind: output, shape index: {}]
  %s4 = sld [smem:[#allocation0]]
  $region45: #{conv_block_forward.5} parent=0
    _
  %s6 = ssub.s32 1, %s4
  %s7 = scalar_select 0, %s6, %s4
  loop: start=0, step=1, limit=4
  $region2: #{conv_block_forward.5} parent=0 // loop_pre_header
    _
  $region3: #{conv_block_forward.5} parent=0 // loop_header
    %s9 = sphi 0, %s13
    %p10 = scmp.ge.s32.totalorder %s9, 4
    %s19 = sphi 0, %s21
    %s22 = sphi 0, %s19
    %s23 = sphi 0, %s22
    %s39 = sphi 0, %s23
    %s43 = sphi 0, %s43
    %s45 = sphi 0, %s43
    %s46 = sphi 0, %s45
    %s60 = sphi 0, %s46
    %s64 = sphi 0, %s64
    %s66 = sphi 0, %s64
    %s67 = sphi 0, %s66
    %s81 = sphi 0, %s67
    %s87 = sphi 0, %s89
    %s90 = sphi 0, %s87
    %s91 = sphi 0, %s90
    %s107 = sphi 0, %s91
  $region4: #{conv_block_forward.5} parent=0 // loop_header_branch
    %12 = sbr.rel (%p10) target = $region8
  $region5: #{conv_block_forward.5} parent=0 // loop_body
    %s14 = ssub.s32 %s9, 1
    %s15 = ssub.s32 %s9, 2
    %s16 = sadd.s32 %s9, 1
    %s17 = ssub.s32 %s9, %s16
    %p18 = scmp.eq.s32.totalorder %s17, 0
    %s20 = sadd.s32 %s19, 1
    %s21 = scalar_select %p18, %s19, %s20
    %p24 = pneg %p18
    %p25 = scmp.eq.s32.totalorder %s9, 1
    %p26 = por %p24, %p25
    %p27 = scmp.ne.s32.totalorder %s19, %s22
    %p28 = scmp.eq.s32.totalorder %s9, 0
    %p29 = por %p27, %p28
    %p30 = scmp.ne.s32.totalorder %s19, %s22
    %p31 = scmp.eq.s32.totalorder %s14, 1
    %p32 = por %p30, %p31
    %p33 = scmp.ne.s32.totalorder %s22, %s23
    %p34 = scmp.eq.s32.totalorder %s14, 0
    %p35 = por %p33, %p34
    %p36 = scmp.ne.s32.totalorder %s22, %s23
    %p37 = scmp.eq.s32.totalorder %s15, 1
    %p38 = por %p36, %p37
    %p40 = scmp.ne.s32.totalorder %s23, %s39
    %p41 = scmp.eq.s32.totalorder %s15, 0
    %p42 = por %p40, %p41
    %s44 = sadd.s32 %s43, 1
    %p47 = scmp.eq.s32.totalorder %s9, 1
    %p48 = scmp.ne.s32.totalorder %s43, %s45
    %p49 = scmp.eq.s32.totalorder %s9, 0
    %p50 = por %p48, %p49
    %p51 = scmp.ne.s32.totalorder %s43, %s45
    %p52 = scmp.eq.s32.totalorder %s14, 1
    %p53 = por %p51, %p52
    %p54 = scmp.ne.s32.totalorder %s45, %s46
    %p55 = scmp.eq.s32.totalorder %s14, 0
    %p56 = por %p54, %p55
    %p57 = scmp.ne.s32.totalorder %s45, %s46
    %p58 = scmp.eq.s32.totalorder %s15, 1
    %p59 = por %p57, %p58
    %p61 = scmp.ne.s32.totalorder %s46, %s60
    %p62 = scmp.eq.s32.totalorder %s15, 0
    %p63 = por %p61, %p62
    %s65 = sadd.s32 %s64, 1
    %p68 = scmp.eq.s32.totalorder %s9, 1
    %p69 = scmp.ne.s32.totalorder %s64, %s66
    %p70 = scmp.eq.s32.totalorder %s9, 0
    %p71 = por %p69, %p70
    %p72 = scmp.ne.s32.totalorder %s64, %s66
    %p73 = scmp.eq.s32.totalorder %s14, 1
    %p74 = por %p72, %p73
    %p75 = scmp.ne.s32.totalorder %s66, %s67
    %p76 = scmp.eq.s32.totalorder %s14, 0
    %p77 = por %p75, %p76
    %p78 = scmp.ne.s32.totalorder %s66, %s67
    %p79 = scmp.eq.s32.totalorder %s15, 1
    %p80 = por %p78, %p79
    %p82 = scmp.ne.s32.totalorder %s67, %s81
    %p83 = scmp.eq.s32.totalorder %s15, 0
    %p84 = por %p82, %p83
    %s85 = ssub.s32 %s9, %s16
    %p86 = scmp.eq.s32.totalorder %s85, 0
    %s88 = sadd.s32 %s87, 1
    %s89 = scalar_select %p86, %s87, %s88
    %p92 = pneg %p86
    %p93 = scmp.eq.s32.totalorder %s9, 1
    %p94 = por %p92, %p93
    %p95 = scmp.ne.s32.totalorder %s87, %s90
    %p96 = scmp.eq.s32.totalorder %s9, 0
    %p97 = por %p95, %p96
    %p98 = scmp.ne.s32.totalorder %s87, %s90
    %p99 = scmp.eq.s32.totalorder %s14, 1
    %p100 = por %p98, %p99
    %p101 = scmp.ne.s32.totalorder %s90, %s91
    %p102 = scmp.eq.s32.totalorder %s14, 0
    %p103 = por %p101, %p102
    %p104 = scmp.ne.s32.totalorder %s90, %s91
    %p105 = scmp.eq.s32.totalorder %s15, 1
    %p106 = por %p104, %p105
    %p108 = scmp.ne.s32.totalorder %s91, %s107
    %p109 = scmp.eq.s32.totalorder %s15, 0
    %p110 = por %p108, %p109
    %p111 = scmp.le.s32.totalorder 1, %s9
    %p112 = scmp.lt.s32.totalorder %s9, 3
    %p113 = pnand %p111, %p112
    %p114 = pneg %p113
    // Predicated region
    $region9: #{conv_block_forward.5} parent=5 // pred_check
      _
    $region10: #{conv_block_forward.5} parent=5 // pred_check_branch
      %116 = sbr.rel (%p113) target = $region12
    $region11: #{conv_block_forward.5} parent=5 // pred_region
      %s117 = ssub.s32 %s9, 1
      // Predicated region
      $region13: #{conv_block_forward.5} parent=11 // pred_check
        %p118 = pneg %p56
      $region14: #{conv_block_forward.5} parent=11 // pred_check_branch
        %120 = sbr.rel (%p118) target = $region16
      $region15: #{conv_block_forward.5} parent=11 // pred_region
        _
      $region16: #{conv_block_forward.5} parent=11 // pred_fallthru
        _
      // Predicated region
      $region17: #{conv_block_forward.5} parent=11 // pred_check
        %p121 = pneg %p77
      $region18: #{conv_block_forward.5} parent=11 // pred_check_branch
        %123 = sbr.rel (%p121) target = $region20
      $region19: #{conv_block_forward.5} parent=11 // pred_region
        _
      $region20: #{conv_block_forward.5} parent=11 // pred_fallthru
        _
    $region12: #{conv_block_forward.5} parent=5 // pred_fallthru
      _
    %p124 = scmp.lt.s32.totalorder %s9, 2
    // Predicated region
    $region21: #{conv_block_forward.5} parent=5 // pred_check
      %p125 = pneg %p124
    $region22: #{conv_block_forward.5} parent=5 // pred_check_branch
      %127 = sbr.rel (%p125) target = $region24
    $region23: #{conv_block_forward.5} parent=5 // pred_region
      // Predicated region
      $region25: #{conv_block_forward.5} parent=23 // pred_check
        %p128 = pneg %p29
      $region26: #{conv_block_forward.5} parent=23 // pred_check_branch
        %130 = sbr.rel (%p128) target = $region28
      $region27: #{conv_block_forward.5} parent=23 // pred_region
        %s131 = smul.u32 8, %s9
        %p132 = scmp.lt.s32.totalorder %s131, 15
        %s133 = scalar_select %p132, %s131, 15
        %s134 = smul.addr %s133, 8
        %s135 = scalar_lea.vmem %s0, %s134
        %s136 = smul.u32 8, %s9
      $region28: #{conv_block_forward.5} parent=23 // pred_fallthru
        _
    $region24: #{conv_block_forward.5} parent=5 // pred_fallthru
      _
    %p137 = scmp.le.s32.totalorder 1, %s9
    %p138 = scmp.lt.s32.totalorder %s9, 3
    %p139 = pnand %p137, %p138
    %p140 = pneg %p139
    // Predicated region
    $region29: #{conv_block_forward.5} parent=5 // pred_check
      _
    $region30: #{conv_block_forward.5} parent=5 // pred_check_branch
      %142 = sbr.rel (%p139) target = $region32
    $region31: #{conv_block_forward.5} parent=5 // pred_region
      %s143 = ssub.s32 %s9, 1
      %s144 = smul.u32 8, %s14
      %p145 = scmp.lt.s32.totalorder %s144, 15
      %s146 = scalar_select %p145, %s144, 15
      %s147 = smul.addr %s146, 8
      %s148 = scalar_lea.vmem %s0, %s147
      %p149 = pneg %p35
      %p150 = pneg %p32
      %p151 = pneg %p56
      %p152 = pneg %p53
      %p153 = pneg %p77
      %p154 = pneg %p74
      %p155 = pneg %p103
      %p156 = pneg %p100
      %s157 = smul.u32 8, %s14
      %p158 = scmp.lt.s32.totalorder %s157, 15
      %s159 = scalar_select %p158, %s157, 15
      %s160 = smul.addr %s159, 8
      %s161 = scalar_lea.vmem %s3, %s160
      %s162 = smul.u32 8, %s14
      %p163 = scmp.lt.s32.totalorder %s162, 15
      %s164 = scalar_select %p163, %s162, 15
      %s165 = smul.addr %s164, 8
      %s166 = scalar_lea.vmem %s0, %s165
      %s167 = smul.u32 8, %s14
      %s168 = smul.u32 8, %s14
      %p169 = scmp.lt.s32.totalorder %s168, 15
      %s170 = scalar_select %p169, %s168, 15
      %s171 = smul.addr %s170, 8
      %s172 = scalar_lea.vmem %s3, %s171
      %s173 = smul.u32 8, %s14
      %v174 = vld [vmem:[%s166] sm:$0xff]
      %v175 = vld [vmem:[%s166 + $0x8] sm:$0xff]
      %v176 = vld [vmem:[%s166 + $0x10] sm:$0xff]
      %v177 = vld [vmem:[%s166 + $0x18] sm:$0xff]
      %v178 = vld [vmem:[%s166 + $0x20] sm:$0xff]
      %v179 = vld [vmem:[%s166 + $0x28] sm:$0xff]
      %v180 = vld [vmem:[%s166 + $0x30] sm:$0xff]
      %v181 = vld [vmem:[%s166 + $0x38] sm:$0xff]
      %v182 = vld [vmem:[%s1] sm:$0x1]
      %v184 = vperm.slane %v182, 0
      %v186 = vmul.f32 %v174, %v184
      %v187 = vmul.f32 %v175, %v184
      %v188 = vmul.f32 %v176, %v184
      %v189 = vmul.f32 %v177, %v184
      %v190 = vmul.f32 %v178, %v184
      %v191 = vmul.f32 %v179, %v184
      %v192 = vmul.f32 %v180, %v184
      %v193 = vmul.f32 %v181, %v184
      %v194 = vld [vmem:[%s2] sm:$0x1]
      %v196 = vperm.slane %v194, 0
      %v198 = vadd.f32 %v186, %v196
      %v199 = vadd.f32 %v187, %v196
      %v200 = vadd.f32 %v188, %v196
      %v201 = vadd.f32 %v189, %v196
      %v202 = vadd.f32 %v190, %v196
      %v203 = vadd.f32 %v191, %v196
      %v204 = vadd.f32 %v192, %v196
      %v205 = vadd.f32 %v193, %v196
      %vm206 = vcmp.ge.f32.partialorder %v198, 0.0
      %vm207 = vcmp.ge.f32.partialorder %v199, 0.0
      %vm208 = vcmp.ge.f32.partialorder %v200, 0.0
      %vm209 = vcmp.ge.f32.partialorder %v201, 0.0
      %vm210 = vcmp.ge.f32.partialorder %v202, 0.0
      %vm211 = vcmp.ge.f32.partialorder %v203, 0.0
      %vm212 = vcmp.ge.f32.partialorder %v204, 0.0
      %vm213 = vcmp.ge.f32.partialorder %v205, 0.0
      %v214 = vmul.f32 %v198, 0.2
      %v215 = vmul.f32 %v199, 0.2
      %v216 = vmul.f32 %v200, 0.2
      %v217 = vmul.f32 %v201, 0.2
      %v218 = vmul.f32 %v202, 0.2
      %v219 = vmul.f32 %v203, 0.2
      %v220 = vmul.f32 %v204, 0.2
      %v221 = vmul.f32 %v205, 0.2
      %v222 = vsel %vm206, %v198, %v214
      %v223 = vsel %vm207, %v199, %v215
      %v224 = vsel %vm208, %v200, %v216
      %v225 = vsel %vm209, %v201, %v217
      %v226 = vsel %vm210, %v202, %v218
      %v227 = vsel %vm211, %v203, %v219
      %v228 = vsel %vm212, %v204, %v220
      %v229 = vsel %vm213, %v205, %v221
      %vm230 = vcmask 64512
      %231 = vst.msk [vmem:[%s172] sm:$0xff] %vm230, %v222
      %232 = vst.msk [vmem:[%s172 + $0x8] sm:$0xff] %vm230, %v223
      %233 = vst.msk [vmem:[%s172 + $0x10] sm:$0xff] %vm230, %v224
      %234 = vst.msk [vmem:[%s172 + $0x18] sm:$0xff] %vm230, %v225
      %235 = vst.msk [vmem:[%s172 + $0x20] sm:$0xff] %vm230, %v226
      %236 = vst.msk [vmem:[%s172 + $0x28] sm:$0xff] %vm230, %v227
      %237 = vst.msk [vmem:[%s172 + $0x30] sm:$0xff] %vm230, %v228
      %238 = vst.msk [vmem:[%s172 + $0x38] sm:$0xff] %vm230, %v229
      %s239 = smul.u32 8, %s14
      %p240 = scmp.lt.s32.totalorder %s239, 15
      %s241 = scalar_select %p240, %s239, 15
      %s242 = smul.addr %s241, 8
      %s243 = scalar_lea.vmem %s3, %s242
      // Predicated region
      $region33: #{conv_block_forward.5} parent=31 // pred_check
        %p244 = pneg %p100
      $region34: #{conv_block_forward.5} parent=31 // pred_check_branch
        %246 = sbr.rel (%p244) target = $region36
      $region35: #{conv_block_forward.5} parent=31 // pred_region
        %s247 = smul.u32 8, %s14
      $region36: #{conv_block_forward.5} parent=31 // pred_fallthru
        _
    $region32: #{conv_block_forward.5} parent=5 // pred_fallthru
      _
    %p248 = scmp.le.s32.totalorder 2, %s9
    // Predicated region
    $region37: #{conv_block_forward.5} parent=5 // pred_check
      %p249 = pneg %p248
    $region38: #{conv_block_forward.5} parent=5 // pred_check_branch
      %251 = sbr.rel (%p249) target = $region40
    $region39: #{conv_block_forward.5} parent=5 // pred_region
      %s252 = ssub.s32 %s9, 2
      // Predicated region
      $region41: #{conv_block_forward.5} parent=39 // pred_check
        %p253 = pneg %p106
      $region42: #{conv_block_forward.5} parent=39 // pred_check_branch
        %255 = sbr.rel (%p253) target = $region44
      $region43: #{conv_block_forward.5} parent=39 // pred_region
        %s256 = smul.u32 8, %s15
        %p257 = scmp.lt.s32.totalorder %s256, 15
        %s258 = scalar_select %p257, %s256, 15
        %s259 = smul.addr %s258, 8
        %s260 = scalar_lea.vmem %s3, %s259
      $region44: #{conv_block_forward.5} parent=39 // pred_fallthru
        _
    $region40: #{conv_block_forward.5} parent=5 // pred_fallthru
      _
  $region6: #{conv_block_forward.5} parent=0 // loop_footer
    %s13 = sadd.s32 1, %s9
  $region7: #{conv_block_forward.5} parent=0 // loop_footer_branch
    %8 = sbr.rel target = $region3
  $region8: #{conv_block_forward.5} parent=0 // loop_exit
    _

// kernel: conv_block_forward.4
$region0: #{conv_block_forward.4}
  #allocation0 [shape = 'u32[]', space=smem, size = 0x4, offset = 0x4, fixed_abs, tag = 'smem constant byte address 0x4 - core index']
  #allocation1 [shape = 'u32[72,128]{1,0:T(1,128)}', space=vmem, size = 0x9000, scoped, tag = 'internal scratch']
  #allocation2 [shape = 'f32[10,17,128]{2,1,0:T(8,128)}', space=vmem, size = 0x1e000, scoped, tag = 'scratch operand']
  #allocation3 [shape = 'f32[64,128]{1,0:T(8,128)}', space=vmem, size = 0x8000, scoped, tag = 'scratch operand']
  %s0 = inlined_call_operand.vmem [shape: bf16[128,128], index: 0, kind: input, shape index: {}]
  %s1 = inlined_call_operand.vmem [shape: f32[1,128], index: 1, kind: input, shape index: {}]
  %s2 = inlined_call_operand.vmem [shape: f32[1,128], index: 2, kind: input, shape index: {}]
  %s3 = inlined_call_operand.vmem [shape: bf16[9,128,128], index: 3, kind: input, shape index: {}]
  %s4 = inlined_call_operand.vmem [shape: f32[1,128], index: 4, kind: input, shape index: {}]
  %s5 = inlined_call_operand.vmem [shape: f32[128,128], index: 5, kind: output, shape index: {0}]
  %s6 = inlined_call_operand.vmem [shape: f32[16,128], index: 6, kind: output, shape index: {1}]
  %7 = xla_tuple %s5, %s6
  %s8 = sld [smem:[#allocation0]]
  $region61: #{conv_block_forward.4} parent=0
    _
  %s10 = ssub.s32 1, %s8
  %s11 = scalar_select 0, %s10, %s8
  loop: start=0, step=1, limit=4
  $region2: #{conv_block_forward.4} parent=0 // loop_pre_header
    _
  $region3: #{conv_block_forward.4} parent=0 // loop_header
    %s13 = sphi 0, %s17
    %p14 = scmp.ge.s32.totalorder %s13, 4
    %s23 = sphi 0, %s25
    %s26 = sphi 0, %s23
    %s27 = sphi 0, %s26
    %s43 = sphi 0, %s27
    %s47 = sphi 0, %s47
    %s49 = sphi 0, %s47
    %s50 = sphi 0, %s49
    %s64 = sphi 0, %s50
    %s68 = sphi 0, %s68
    %s70 = sphi 0, %s68
    %s71 = sphi 0, %s70
    %s85 = sphi 0, %s71
    %s89 = sphi 0, %s89
    %s91 = sphi 0, %s89
    %s92 = sphi 0, %s91
    %s106 = sphi 0, %s92
    %s110 = sphi 0, %s110
    %s112 = sphi 0, %s110
    %s113 = sphi 0, %s112
    %s127 = sphi 0, %s113
    %s133 = sphi 0, %s135
    %s136 = sphi 0, %s133
    %s137 = sphi 0, %s136
    %s153 = sphi 0, %s137
    %s159 = sphi 0, %s161
    %s162 = sphi 0, %s159
    %s163 = sphi 0, %s162
    %s179 = sphi 0, %s163
  $region4: #{conv_block_forward.4} parent=0 // loop_header_branch
    %16 = sbr.rel (%p14) target = $region8
  $region5: #{conv_block_forward.4} parent=0 // loop_body
    %s18 = ssub.s32 %s13, 1
    %s19 = ssub.s32 %s13, 2
    %s20 = sadd.s32 %s13, 1
    %s21 = ssub.s32 %s13, %s20
    %p22 = scmp.eq.s32.totalorder %s21, 0
    %s24 = sadd.s32 %s23, 1
    %s25 = scalar_select %p22, %s23, %s24
    %p28 = pneg %p22
    %p29 = scmp.eq.s32.totalorder %s13, 1
    %p30 = por %p28, %p29
    %p31 = scmp.ne.s32.totalorder %s23, %s26
    %p32 = scmp.eq.s32.totalorder %s13, 0
    %p33 = por %p31, %p32
    %p34 = scmp.ne.s32.totalorder %s23, %s26
    %p35 = scmp.eq.s32.totalorder %s18, 1
    %p36 = por %p34, %p35
    %p37 = scmp.ne.s32.totalorder %s26, %s27
    %p38 = scmp.eq.s32.totalorder %s18, 0
    %p39 = por %p37, %p38
    %p40 = scmp.ne.s32.totalorder %s26, %s27
    %p41 = scmp.eq.s32.totalorder %s19, 1
    %p42 = por %p40, %p41
    %p44 = scmp.ne.s32.totalorder %s27, %s43
    %p45 = scmp.eq.s32.totalorder %s19, 0
    %p46 = por %p44, %p45
    %s48 = sadd.s32 %s47, 1
    %p51 = scmp.eq.s32.totalorder %s13, 1
    %p52 = scmp.ne.s32.totalorder %s47, %s49
    %p53 = scmp.eq.s32.totalorder %s13, 0
    %p54 = por %p52, %p53
    %p55 = scmp.ne.s32.totalorder %s47, %s49
    %p56 = scmp.eq.s32.totalorder %s18, 1
    %p57 = por %p55, %p56
    %p58 = scmp.ne.s32.totalorder %s49, %s50
    %p59 = scmp.eq.s32.totalorder %s18, 0
    %p60 = por %p58, %p59
    %p61 = scmp.ne.s32.totalorder %s49, %s50
    %p62 = scmp.eq.s32.totalorder %s19, 1
    %p63 = por %p61, %p62
    %p65 = scmp.ne.s32.totalorder %s50, %s64
    %p66 = scmp.eq.s32.totalorder %s19, 0
    %p67 = por %p65, %p66
    %s69 = sadd.s32 %s68, 1
    %p72 = scmp.eq.s32.totalorder %s13, 1
    %p73 = scmp.ne.s32.totalorder %s68, %s70
    %p74 = scmp.eq.s32.totalorder %s13, 0
    %p75 = por %p73, %p74
    %p76 = scmp.ne.s32.totalorder %s68, %s70
    %p77 = scmp.eq.s32.totalorder %s18, 1
    %p78 = por %p76, %p77
    %p79 = scmp.ne.s32.totalorder %s70, %s71
    %p80 = scmp.eq.s32.totalorder %s18, 0
    %p81 = por %p79, %p80
    %p82 = scmp.ne.s32.totalorder %s70, %s71
    %p83 = scmp.eq.s32.totalorder %s19, 1
    %p84 = por %p82, %p83
    %p86 = scmp.ne.s32.totalorder %s71, %s85
    %p87 = scmp.eq.s32.totalorder %s19, 0
    %p88 = por %p86, %p87
    %s90 = sadd.s32 %s89, 1
    %p93 = scmp.eq.s32.totalorder %s13, 1
    %p94 = scmp.ne.s32.totalorder %s89, %s91
    %p95 = scmp.eq.s32.totalorder %s13, 0
    %p96 = por %p94, %p95
    %p97 = scmp.ne.s32.totalorder %s89, %s91
    %p98 = scmp.eq.s32.totalorder %s18, 1
    %p99 = por %p97, %p98
    %p100 = scmp.ne.s32.totalorder %s91, %s92
    %p101 = scmp.eq.s32.totalorder %s18, 0
    %p102 = por %p100, %p101
    %p103 = scmp.ne.s32.totalorder %s91, %s92
    %p104 = scmp.eq.s32.totalorder %s19, 1
    %p105 = por %p103, %p104
    %p107 = scmp.ne.s32.totalorder %s92, %s106
    %p108 = scmp.eq.s32.totalorder %s19, 0
    %p109 = por %p107, %p108
    %s111 = sadd.s32 %s110, 1
    %p114 = scmp.eq.s32.totalorder %s13, 1
    %p115 = scmp.ne.s32.totalorder %s110, %s112
    %p116 = scmp.eq.s32.totalorder %s13, 0
    %p117 = por %p115, %p116
    %p118 = scmp.ne.s32.totalorder %s110, %s112
    %p119 = scmp.eq.s32.totalorder %s18, 1
    %p120 = por %p118, %p119
    %p121 = scmp.ne.s32.totalorder %s112, %s113
    %p122 = scmp.eq.s32.totalorder %s18, 0
    %p123 = por %p121, %p122
    %p124 = scmp.ne.s32.totalorder %s112, %s113
    %p125 = scmp.eq.s32.totalorder %s19, 1
    %p126 = por %p124, %p125
    %p128 = scmp.ne.s32.totalorder %s113, %s127
    %p129 = scmp.eq.s32.totalorder %s19, 0
    %p130 = por %p128, %p129
    %s131 = ssub.s32 %s13, %s20
    %p132 = scmp.eq.s32.totalorder %s131, 0
    %s134 = sadd.s32 %s133, 1
    %s135 = scalar_select %p132, %s133, %s134
    %p138 = pneg %p132
    %p139 = scmp.eq.s32.totalorder %s13, 1
    %p140 = por %p138, %p139
    %p141 = scmp.ne.s32.totalorder %s133, %s136
    %p142 = scmp.eq.s32.totalorder %s13, 0
    %p143 = por %p141, %p142
    %p144 = scmp.ne.s32.totalorder %s133, %s136
    %p145 = scmp.eq.s32.totalorder %s18, 1
    %p146 = por %p144, %p145
    %p147 = scmp.ne.s32.totalorder %s136, %s137
    %p148 = scmp.eq.s32.totalorder %s18, 0
    %p149 = por %p147, %p148
    %p150 = scmp.ne.s32.totalorder %s136, %s137
    %p151 = scmp.eq.s32.totalorder %s19, 1
    %p152 = por %p150, %p151
    %p154 = scmp.ne.s32.totalorder %s137, %s153
    %p155 = scmp.eq.s32.totalorder %s19, 0
    %p156 = por %p154, %p155
    %s157 = ssub.s32 %s13, %s20
    %p158 = scmp.eq.s32.totalorder %s157, 0
    %s160 = sadd.s32 %s159, 1
    %s161 = scalar_select %p158, %s159, %s160
    %p164 = pneg %p158
    %p165 = scmp.eq.s32.totalorder %s13, 1
    %p166 = por %p164, %p165
    %p167 = scmp.ne.s32.totalorder %s159, %s162
    %p168 = scmp.eq.s32.totalorder %s13, 0
    %p169 = por %p167, %p168
    %p170 = scmp.ne.s32.totalorder %s159, %s162
    %p171 = scmp.eq.s32.totalorder %s18, 1
    %p172 = por %p170, %p171
    %p173 = scmp.ne.s32.totalorder %s162, %s163
    %p174 = scmp.eq.s32.totalorder %s18, 0
    %p175 = por %p173, %p174
    %p176 = scmp.ne.s32.totalorder %s162, %s163
    %p177 = scmp.eq.s32.totalorder %s19, 1
    %p178 = por %p176, %p177
    %p180 = scmp.ne.s32.totalorder %s163, %s179
    %p181 = scmp.eq.s32.totalorder %s19, 0
    %p182 = por %p180, %p181
    %p183 = scmp.le.s32.totalorder 1, %s13
    %p184 = scmp.lt.s32.totalorder %s13, 3
    %p185 = pnand %p183, %p184
    %p186 = pneg %p185
    // Predicated region
    $region9: #{conv_block_forward.4} parent=5 // pred_check
      _
    $region10: #{conv_block_forward.4} parent=5 // pred_check_branch
      %188 = sbr.rel (%p185) target = $region12
    $region11: #{conv_block_forward.4} parent=5 // pred_region
      %s189 = ssub.s32 %s13, 1
      // Predicated region
      $region13: #{conv_block_forward.4} parent=11 // pred_check
        %p190 = pneg %p60
      $region14: #{conv_block_forward.4} parent=11 // pred_check_branch
        %192 = sbr.rel (%p190) target = $region16
      $region15: #{conv_block_forward.4} parent=11 // pred_region
        _
      $region16: #{conv_block_forward.4} parent=11 // pred_fallthru
        _
      // Predicated region
      $region17: #{conv_block_forward.4} parent=11 // pred_check
        %p193 = pneg %p81
      $region18: #{conv_block_forward.4} parent=11 // pred_check_branch
        %195 = sbr.rel (%p193) target = $region20
      $region19: #{conv_block_forward.4} parent=11 // pred_region
        _
      $region20: #{conv_block_forward.4} parent=11 // pred_fallthru
        _
      // Predicated region
      $region21: #{conv_block_forward.4} parent=11 // pred_check
        %p196 = pneg %p102
      $region22: #{conv_block_forward.4} parent=11 // pred_check_branch
        %198 = sbr.rel (%p196) target = $region24
      $region23: #{conv_block_forward.4} parent=11 // pred_region
        _
      $region24: #{conv_block_forward.4} parent=11 // pred_fallthru
        _
      // Predicated region
      $region25: #{conv_block_forward.4} parent=11 // pred_check
        %p199 = pneg %p123
      $region26: #{conv_block_forward.4} parent=11 // pred_check_branch
        %201 = sbr.rel (%p199) target = $region28
      $region27: #{conv_block_forward.4} parent=11 // pred_region
        _
      $region28: #{conv_block_forward.4} parent=11 // pred_fallthru
        _
    $region12: #{conv_block_forward.4} parent=5 // pred_fallthru
      _
    %p202 = scmp.lt.s32.totalorder %s13, 2
    // Predicated region
    $region29: #{conv_block_forward.4} parent=5 // pred_check
      %p203 = pneg %p202
    $region30: #{conv_block_forward.4} parent=5 // pred_check_branch
      %205 = sbr.rel (%p203) target = $region32
    $region31: #{conv_block_forward.4} parent=5 // pred_region
      // Predicated region
      $region33: #{conv_block_forward.4} parent=31 // pred_check
        %p206 = pneg %p33
      $region34: #{conv_block_forward.4} parent=31 // pred_check_branch
        %208 = sbr.rel (%p206) target = $region36
      $region35: #{conv_block_forward.4} parent=31 // pred_region
        %s209 = smul.u32 8, %s13
        %p210 = scmp.lt.s32.totalorder %s209, 15
        %s211 = scalar_select %p210, %s209, 15
        %s212 = smul.addr %s211, 4
        %s213 = scalar_lea.vmem %s0, %s212
        %s214 = smul.u32 8, %s13
      $region36: #{conv_block_forward.4} parent=31 // pred_fallthru
        _
    $region32: #{conv_block_forward.4} parent=5 // pred_fallthru
      _
    %p215 = scmp.le.s32.totalorder 1, %s13
    %p216 = scmp.lt.s32.totalorder %s13, 3
    %p217 = pnand %p215, %p216
    %p218 = pneg %p217
    // Predicated region
    $region37: #{conv_block_forward.4} parent=5 // pred_check
      _
    $region38: #{conv_block_forward.4} parent=5 // pred_check_branch
      %220 = sbr.rel (%p217) target = $region40
    $region39: #{conv_block_forward.4} parent=5 // pred_region
      %s221 = ssub.s32 %s13, 1
      %s222 = smul.u32 8, %s18
      %p223 = scmp.lt.s32.totalorder %s222, 15
      %s224 = scalar_select %p223, %s222, 15
      %s225 = smul.addr %s224, 4
      %s226 = scalar_lea.vmem %s0, %s225
      %p227 = pneg %p39
      %p228 = pneg %p36
      %p229 = pneg %p60
      %p230 = pneg %p57
      %p231 = pneg %p81
      %p232 = pneg %p78
      %p233 = pneg %p102
      %p234 = pneg %p99
      %p235 = pneg %p123
      %p236 = pneg %p120
      %p237 = pneg %p149
      %p238 = pneg %p146
      %s239 = smul.u32 8, %s18
      %p240 = scmp.lt.s32.totalorder %s239, 15
      %s241 = scalar_select %p240, %s239, 15
      %s242 = smul.addr %s241, 8
      %s243 = scalar_lea.vmem %s5, %s242
      %p244 = pneg %p175
      %p245 = pneg %p172
      %p246 = scmp.lt.s32.totalorder %s18, 1
      %s247 = scalar_select %p246, %s18, 1
      %s248 = smul.addr %s247, 8
      %s249 = scalar_lea.vmem %s6, %s248
      %s250 = smul.u32 8, %s18
      %p251 = scmp.lt.s32.totalorder %s250, 15
      %s252 = scalar_select %p251, %s250, 15
      %s253 = smul.addr %s252, 4
      %s254 = scalar_lea.vmem %s0, %s253
      %s255 = smul.u32 8, %s18
      %s256 = smul.u32 8, %s18
      %p257 = scmp.lt.s32.totalorder %s256, 15
      %s258 = scalar_select %p257, %s256, 15
      %s259 = smul.addr %s258, 8
      %s260 = scalar_lea.vmem %s5, %s259
      %s261 = smul.u32 8, %s18
      %p262 = scmp.lt.s32.totalorder %s18, 1
      %s263 = scalar_select %p262, %s18, 1
      %s264 = smul.addr %s263, 8
      %s265 = scalar_lea.vmem %s6, %s264
      %v266 = vld [vmem:[%s254] sm:$0xf]
      %v267 = vld [vmem:[%s254 + $0x4] sm:$0xf]
      %v268 = vld [vmem:[%s254 + $0x8] sm:$0xf]
      %v269 = vld [vmem:[%s254 + $0xc] sm:$0xf]
      %v270 = vld [vmem:[%s254 + $0x10] sm:$0xf]
      %v271 = vld [vmem:[%s254 + $0x14] sm:$0xf]
      %v272 = vld [vmem:[%s254 + $0x18] sm:$0xf]
      %v273 = vld [vmem:[%s254 + $0x1c] sm:$0xf]
      %v274 = vunpack.c.l.bf16 %v266
      %v275 = vunpack.c.l.bf16 %v267
      %v276 = vunpack.c.l.bf16 %v268
      %v277 = vunpack.c.l.bf16 %v269
      %v278 = vunpack.c.l.bf16 %v270
      %v279 = vunpack.c.l.bf16 %v271
      %v280 = vunpack.c.l.bf16 %v272
      %v281 = vunpack.c.l.bf16 %v273
      %v282 = vld [vmem:[%s1] sm:$0x1]
      %v284 = vperm.slane %v282, 0
      %v286 = vmul.f32 %v274, %v284
      %v287 = vmul.f32 %v275, %v284
      %v288 = vmul.f32 %v276, %v284
      %v289 = vmul.f32 %v277, %v284
      %v290 = vmul.f32 %v278, %v284
      %v291 = vmul.f32 %v279, %v284
      %v292 = vmul.f32 %v280, %v284
      %v293 = vmul.f32 %v281, %v284
      %v294 = vld [vmem:[%s2] sm:$0x1]
      %v296 = vperm.slane %v294, 0
      %v298 = vadd.f32 %v286, %v296
      %v299 = vadd.f32 %v287, %v296
      %v300 = vadd.f32 %v288, %v296
      %v301 = vadd.f32 %v289, %v296
      %v302 = vadd.f32 %v290, %v296
      %v303 = vadd.f32 %v291, %v296
      %v304 = vadd.f32 %v292, %v296
      %v305 = vadd.f32 %v293, %v296
      %306 = vst [vmem:[#allocation2] sm:$0xff] 0.0
      %307 = vst [vmem:[#allocation2 + $0x8] sm:$0xff] 0.0
      %308 = vst [vmem:[#allocation2 + $0x10] sm:$0x1] 0.0
      %309 = vst [vmem:[#allocation2 + $0x18] sm:$0xff] 0.0
      %310 = vst [vmem:[#allocation2 + $0x20] sm:$0xff] 0.0
      %311 = vst [vmem:[#allocation2 + $0x28] sm:$0x1] 0.0
      %312 = vst [vmem:[#allocation2 + $0x30] sm:$0xff] 0.0
      %313 = vst [vmem:[#allocation2 + $0x38] sm:$0xff] 0.0
      %314 = vst [vmem:[#allocation2 + $0x40] sm:$0x1] 0.0
      %315 = vst [vmem:[#allocation2 + $0x48] sm:$0xff] 0.0
      %316 = vst [vmem:[#allocation2 + $0x50] sm:$0xff] 0.0
      %317 = vst [vmem:[#allocation2 + $0x58] sm:$0x1] 0.0
      %318 = vst [vmem:[#allocation2 + $0x60] sm:$0xff] 0.0
      %319 = vst [vmem:[#allocation2 + $0x68] sm:$0xff] 0.0
      %320 = vst [vmem:[#allocation2 + $0x70] sm:$0x1] 0.0
      %321 = vst [vmem:[#allocation2 + $0x78] sm:$0xff] 0.0
      %322 = vst [vmem:[#allocation2 + $0x80] sm:$0xff] 0.0
      %323 = vst [vmem:[#allocation2 + $0x88] sm:$0x1] 0.0
      %324 = vst [vmem:[#allocation2 + $0x90] sm:$0xff] 0.0
      %325 = vst [vmem:[#allocation2 + $0x98] sm:$0xff] 0.0
      %326 = vst [vmem:[#allocation2 + $0xa0] sm:$0x1] 0.0
      %327 = vst [vmem:[#allocation2 + $0xa8] sm:$0xff] 0.0
      %328 = vst [vmem:[#allocation2 + $0xb0] sm:$0xff] 0.0
      %329 = vst [vmem:[#allocation2 + $0xb8] sm:$0x1] 0.0
      %330 = vst [vmem:[#allocation2 + $0xc0] sm:$0xff] 0.0
      %331 = vst [vmem:[#allocation2 + $0xc8] sm:$0xff] 0.0
      %332 = vst [vmem:[#allocation2 + $0xd0] sm:$0x1] 0.0
      %333 = vst [vmem:[#allocation2 + $0xd8] sm:$0xff] 0.0
      %334 = vst [vmem:[#allocation2 + $0xe0] sm:$0xff] 0.0
      %335 = vst [vmem:[#allocation2 + $0xe8] sm:$0x1] 0.0
      %s336 = scalar_lea.vmem [#allocation2], 24
      %337 = vst [vmem:[%s336 + $0x8] sm:$0xff] %v298
      %338 = vst [vmem:[%s336 + $0x20] sm:$0xff] %v299
      %339 = vst [vmem:[%s336 + $0x38] sm:$0xff] %v300
      %340 = vst [vmem:[%s336 + $0x50] sm:$0xff] %v301
      %341 = vst [vmem:[%s336 + $0x68] sm:$0xff] %v302
      %342 = vst [vmem:[%s336 + $0x80] sm:$0xff] %v303
      %343 = vst [vmem:[%s336 + $0x98] sm:$0xff] %v304
      %344 = vst [vmem:[%s336 + $0xb0] sm:$0xff] %v305
      %345 = vst [vmem:[#allocation3] sm:$0xff] 0.0
      %346 = vst [vmem:[#allocation3 + $0x8] sm:$0xff] 0.0
      %347 = vst [vmem:[#allocation3 + $0x10] sm:$0xff] 0.0
      %348 = vst [vmem:[#allocation3 + $0x18] sm:$0xff] 0.0
      %349 = vst [vmem:[#allocation3 + $0x20] sm:$0xff] 0.0
      %350 = vst [vmem:[#allocation3 + $0x28] sm:$0xff] 0.0
      %351 = vst [vmem:[#allocation3 + $0x30] sm:$0xff] 0.0
      %352 = vst [vmem:[#allocation3 + $0x38] sm:$0xff] 0.0
      %v353 = vld [vmem:[#allocation2 + $0x7] sm:$0xff]
      %v354 = vld [vmem:[#allocation2 + $0x1f] sm:$0xff]
      %v355 = vld [vmem:[#allocation2 + $0x37] sm:$0xff]
      %v356 = vld [vmem:[#allocation2 + $0x4f] sm:$0xff]
      %v357 = vld [vmem:[#allocation2 + $0x67] sm:$0xff]
      %v358 = vld [vmem:[#allocation2 + $0x7f] sm:$0xff]
      %v359 = vld [vmem:[#allocation2 + $0x97] sm:$0xff]
      %v360 = vld [vmem:[#allocation2 + $0xaf] sm:$0xff]
      %v361 = vpack.c.bf16 %v354, %v353
      %v362 = vpack.c.bf16 %v356, %v355
      %v363 = vpack.c.bf16 %v358, %v357
      %v364 = vpack.c.bf16 %v360, %v359
      %v365 = vld [vmem:[#allocation3] sm:$0xff]
      %v366 = vld [vmem:[#allocation3 + $0x8] sm:$0xff]
      %v367 = vld [vmem:[#allocation3 + $0x10] sm:$0xff]
      %v368 = vld [vmem:[#allocation3 + $0x18] sm:$0xff]
      %v369 = vld [vmem:[#allocation3 + $0x20] sm:$0xff]
      %v370 = vld [vmem:[#allocation3 + $0x28] sm:$0xff]
      %v371 = vld [vmem:[#allocation3 + $0x30] sm:$0xff]
      %v372 = vld [vmem:[#allocation3 + $0x38] sm:$0xff]
      %v373 = vld [vmem:[%s3] sm:$0xf]
      %v374 = vld [vmem:[%s3 + $0x4] sm:$0xf]
      %v375 = vld [vmem:[%s3 + $0x8] sm:$0xf]
      %v376 = vld [vmem:[%s3 + $0xc] sm:$0xf]
      %v377 = vld [vmem:[%s3 + $0x10] sm:$0xf]
      %v378 = vld [vmem:[%s3 + $0x14] sm:$0xf]
      %v379 = vld [vmem:[%s3 + $0x18] sm:$0xf]
      %v380 = vld [vmem:[%s3 + $0x1c] sm:$0xf]
      %v381 = vld [vmem:[%s3 + $0x20] sm:$0xf]
      %v382 = vld [vmem:[%s3 + $0x24] sm:$0xf]
      %v383 = vld [vmem:[%s3 + $0x28] sm:$0xf]
      %v384 = vld [vmem:[%s3 + $0x2c] sm:$0xf]
      %v385 = vld [vmem:[%s3 + $0x30] sm:$0xf]
      %v386 = vld [vmem:[%s3 + $0x34] sm:$0xf]
      %v387 = vld [vmem:[%s3 + $0x38] sm:$0xf]
      %v388 = vld [vmem:[%s3 + $0x3c] sm:$0xf]
      %v405 = vunpack.c.l.b16 %v373
      %v406 = vunpack.c.l.b16 %v374
      %v407 = vunpack.c.l.b16 %v375
      %v408 = vunpack.c.l.b16 %v376
      %v409 = vunpack.c.l.b16 %v377
      %v410 = vunpack.c.l.b16 %v378
      %v411 = vunpack.c.l.b16 %v379
      %v412 = vunpack.c.l.b16 %v380
      %v413 = vunpack.c.l.b16 %v381
      %v414 = vunpack.c.l.b16 %v382
      %v415 = vunpack.c.l.b16 %v383
      %v416 = vunpack.c.l.b16 %v384
      %v417 = vunpack.c.l.b16 %v385
      %v418 = vunpack.c.l.b16 %v386
      %v419 = vunpack.c.l.b16 %v387
      %v420 = vunpack.c.l.b16 %v388
      %v421 = vpack.c.b16 %v406, %v405
      %v422 = vpack.c.b16 %v408, %v407
      %v423 = vpack.c.b16 %v410, %v409
      %v424 = vpack.c.b16 %v412, %v411
      %v425 = vpack.c.b16 %v414, %v413
      %v426 = vpack.c.b16 %v416, %v415
      %v427 = vpack.c.b16 %v418, %v417
      %v428 = vpack.c.b16 %v420, %v419
      %437 = vmatpush.bf16.msra.mxu0 %v428
      %438 = vmatpush.bf16.msra.mxu0 %v427
      %439 = vmatpush.bf16.msra.mxu0 %v426
      %440 = vmatpush.bf16.msra.mxu0 %v425
      %441 = vmatpush.bf16.msra.mxu0 %v424
      %442 = vmatpush.bf16.msra.mxu0 %v423
      %443 = vmatpush.bf16.msra.mxu0 %v422
      %444 = vmatpush.bf16.msra.mxu0 %v421
      %445 = vmatmul.bf16.gmra.mxu0 %v361
      %v446 = vpop.f32.mrf.mxu0
      %v447 = vadd.f32 0.0, %v446
      %v448 = vpop.f32.mrf.mxu0
      %v449 = vadd.f32 0.0, %v448
      %450 = vmatmul.bf16.gmra.mxu0 %v362
      %v451 = vpop.f32.mrf.mxu0
      %v452 = vadd.f32 0.0, %v451
      %v453 = vpop.f32.mrf.mxu0
      %v454 = vadd.f32 0.0, %v453
      %455 = vmatmul.bf16.gmra.mxu0 %v363
      %v456 = vpop.f32.mrf.mxu0
      %v457 = vadd.f32 0.0, %v456
      %v458 = vpop.f32.mrf.mxu0
      %v459 = vadd.f32 0.0, %v458
      %460 = vmatmul.bf16.gmra.mxu0 %v364
      %v461 = vpop.f32.mrf.mxu0
      %v462 = vadd.f32 0.0, %v461
      %v463 = vpop.f32.mrf.mxu0
      %v464 = vadd.f32 0.0, %v463
      %465 = vdwg.mxu0
      %v466 = vadd.f32 %v365, %v447
      %v467 = vadd.f32 %v366, %v449
      %v468 = vadd.f32 %v367, %v452
      %v469 = vadd.f32 %v368, %v454
      %v470 = vadd.f32 %v369, %v457
      %v471 = vadd.f32 %v370, %v459
      %v472 = vadd.f32 %v371, %v462
      %v473 = vadd.f32 %v372, %v464
      %474 = vst [vmem:[#allocation3] sm:$0xff] %v466
      %475 = vst [vmem:[#allocation3 + $0x8] sm:$0xff] %v467
      %476 = vst [vmem:[#allocation3 + $0x10] sm:$0xff] %v468
      %477 = vst [vmem:[#allocation3 + $0x18] sm:$0xff] %v469
      %478 = vst [vmem:[#allocation3 + $0x20] sm:$0xff] %v470
      %479 = vst [vmem:[#allocation3 + $0x28] sm:$0xff] %v471
      %480 = vst [vmem:[#allocation3 + $0x30] sm:$0xff] %v472
      %481 = vst [vmem:[#allocation3 + $0x38] sm:$0xff] %v473
      %v482 = vld [vmem:[#allocation2 + $0x8] sm:$0xff]
      %v483 = vld [vmem:[#allocation2 + $0x20] sm:$0xff]
      %v484 = vld [vmem:[#allocation2 + $0x38] sm:$0xff]
      %v485 = vld [vmem:[#allocation2 + $0x50] sm:$0xff]
      %v486 = vld [vmem:[#allocation2 + $0x68] sm:$0xff]
      %v487 = vld [vmem:[#allocation2 + $0x80] sm:$0xff]
      %v488 = vld [vmem:[#allocation2 + $0x98] sm:$0xff]
      %v489 = vld [vmem:[#allocation2 + $0xb0] sm:$0xff]
      %v490 = vpack.c.bf16 %v483, %v482
      %v491 = vpack.c.bf16 %v485, %v484
      %v492 = vpack.c.bf16 %v487, %v486
      %v493 = vpack.c.bf16 %v489, %v488
      %v494 = vld [vmem:[#allocation3] sm:$0xff]
      %v495 = vld [vmem:[#allocation3 + $0x8] sm:$0xff]
      %v496 = vld [vmem:[#allocation3 + $0x10] sm:$0xff]
      %v497 = vld [vmem:[#allocation3 + $0x18] sm:$0xff]
      %v498 = vld [vmem:[#allocation3 + $0x20] sm:$0xff]
      %v499 = vld [vmem:[#allocation3 + $0x28] sm:$0xff]
      %v500 = vld [vmem:[#allocation3 + $0x30] sm:$0xff]
      %v501 = vld [vmem:[#allocation3 + $0x38] sm:$0xff]
      %s502 = scalar_lea.vmem %s3, 64
      %v503 = vld [vmem:[%s502] sm:$0xf]
      %v504 = vld [vmem:[%s502 + $0x4] sm:$0xf]
      %v505 = vld [vmem:[%s502 + $0x8] sm:$0xf]
      %v506 = vld [vmem:[%s502 + $0xc] sm:$0xf]
      %v507 = vld [vmem:[%s502 + $0x10] sm:$0xf]
      %v508 = vld [vmem:[%s502 + $0x14] sm:$0xf]
      %v509 = vld [vmem:[%s502 + $0x18] sm:$0xf]
      %v510 = vld [vmem:[%s502 + $0x1c] sm:$0xf]
      %v511 = vld [vmem:[%s502 + $0x20] sm:$0xf]
      %v512 = vld [vmem:[%s502 + $0x24] sm:$0xf]
      %v513 = vld [vmem:[%s502 + $0x28] sm:$0xf]
      %v514 = vld [vmem:[%s502 + $0x2c] sm:$0xf]
      %v515 = vld [vmem:[%s502 + $0x30] sm:$0xf]
      %v516 = vld [vmem:[%s502 + $0x34] sm:$0xf]
      %v517 = vld [vmem:[%s502 + $0x38] sm:$0xf]
      %v518 = vld [vmem:[%s502 + $0x3c] sm:$0xf]
      %v535 = vunpack.c.l.b16 %v503
      %v536 = vunpack.c.l.b16 %v504
      %v537 = vunpack.c.l.b16 %v505
      %v538 = vunpack.c.l.b16 %v506
      %v539 = vunpack.c.l.b16 %v507
      %v540 = vunpack.c.l.b16 %v508
      %v541 = vunpack.c.l.b16 %v509
      %v542 = vunpack.c.l.b16 %v510
      %v543 = vunpack.c.l.b16 %v511
      %v544 = vunpack.c.l.b16 %v512
      %v545 = vunpack.c.l.b16 %v513
      %v546 = vunpack.c.l.b16 %v514
      %v547 = vunpack.c.l.b16 %v515
      %v548 = vunpack.c.l.b16 %v516
      %v549 = vunpack.c.l.b16 %v517
      %v550 = vunpack.c.l.b16 %v518
      %v551 = vpack.c.b16 %v536, %v535
      %v552 = vpack.c.b16 %v538, %v537
      %v553 = vpack.c.b16 %v540, %v539
      %v554 = vpack.c.b16 %v542, %v541
      %v555 = vpack.c.b16 %v544, %v543
      %v556 = vpack.c.b16 %v546, %v545
      %v557 = vpack.c.b16 %v548, %v547
      %v558 = vpack.c.b16 %v550, %v549
      %567 = vmatpush.bf16.msra.mxu0 %v558
      %568 = vmatpush.bf16.msra.mxu0 %v557
      %569 = vmatpush.bf16.msra.mxu0 %v556
      %570 = vmatpush.bf16.msra.mxu0 %v555
      %571 = vmatpush.bf16.msra.mxu0 %v554
      %572 = vmatpush.bf16.msra.mxu0 %v553
      %573 = vmatpush.bf16.msra.mxu0 %v552
      %574 = vmatpush.bf16.msra.mxu0 %v551
      %575 = vmatmul.bf16.gmra.mxu0 %v490
      %v576 = vpop.f32.mrf.mxu0
      %v577 = vadd.f32 0.0, %v576
      %v578 = vpop.f32.mrf.mxu0
      %v579 = vadd.f32 0.0, %v578
      %580 = vmatmul.bf16.gmra.mxu0 %v491
      %v581 = vpop.f32.mrf.mxu0
      %v582 = vadd.f32 0.0, %v581
      %v583 = vpop.f32.mrf.mxu0
      %v584 = vadd.f32 0.0, %v583
      %585 = vmatmul.bf16.gmra.mxu0 %v492
      %v586 = vpop.f32.mrf.mxu0
      %v587 = vadd.f32 0.0, %v586
      %v588 = vpop.f32.mrf.mxu0
      %v589 = vadd.f32 0.0, %v588
      %590 = vmatmul.bf16.gmra.mxu0 %v493
      %v591 = vpop.f32.mrf.mxu0
      %v592 = vadd.f32 0.0, %v591
      %v593 = vpop.f32.mrf.mxu0
      %v594 = vadd.f32 0.0, %v593
      %595 = vdwg.mxu0
      %v596 = vadd.f32 %v494, %v577
      %v597 = vadd.f32 %v495, %v579
      %v598 = vadd.f32 %v496, %v582
      %v599 = vadd.f32 %v497, %v584
      %v600 = vadd.f32 %v498, %v587
      %v601 = vadd.f32 %v499, %v589
      %v602 = vadd.f32 %v500, %v592
      %v603 = vadd.f32 %v501, %v594
      %604 = vst [vmem:[#allocation3] sm:$0xff] %v596
      %605 = vst [vmem:[#allocation3 + $0x8] sm:$0xff] %v597
      %606 = vst [vmem:[#allocation3 + $0x10] sm:$0xff] %v598
      %607 = vst [vmem:[#allocation3 + $0x18] sm:$0xff] %v599
      %608 = vst [vmem:[#allocation3 + $0x20] sm:$0xff] %v600
      %609 = vst [vmem:[#allocation3 + $0x28] sm:$0xff] %v601
      %610 = vst [vmem:[#allocation3 + $0x30] sm:$0xff] %v602
      %611 = vst [vmem:[#allocation3 + $0x38] sm:$0xff] %v603
      %v612 = vld [vmem:[#allocation2 + $0x9] sm:$0xff]
      %v613 = vld [vmem:[#allocation2 + $0x21] sm:$0xff]
      %v614 = vld [vmem:[#allocation2 + $0x39] sm:$0xff]
      %v615 = vld [vmem:[#allocation2 + $0x51] sm:$0xff]
      %v616 = vld [vmem:[#allocation2 + $0x69] sm:$0xff]
      %v617 = vld [vmem:[#allocation2 + $0x81] sm:$0xff]
      %v618 = vld [vmem:[#allocation2 + $0x99] sm:$0xff]
      %v619 = vld [vmem:[#allocation2 + $0xb1] sm:$0xff]
      %v620 = vpack.c.bf16 %v613, %v612
      %v621 = vpack.c.bf16 %v615, %v614
      %v622 = vpack.c.bf16 %v617, %v616
      %v623 = vpack.c.bf16 %v619, %v618
      %v624 = vld [vmem:[#allocation3] sm:$0xff]
      %v625 = vld [vmem:[#allocation3 + $0x8] sm:$0xff]
      %v626 = vld [vmem:[#allocation3 + $0x10] sm:$0xff]
      %v627 = vld [vmem:[#allocation3 + $0x18] sm:$0xff]
      %v628 = vld [vmem:[#allocation3 + $0x20] sm:$0xff]
      %v629 = vld [vmem:[#allocation3 + $0x28] sm:$0xff]
      %v630 = vld [vmem:[#allocation3 + $0x30] sm:$0xff]
      %v631 = vld [vmem:[#allocation3 + $0x38] sm:$0xff]
      %s632 = scalar_lea.vmem %s3, 128
      %v633 = vld [vmem:[%s632] sm:$0xf]
      %v634 = vld [vmem:[%s632 + $0x4] sm:$0xf]
      %v635 = vld [vmem:[%s632 + $0x8] sm:$0xf]
      %v636 = vld [vmem:[%s632 + $0xc] sm:$0xf]
      %v637 = vld [vmem:[%s632 + $0x10] sm:$0xf]
      %v638 = vld [vmem:[%s632 + $0x14] sm:$0xf]
      %v639 = vld [vmem:[%s632 + $0x18] sm:$0xf]
      %v640 = vld [vmem:[%s632 + $0x1c] sm:$0xf]
      %v641 = vld [vmem:[%s632 + $0x20] sm:$0xf]
      %v642 = vld [vmem:[%s632 + $0x24] sm:$0xf]
      %v643 = vld [vmem:[%s632 + $0x28] sm:$0xf]
      %v644 = vld [vmem:[%s632 + $0x2c] sm:$0xf]
      %v645 = vld [vmem:[%s632 + $0x30] sm:$0xf]
      %v646 = vld [vmem:[%s632 + $0x34] sm:$0xf]
      %v647 = vld [vmem:[%s632 + $0x38] sm:$0xf]
      %v648 = vld [vmem:[%s632 + $0x3c] sm:$0xf]
      %v665 = vunpack.c.l.b16 %v633
      %v666 = vunpack.c.l.b16 %v634
      %v667 = vunpack.c.l.b16 %v635
      %v668 = vunpack.c.l.b16 %v636
      %v669 = vunpack.c.l.b16 %v637
      %v670 = vunpack.c.l.b16 %v638
      %v671 = vunpack.c.l.b16 %v639
      %v672 = vunpack.c.l.b16 %v640
      %v673 = vunpack.c.l.b16 %v641
      %v674 = vunpack.c.l.b16 %v642
      %v675 = vunpack.c.l.b16 %v643
      %v676 = vunpack.c.l.b16 %v644
      %v677 = vunpack.c.l.b16 %v645
      %v678 = vunpack.c.l.b16 %v646
      %v679 = vunpack.c.l.b16 %v647
      %v680 = vunpack.c.l.b16 %v648
      %v681 = vpack.c.b16 %v666, %v665
      %v682 = vpack.c.b16 %v668, %v667
      %v683 = vpack.c.b16 %v670, %v669
      %v684 = vpack.c.b16 %v672, %v671
      %v685 = vpack.c.b16 %v674, %v673
      %v686 = vpack.c.b16 %v676, %v675
      %v687 = vpack.c.b16 %v678, %v677
      %v688 = vpack.c.b16 %v680, %v679
      %697 = vmatpush.bf16.msra.mxu0 %v688
      %698 = vmatpush.bf16.msra.mxu0 %v687
      %699 = vmatpush.bf16.msra.mxu0 %v686
      %700 = vmatpush.bf16.msra.mxu0 %v685
      %701 = vmatpush.bf16.msra.mxu0 %v684
      %702 = vmatpush.bf16.msra.mxu0 %v683
      %703 = vmatpush.bf16.msra.mxu0 %v682
      %704 = vmatpush.bf16.msra.mxu0 %v681
      %705 = vmatmul.bf16.gmra.mxu0 %v620
      %v706 = vpop.f32.mrf.mxu0
      %v707 = vadd.f32 0.0, %v706
      %v708 = vpop.f32.mrf.mxu0
      %v709 = vadd.f32 0.0, %v708
      %710 = vmatmul.bf16.gmra.mxu0 %v621
      %v711 = vpop.f32.mrf.mxu0
      %v712 = vadd.f32 0.0, %v711
      %v713 = vpop.f32.mrf.mxu0
      %v714 = vadd.f32 0.0, %v713
      %715 = vmatmul.bf16.gmra.mxu0 %v622
      %v716 = vpop.f32.mrf.mxu0
      %v717 = vadd.f32 0.0, %v716
      %v718 = vpop.f32.mrf.mxu0
      %v719 = vadd.f32 0.0, %v718
      %720 = vmatmul.bf16.gmra.mxu0 %v623
      %v721 = vpop.f32.mrf.mxu0
      %v722 = vadd.f32 0.0, %v721
      %v723 = vpop.f32.mrf.mxu0
      %v724 = vadd.f32 0.0, %v723
      %725 = vdwg.mxu0
      %v726 = vadd.f32 %v624, %v707
      %v727 = vadd.f32 %v625, %v709
      %v728 = vadd.f32 %v626, %v712
      %v729 = vadd.f32 %v627, %v714
      %v730 = vadd.f32 %v628, %v717
      %v731 = vadd.f32 %v629, %v719
      %v732 = vadd.f32 %v630, %v722
      %v733 = vadd.f32 %v631, %v724
      %734 = vst [vmem:[#allocation3] sm:$0xff] %v726
      %735 = vst [vmem:[#allocation3 + $0x8] sm:$0xff] %v727
      %736 = vst [vmem:[#allocation3 + $0x10] sm:$0xff] %v728
      %737 = vst [vmem:[#allocation3 + $0x18] sm:$0xff] %v729
      %738 = vst [vmem:[#allocation3 + $0x20] sm:$0xff] %v730
      %739 = vst [vmem:[#allocation3 + $0x28] sm:$0xff] %v731
      %740 = vst [vmem:[#allocation3 + $0x30] sm:$0xff] %v732
      %741 = vst [vmem:[#allocation3 + $0x38] sm:$0xff] %v733
      %v742 = vld [vmem:[%s336 + $0x7] sm:$0xff]
      %v743 = vld [vmem:[%s336 + $0x1f] sm:$0xff]
      %v744 = vld [vmem:[%s336 + $0x37] sm:$0xff]
      %v745 = vld [vmem:[%s336 + $0x4f] sm:$0xff]
      %v746 = vld [vmem:[%s336 + $0x67] sm:$0xff]
      %v747 = vld [vmem:[%s336 + $0x7f] sm:$0xff]
      %v748 = vld [vmem:[%s336 + $0x97] sm:$0xff]
      %v749 = vld [vmem:[%s336 + $0xaf] sm:$0xff]
      %v750 = vpack.c.bf16 %v743, %v742
      %v751 = vpack.c.bf16 %v745, %v744
      %v752 = vpack.c.bf16 %v747, %v746
      %v753 = vpack.c.bf16 %v749, %v748
      %v754 = vld [vmem:[#allocation3] sm:$0xff]
      %v755 = vld [vmem:[#allocation3 + $0x8] sm:$0xff]
      %v756 = vld [vmem:[#allocation3 + $0x10] sm:$0xff]
      %v757 = vld [vmem:[#allocation3 + $0x18] sm:$0xff]
      %v758 = vld [vmem:[#allocation3 + $0x20] sm:$0xff]
      %v759 = vld [vmem:[#allocation3 + $0x28] sm:$0xff]
      %v760 = vld [vmem:[#allocation3 + $0x30] sm:$0xff]
      %v761 = vld [vmem:[#allocation3 + $0x38] sm:$0xff]
      %s762 = scalar_lea.vmem %s3, 192
      %v763 = vld [vmem:[%s762] sm:$0xf]
      %v764 = vld [vmem:[%s762 + $0x4] sm:$0xf]
      %v765 = vld [vmem:[%s762 + $0x8] sm:$0xf]
      %v766 = vld [vmem:[%s762 + $0xc] sm:$0xf]
      %v767 = vld [vmem:[%s762 + $0x10] sm:$0xf]
      %v768 = vld [vmem:[%s762 + $0x14] sm:$0xf]
      %v769 = vld [vmem:[%s762 + $0x18] sm:$0xf]
      %v770 = vld [vmem:[%s762 + $0x1c] sm:$0xf]
      %v771 = vld [vmem:[%s762 + $0x20] sm:$0xf]
      %v772 = vld [vmem:[%s762 + $0x24] sm:$0xf]
      %v773 = vld [vmem:[%s762 + $0x28] sm:$0xf]
      %v774 = vld [vmem:[%s762 + $0x2c] sm:$0xf]
      %v775 = vld [vmem:[%s762 + $0x30] sm:$0xf]
      %v776 = vld [vmem:[%s762 + $0x34] sm:$0xf]
      %v777 = vld [vmem:[%s762 + $0x38] sm:$0xf]
      %v778 = vld [vmem:[%s762 + $0x3c] sm:$0xf]
      %v795 = vunpack.c.l.b16 %v763
      %v796 = vunpack.c.l.b16 %v764
      %v797 = vunpack.c.l.b16 %v765
      %v798 = vunpack.c.l.b16 %v766
      %v799 = vunpack.c.l.b16 %v767
      %v800 = vunpack.c.l.b16 %v768
      %v801 = vunpack.c.l.b16 %v769
      %v802 = vunpack.c.l.b16 %v770
      %v803 = vunpack.c.l.b16 %v771
      %v804 = vunpack.c.l.b16 %v772
      %v805 = vunpack.c.l.b16 %v773
      %v806 = vunpack.c.l.b16 %v774
      %v807 = vunpack.c.l.b16 %v775
      %v808 = vunpack.c.l.b16 %v776
      %v809 = vunpack.c.l.b16 %v777
      %v810 = vunpack.c.l.b16 %v778
      %v811 = vpack.c.b16 %v796, %v795
      %v812 = vpack.c.b16 %v798, %v797
      %v813 = vpack.c.b16 %v800, %v799
      %v814 = vpack.c.b16 %v802, %v801
      %v815 = vpack.c.b16 %v804, %v803
      %v816 = vpack.c.b16 %v806, %v805
      %v817 = vpack.c.b16 %v808, %v807
      %v818 = vpack.c.b16 %v810, %v809
      %827 = vmatpush.bf16.msra.mxu0 %v818
      %828 = vmatpush.bf16.msra.mxu0 %v817
      %829 = vmatpush.bf16.msra.mxu0 %v816
      %830 = vmatpush.bf16.msra.mxu0 %v815
      %831 = vmatpush.bf16.msra.mxu0 %v814
      %832 = vmatpush.bf16.msra.mxu0 %v813
      %833 = vmatpush.bf16.msra.mxu0 %v812
      %834 = vmatpush.bf16.msra.mxu0 %v811
      %835 = vmatmul.bf16.gmra.mxu0 %v750
      %v836 = vpop.f32.mrf.mxu0
      %v837 = vadd.f32 0.0, %v836
      %v838 = vpop.f32.mrf.mxu0
      %v839 = vadd.f32 0.0, %v838
      %840 = vmatmul.bf16.gmra.mxu0 %v751
      %v841 = vpop.f32.mrf.mxu0
      %v842 = vadd.f32 0.0, %v841
      %v843 = vpop.f32.mrf.mxu0
      %v844 = vadd.f32 0.0, %v843
      %845 = vmatmul.bf16.gmra.mxu0 %v752
      %v846 = vpop.f32.mrf.mxu0
      %v847 = vadd.f32 0.0, %v846
      %v848 = vpop.f32.mrf.mxu0
      %v849 = vadd.f32 0.0, %v848
      %850 = vmatmul.bf16.gmra.mxu0 %v753
      %v851 = vpop.f32.mrf.mxu0
      %v852 = vadd.f32 0.0, %v851
      %v853 = vpop.f32.mrf.mxu0
      %v854 = vadd.f32 0.0, %v853
      %855 = vdwg.mxu0
      %v856 = vadd.f32 %v754, %v837
      %v857 = vadd.f32 %v755, %v839
      %v858 = vadd.f32 %v756, %v842
      %v859 = vadd.f32 %v757, %v844
      %v860 = vadd.f32 %v758, %v847
      %v861 = vadd.f32 %v759, %v849
      %v862 = vadd.f32 %v760, %v852
      %v863 = vadd.f32 %v761, %v854
      %864 = vst [vmem:[#allocation3] sm:$0xff] %v856
      %865 = vst [vmem:[#allocation3 + $0x8] sm:$0xff] %v857
      %866 = vst [vmem:[#allocation3 + $0x10] sm:$0xff] %v858
      %867 = vst [vmem:[#allocation3 + $0x18] sm:$0xff] %v859
      %868 = vst [vmem:[#allocation3 + $0x20] sm:$0xff] %v860
      %869 = vst [vmem:[#allocation3 + $0x28] sm:$0xff] %v861
      %870 = vst [vmem:[#allocation3 + $0x30] sm:$0xff] %v862
      %871 = vst [vmem:[#allocation3 + $0x38] sm:$0xff] %v863
      %v872 = vld [vmem:[%s336 + $0x8] sm:$0xff]
      %v873 = vld [vmem:[%s336 + $0x20] sm:$0xff]
      %v874 = vld [vmem:[%s336 + $0x38] sm:$0xff]
      %v875 = vld [vmem:[%s336 + $0x50] sm:$0xff]
      %v876 = vld [vmem:[%s336 + $0x68] sm:$0xff]
      %v877 = vld [vmem:[%s336 + $0x80] sm:$0xff]
      %v878 = vld [vmem:[%s336 + $0x98] sm:$0xff]
      %v879 = vld [vmem:[%s336 + $0xb0] sm:$0xff]
      %v880 = vpack.c.bf16 %v873, %v872
      %v881 = vpack.c.bf16 %v875, %v874
      %v882 = vpack.c.bf16 %v877, %v876
      %v883 = vpack.c.bf16 %v879, %v878
      %v884 = vld [vmem:[#allocation3] sm:$0xff]
      %v885 = vld [vmem:[#allocation3 + $0x8] sm:$0xff]
      %v886 = vld [vmem:[#allocation3 + $0x10] sm:$0xff]
      %v887 = vld [vmem:[#allocation3 + $0x18] sm:$0xff]
      %v888 = vld [vmem:[#allocation3 + $0x20] sm:$0xff]
      %v889 = vld [vmem:[#allocation3 + $0x28] sm:$0xff]
      %v890 = vld [vmem:[#allocation3 + $0x30] sm:$0xff]
      %v891 = vld [vmem:[#allocation3 + $0x38] sm:$0xff]
      %s892 = scalar_lea.vmem %s3, 256
      %v893 = vld [vmem:[%s892] sm:$0xf]
      %v894 = vld [vmem:[%s892 + $0x4] sm:$0xf]
      %v895 = vld [vmem:[%s892 + $0x8] sm:$0xf]
      %v896 = vld [vmem:[%s892 + $0xc] sm:$0xf]
      %v897 = vld [vmem:[%s892 + $0x10] sm:$0xf]
      %v898 = vld [vmem:[%s892 + $0x14] sm:$0xf]
      %v899 = vld [vmem:[%s892 + $0x18] sm:$0xf]
      %v900 = vld [vmem:[%s892 + $0x1c] sm:$0xf]
      %v901 = vld [vmem:[%s892 + $0x20] sm:$0xf]
      %v902 = vld [vmem:[%s892 + $0x24] sm:$0xf]
      %v903 = vld [vmem:[%s892 + $0x28] sm:$0xf]
      %v904 = vld [vmem:[%s892 + $0x2c] sm:$0xf]
      %v905 = vld [vmem:[%s892 + $0x30] sm:$0xf]
      %v906 = vld [vmem:[%s892 + $0x34] sm:$0xf]
      %v907 = vld [vmem:[%s892 + $0x38] sm:$0xf]
      %v908 = vld [vmem:[%s892 + $0x3c] sm:$0xf]
      %v925 = vunpack.c.l.b16 %v893
      %v926 = vunpack.c.l.b16 %v894
      %v927 = vunpack.c.l.b16 %v895
      %v928 = vunpack.c.l.b16 %v896
      %v929 = vunpack.c.l.b16 %v897
      %v930 = vunpack.c.l.b16 %v898
      %v931 = vunpack.c.l.b16 %v899
      %v932 = vunpack.c.l.b16 %v900
      %v933 = vunpack.c.l.b16 %v901
      %v934 = vunpack.c.l.b16 %v902
      %v935 = vunpack.c.l.b16 %v903
      %v936 = vunpack.c.l.b16 %v904
      %v937 = vunpack.c.l.b16 %v905
      %v938 = vunpack.c.l.b16 %v906
      %v939 = vunpack.c.l.b16 %v907
      %v940 = vunpack.c.l.b16 %v908
      %v941 = vpack.c.b16 %v926, %v925
      %v942 = vpack.c.b16 %v928, %v927
      %v943 = vpack.c.b16 %v930, %v929
      %v944 = vpack.c.b16 %v932, %v931
      %v945 = vpack.c.b16 %v934, %v933
      %v946 = vpack.c.b16 %v936, %v935
      %v947 = vpack.c.b16 %v938, %v937
      %v948 = vpack.c.b16 %v940, %v939
      %957 = vmatpush.bf16.msra.mxu0 %v948
      %958 = vmatpush.bf16.msra.mxu0 %v947
      %959 = vmatpush.bf16.msra.mxu0 %v946
      %960 = vmatpush.bf16.msra.mxu0 %v945
      %961 = vmatpush.bf16.msra.mxu0 %v944
      %962 = vmatpush.bf16.msra.mxu0 %v943
      %963 = vmatpush.bf16.msra.mxu0 %v942
      %964 = vmatpush.bf16.msra.mxu0 %v941
      %965 = vmatmul.bf16.gmra.mxu0 %v880
      %v966 = vpop.f32.mrf.mxu0
      %v967 = vadd.f32 0.0, %v966
      %v968 = vpop.f32.mrf.mxu0
      %v969 = vadd.f32 0.0, %v968
      %970 = vmatmul.bf16.gmra.mxu0 %v881
      %v971 = vpop.f32.mrf.mxu0
      %v972 = vadd.f32 0.0, %v971
      %v973 = vpop.f32.mrf.mxu0
      %v974 = vadd.f32 0.0, %v973
      %975 = vmatmul.bf16.gmra.mxu0 %v882
      %v976 = vpop.f32.mrf.mxu0
      %v977 = vadd.f32 0.0, %v976
      %v978 = vpop.f32.mrf.mxu0
      %v979 = vadd.f32 0.0, %v978
      %980 = vmatmul.bf16.gmra.mxu0 %v883
      %v981 = vpop.f32.mrf.mxu0
      %v982 = vadd.f32 0.0, %v981
      %v983 = vpop.f32.mrf.mxu0
      %v984 = vadd.f32 0.0, %v983
      %985 = vdwg.mxu0
      %v986 = vadd.f32 %v884, %v967
      %v987 = vadd.f32 %v885, %v969
      %v988 = vadd.f32 %v886, %v972
      %v989 = vadd.f32 %v887, %v974
      %v990 = vadd.f32 %v888, %v977
      %v991 = vadd.f32 %v889, %v979
      %v992 = vadd.f32 %v890, %v982
      %v993 = vadd.f32 %v891, %v984
      %994 = vst [vmem:[#allocation3] sm:$0xff] %v986
      %995 = vst [vmem:[#allocation3 + $0x8] sm:$0xff] %v987
      %996 = vst [vmem:[#allocation3 + $0x10] sm:$0xff] %v988
      %997 = vst [vmem:[#allocation3 + $0x18] sm:$0xff] %v989
      %998 = vst [vmem:[#allocation3 + $0x20] sm:$0xff] %v990
      %999 = vst [vmem:[#allocation3 + $0x28] sm:$0xff] %v991
      %1000 = vst [vmem:[#allocation3 + $0x30] sm:$0xff] %v992
      %1001 = vst [vmem:[#allocation3 + $0x38] sm:$0xff] %v993
      %v1002 = vld [vmem:[%s336 + $0x9] sm:$0xff]
      %v1003 = vld [vmem:[%s336 + $0x21] sm:$0xff]
      %v1004 = vld [vmem:[%s336 + $0x39] sm:$0xff]
      %v1005 = vld [vmem:[%s336 + $0x51] sm:$0xff]
      %v1006 = vld [vmem:[%s336 + $0x69] sm:$0xff]
      %v1007 = vld [vmem:[%s336 + $0x81] sm:$0xff]
      %v1008 = vld [vmem:[%s336 + $0x99] sm:$0xff]
      %v1009 = vld [vmem:[%s336 + $0xb1] sm:$0xff]
      %v1010 = vpack.c.bf16 %v1003, %v1002
      %v1011 = vpack.c.bf16 %v1005, %v1004
      %v1012 = vpack.c.bf16 %v1007, %v1006
      %v1013 = vpack.c.bf16 %v1009, %v1008
      %v1014 = vld [vmem:[#allocation3] sm:$0xff]
      %v1015 = vld [vmem:[#allocation3 + $0x8] sm:$0xff]
      %v1016 = vld [vmem:[#allocation3 + $0x10] sm:$0xff]
      %v1017 = vld [vmem:[#allocation3 + $0x18] sm:$0xff]
      %v1018 = vld [vmem:[#allocation3 + $0x20] sm:$0xff]
      %v1019 = vld [vmem:[#allocation3 + $0x28] sm:$0xff]
      %v1020 = vld [vmem:[#allocation3 + $0x30] sm:$0xff]
      %v1021 = vld [vmem:[#allocation3 + $0x38] sm:$0xff]
      %s1022 = scalar_lea.vmem %s3, 320
      %v1023 = vld [vmem:[%s1022] sm:$0xf]
      %v1024 = vld [vmem:[%s1022 + $0x4] sm:$0xf]
      %v1025 = vld [vmem:[%s1022 + $0x8] sm:$0xf]
      %v1026 = vld [vmem:[%s1022 + $0xc] sm:$0xf]
      %v1027 = vld [vmem:[%s1022 + $0x10] sm:$0xf]
      %v1028 = vld [vmem:[%s1022 + $0x14] sm:$0xf]
      %v1029 = vld [vmem:[%s1022 + $0x18] sm:$0xf]
      %v1030 = vld [vmem:[%s1022 + $0x1c] sm:$0xf]
      %v1031 = vld [vmem:[%s1022 + $0x20] sm:$0xf]
      %v1032 = vld [vmem:[%s1022 + $0x24] sm:$0xf]
      %v1033 = vld [vmem:[%s1022 + $0x28] sm:$0xf]
      %v1034 = vld [vmem:[%s1022 + $0x2c] sm:$0xf]
      %v1035 = vld [vmem:[%s1022 + $0x30] sm:$0xf]
      %v1036 = vld [vmem:[%s1022 + $0x34] sm:$0xf]
      %v1037 = vld [vmem:[%s1022 + $0x38] sm:$0xf]
      %v1038 = vld [vmem:[%s1022 + $0x3c] sm:$0xf]
      %v1055 = vunpack.c.l.b16 %v1023
      %v1056 = vunpack.c.l.b16 %v1024
      %v1057 = vunpack.c.l.b16 %v1025
      %v1058 = vunpack.c.l.b16 %v1026
      %v1059 = vunpack.c.l.b16 %v1027
      %v1060 = vunpack.c.l.b16 %v1028
      %v1061 = vunpack.c.l.b16 %v1029
      %v1062 = vunpack.c.l.b16 %v1030
      %v1063 = vunpack.c.l.b16 %v1031
      %v1064 = vunpack.c.l.b16 %v1032
      %v1065 = vunpack.c.l.b16 %v1033
      %v1066 = vunpack.c.l.b16 %v1034
      %v1067 = vunpack.c.l.b16 %v1035
      %v1068 = vunpack.c.l.b16 %v1036
      %v1069 = vunpack.c.l.b16 %v1037
      %v1070 = vunpack.c.l.b16 %v1038
      %v1071 = vpack.c.b16 %v1056, %v1055
      %v1072 = vpack.c.b16 %v1058, %v1057
      %v1073 = vpack.c.b16 %v1060, %v1059
      %v1074 = vpack.c.b16 %v1062, %v1061
      %v1075 = vpack.c.b16 %v1064, %v1063
      %v1076 = vpack.c.b16 %v1066, %v1065
      %v1077 = vpack.c.b16 %v1068, %v1067
      %v1078 = vpack.c.b16 %v1070, %v1069
      %1087 = vmatpush.bf16.msra.mxu0 %v1078
      %1088 = vmatpush.bf16.msra.mxu0 %v1077
      %1089 = vmatpush.bf16.msra.mxu0 %v1076
      %1090 = vmatpush.bf16.msra.mxu0 %v1075
      %1091 = vmatpush.bf16.msra.mxu0 %v1074
      %1092 = vmatpush.bf16.msra.mxu0 %v1073
      %1093 = vmatpush.bf16.msra.mxu0 %v1072
      %1094 = vmatpush.bf16.msra.mxu0 %v1071
      %1095 = vmatmul.bf16.gmra.mxu0 %v1010
      %v1096 = vpop.f32.mrf.mxu0
      %v1097 = vadd.f32 0.0, %v1096
      %v1098 = vpop.f32.mrf.mxu0
      %v1099 = vadd.f32 0.0, %v1098
      %1100 = vmatmul.bf16.gmra.mxu0 %v1011
      %v1101 = vpop.f32.mrf.mxu0
      %v1102 = vadd.f32 0.0, %v1101
      %v1103 = vpop.f32.mrf.mxu0
      %v1104 = vadd.f32 0.0, %v1103
      %1105 = vmatmul.bf16.gmra.mxu0 %v1012
      %v1106 = vpop.f32.mrf.mxu0
      %v1107 = vadd.f32 0.0, %v1106
      %v1108 = vpop.f32.mrf.mxu0
      %v1109 = vadd.f32 0.0, %v1108
      %1110 = vmatmul.bf16.gmra.mxu0 %v1013
      %v1111 = vpop.f32.mrf.mxu0
      %v1112 = vadd.f32 0.0, %v1111
      %v1113 = vpop.f32.mrf.mxu0
      %v1114 = vadd.f32 0.0, %v1113
      %1115 = vdwg.mxu0
      %v1116 = vadd.f32 %v1014, %v1097
      %v1117 = vadd.f32 %v1015, %v1099
      %v1118 = vadd.f32 %v1016, %v1102
      %v1119 = vadd.f32 %v1017, %v1104
      %v1120 = vadd.f32 %v1018, %v1107
      %v1121 = vadd.f32 %v1019, %v1109
      %v1122 = vadd.f32 %v1020, %v1112
      %v1123 = vadd.f32 %v1021, %v1114
      %1124 = vst [vmem:[#allocation3] sm:$0xff] %v1116
      %1125 = vst [vmem:[#allocation3 + $0x8] sm:$0xff] %v1117
      %1126 = vst [vmem:[#allocation3 + $0x10] sm:$0xff] %v1118
      %1127 = vst [vmem:[#allocation3 + $0x18] sm:$0xff] %v1119
      %1128 = vst [vmem:[#allocation3 + $0x20] sm:$0xff] %v1120
      %1129 = vst [vmem:[#allocation3 + $0x28] sm:$0xff] %v1121
      %1130 = vst [vmem:[#allocation3 + $0x30] sm:$0xff] %v1122
      %1131 = vst [vmem:[#allocation3 + $0x38] sm:$0xff] %v1123
      %s1132 = scalar_lea.vmem [#allocation2], 48
      %v1133 = vld [vmem:[%s1132 + $0x7] sm:$0xff]
      %v1134 = vld [vmem:[%s1132 + $0x1f] sm:$0xff]
      %v1135 = vld [vmem:[%s1132 + $0x37] sm:$0xff]
      %v1136 = vld [vmem:[%s1132 + $0x4f] sm:$0xff]
      %v1137 = vld [vmem:[%s1132 + $0x67] sm:$0xff]
      %v1138 = vld [vmem:[%s1132 + $0x7f] sm:$0xff]
      %v1139 = vld [vmem:[%s1132 + $0x97] sm:$0xff]
      %v1140 = vld [vmem:[%s1132 + $0xaf] sm:$0xff]
      %v1141 = vpack.c.bf16 %v1134, %v1133
      %v1142 = vpack.c.bf16 %v1136, %v1135
      %v1143 = vpack.c.bf16 %v1138, %v1137
      %v1144 = vpack.c.bf16 %v1140, %v1139
      %v1145 = vld [vmem:[#allocation3] sm:$0xff]
      %v1146 = vld [vmem:[#allocation3 + $0x8] sm:$0xff]
      %v1147 = vld [vmem:[#allocation3 + $0x10] sm:$0xff]
      %v1148 = vld [vmem:[#allocation3 + $0x18] sm:$0xff]
      %v1149 = vld [vmem:[#allocation3 + $0x20] sm:$0xff]
      %v1150 = vld [vmem:[#allocation3 + $0x28] sm:$0xff]
      %v1151 = vld [vmem:[#allocation3 + $0x30] sm:$0xff]
      %v1152 = vld [vmem:[#allocation3 + $0x38] sm:$0xff]
      %s1153 = scalar_lea.vmem %s3, 384
      %v1154 = vld [vmem:[%s1153] sm:$0xf]
      %v1155 = vld [vmem:[%s1153 + $0x4] sm:$0xf]
      %v1156 = vld [vmem:[%s1153 + $0x8] sm:$0xf]
      %v1157 = vld [vmem:[%s1153 + $0xc] sm:$0xf]
      %v1158 = vld [vmem:[%s1153 + $0x10] sm:$0xf]
      %v1159 = vld [vmem:[%s1153 + $0x14] sm:$0xf]
      %v1160 = vld [vmem:[%s1153 + $0x18] sm:$0xf]
      %v1161 = vld [vmem:[%s1153 + $0x1c] sm:$0xf]
      %v1162 = vld [vmem:[%s1153 + $0x20] sm:$0xf]
      %v1163 = vld [vmem:[%s1153 + $0x24] sm:$0xf]
      %v1164 = vld [vmem:[%s1153 + $0x28] sm:$0xf]
      %v1165 = vld [vmem:[%s1153 + $0x2c] sm:$0xf]
      %v1166 = vld [vmem:[%s1153 + $0x30] sm:$0xf]
      %v1167 = vld [vmem:[%s1153 + $0x34] sm:$0xf]
      %v1168 = vld [vmem:[%s1153 + $0x38] sm:$0xf]
      %v1169 = vld [vmem:[%s1153 + $0x3c] sm:$0xf]
      %v1186 = vunpack.c.l.b16 %v1154
      %v1187 = vunpack.c.l.b16 %v1155
      %v1188 = vunpack.c.l.b16 %v1156
      %v1189 = vunpack.c.l.b16 %v1157
      %v1190 = vunpack.c.l.b16 %v1158
      %v1191 = vunpack.c.l.b16 %v1159
      %v1192 = vunpack.c.l.b16 %v1160
      %v1193 = vunpack.c.l.b16 %v1161
      %v1194 = vunpack.c.l.b16 %v1162
      %v1195 = vunpack.c.l.b16 %v1163
      %v1196 = vunpack.c.l.b16 %v1164
      %v1197 = vunpack.c.l.b16 %v1165
      %v1198 = vunpack.c.l.b16 %v1166
      %v1199 = vunpack.c.l.b16 %v1167
      %v1200 = vunpack.c.l.b16 %v1168
      %v1201 = vunpack.c.l.b16 %v1169
      %v1202 = vpack.c.b16 %v1187, %v1186
      %v1203 = vpack.c.b16 %v1189, %v1188
      %v1204 = vpack.c.b16 %v1191, %v1190
      %v1205 = vpack.c.b16 %v1193, %v1192
      %v1206 = vpack.c.b16 %v1195, %v1194
      %v1207 = vpack.c.b16 %v1197, %v1196
      %v1208 = vpack.c.b16 %v1199, %v1198
      %v1209 = vpack.c.b16 %v1201, %v1200
      %1218 = vmatpush.bf16.msra.mxu0 %v1209
      %1219 = vmatpush.bf16.msra.mxu0 %v1208
      %1220 = vmatpush.bf16.msra.mxu0 %v1207
      %1221 = vmatpush.bf16.msra.mxu0 %v1206
      %1222 = vmatpush.bf16.msra.mxu0 %v1205
      %1223 = vmatpush.bf16.msra.mxu0 %v1204
      %1224 = vmatpush.bf16.msra.mxu0 %v1203
      %1225 = vmatpush.bf16.msra.mxu0 %v1202
      %1226 = vmatmul.bf16.gmra.mxu0 %v1141
      %v1227 = vpop.f32.mrf.mxu0
      %v1228 = vadd.f32 0.0, %v1227
      %v1229 = vpop.f32.mrf.mxu0
      %v1230 = vadd.f32 0.0, %v1229
      %1231 = vmatmul.bf16.gmra.mxu0 %v1142
      %v1232 = vpop.f32.mrf.mxu0
      %v1233 = vadd.f32 0.0, %v1232
      %v1234 = vpop.f32.mrf.mxu0
      %v1235 = vadd.f32 0.0, %v1234
      %1236 = vmatmul.bf16.gmra.mxu0 %v1143
      %v1237 = vpop.f32.mrf.mxu0
      %v1238 = vadd.f32 0.0, %v1237
      %v1239 = vpop.f32.mrf.mxu0
      %v1240 = vadd.f32 0.0, %v1239
      %1241 = vmatmul.bf16.gmra.mxu0 %v1144
      %v1242 = vpop.f32.mrf.mxu0
      %v1243 = vadd.f32 0.0, %v1242
      %v1244 = vpop.f32.mrf.mxu0
      %v1245 = vadd.f32 0.0, %v1244
      %1246 = vdwg.mxu0
      %v1247 = vadd.f32 %v1145, %v1228
      %v1248 = vadd.f32 %v1146, %v1230
      %v1249 = vadd.f32 %v1147, %v1233
      %v1250 = vadd.f32 %v1148, %v1235
      %v1251 = vadd.f32 %v1149, %v1238
      %v1252 = vadd.f32 %v1150, %v1240
      %v1253 = vadd.f32 %v1151, %v1243
      %v1254 = vadd.f32 %v1152, %v1245
      %1255 = vst [vmem:[#allocation3] sm:$0xff] %v1247
      %1256 = vst [vmem:[#allocation3 + $0x8] sm:$0xff] %v1248
      %1257 = vst [vmem:[#allocation3 + $0x10] sm:$0xff] %v1249
      %1258 = vst [vmem:[#allocation3 + $0x18] sm:$0xff] %v1250
      %1259 = vst [vmem:[#allocation3 + $0x20] sm:$0xff] %v1251
      %1260 = vst [vmem:[#allocation3 + $0x28] sm:$0xff] %v1252
      %1261 = vst [vmem:[#allocation3 + $0x30] sm:$0xff] %v1253
      %1262 = vst [vmem:[#allocation3 + $0x38] sm:$0xff] %v1254
      %v1263 = vld [vmem:[%s1132 + $0x8] sm:$0xff]
      %v1264 = vld [vmem:[%s1132 + $0x20] sm:$0xff]
      %v1265 = vld [vmem:[%s1132 + $0x38] sm:$0xff]
      %v1266 = vld [vmem:[%s1132 + $0x50] sm:$0xff]
      %v1267 = vld [vmem:[%s1132 + $0x68] sm:$0xff]
      %v1268 = vld [vmem:[%s1132 + $0x80] sm:$0xff]
      %v1269 = vld [vmem:[%s1132 + $0x98] sm:$0xff]
      %v1270 = vld [vmem:[%s1132 + $0xb0] sm:$0xff]
      %v1271 = vpack.c.bf16 %v1264, %v1263
      %v1272 = vpack.c.bf16 %v1266, %v1265
      %v1273 = vpack.c.bf16 %v1268, %v1267
      %v1274 = vpack.c.bf16 %v1270, %v1269
      %v1275 = vld [vmem:[#allocation3] sm:$0xff]
      %v1276 = vld [vmem:[#allocation3 + $0x8] sm:$0xff]
      %v1277 = vld [vmem:[#allocation3 + $0x10] sm:$0xff]
      %v1278 = vld [vmem:[#allocation3 + $0x18] sm:$0xff]
      %v1279 = vld [vmem:[#allocation3 + $0x20] sm:$0xff]
      %v1280 = vld [vmem:[#allocation3 + $0x28] sm:$0xff]
      %v1281 = vld [vmem:[#allocation3 + $0x30] sm:$0xff]
      %v1282 = vld [vmem:[#allocation3 + $0x38] sm:$0xff]
      %s1283 = scalar_lea.vmem %s3, 448
      %v1284 = vld [vmem:[%s1283] sm:$0xf]
      %v1285 = vld [vmem:[%s1283 + $0x4] sm:$0xf]
      %v1286 = vld [vmem:[%s1283 + $0x8] sm:$0xf]
      %v1287 = vld [vmem:[%s1283 + $0xc] sm:$0xf]
      %v1288 = vld [vmem:[%s1283 + $0x10] sm:$0xf]
      %v1289 = vld [vmem:[%s1283 + $0x14] sm:$0xf]
      %v1290 = vld [vmem:[%s1283 + $0x18] sm:$0xf]
      %v1291 = vld [vmem:[%s1283 + $0x1c] sm:$0xf]
      %v1292 = vld [vmem:[%s1283 + $0x20] sm:$0xf]
      %v1293 = vld [vmem:[%s1283 + $0x24] sm:$0xf]
      %v1294 = vld [vmem:[%s1283 + $0x28] sm:$0xf]
      %v1295 = vld [vmem:[%s1283 + $0x2c] sm:$0xf]
      %v1296 = vld [vmem:[%s1283 + $0x30] sm:$0xf]
      %v1297 = vld [vmem:[%s1283 + $0x34] sm:$0xf]
      %v1298 = vld [vmem:[%s1283 + $0x38] sm:$0xf]
      %v1299 = vld [vmem:[%s1283 + $0x3c] sm:$0xf]
      %v1316 = vunpack.c.l.b16 %v1284
      %v1317 = vunpack.c.l.b16 %v1285
      %v1318 = vunpack.c.l.b16 %v1286
      %v1319 = vunpack.c.l.b16 %v1287
      %v1320 = vunpack.c.l.b16 %v1288
      %v1321 = vunpack.c.l.b16 %v1289
      %v1322 = vunpack.c.l.b16 %v1290
      %v1323 = vunpack.c.l.b16 %v1291
      %v1324 = vunpack.c.l.b16 %v1292
      %v1325 = vunpack.c.l.b16 %v1293
      %v1326 = vunpack.c.l.b16 %v1294
      %v1327 = vunpack.c.l.b16 %v1295
      %v1328 = vunpack.c.l.b16 %v1296
      %v1329 = vunpack.c.l.b16 %v1297
      %v1330 = vunpack.c.l.b16 %v1298
      %v1331 = vunpack.c.l.b16 %v1299
      %v1332 = vpack.c.b16 %v1317, %v1316
      %v1333 = vpack.c.b16 %v1319, %v1318
      %v1334 = vpack.c.b16 %v1321, %v1320
      %v1335 = vpack.c.b16 %v1323, %v1322
      %v1336 = vpack.c.b16 %v1325, %v1324
      %v1337 = vpack.c.b16 %v1327, %v1326
      %v1338 = vpack.c.b16 %v1329, %v1328
      %v1339 = vpack.c.b16 %v1331, %v1330
      %1348 = vmatpush.bf16.msra.mxu0 %v1339
      %1349 = vmatpush.bf16.msra.mxu0 %v1338
      %1350 = vmatpush.bf16.msra.mxu0 %v1337
      %1351 = vmatpush.bf16.msra.mxu0 %v1336
      %1352 = vmatpush.bf16.msra.mxu0 %v1335
      %1353 = vmatpush.bf16.msra.mxu0 %v1334
      %1354 = vmatpush.bf16.msra.mxu0 %v1333
      %1355 = vmatpush.bf16.msra.mxu0 %v1332
      %1356 = vmatmul.bf16.gmra.mxu0 %v1271
      %v1357 = vpop.f32.mrf.mxu0
      %v1358 = vadd.f32 0.0, %v1357
      %v1359 = vpop.f32.mrf.mxu0
      %v1360 = vadd.f32 0.0, %v1359
      %1361 = vmatmul.bf16.gmra.mxu0 %v1272
      %v1362 = vpop.f32.mrf.mxu0
      %v1363 = vadd.f32 0.0, %v1362
      %v1364 = vpop.f32.mrf.mxu0
      %v1365 = vadd.f32 0.0, %v1364
      %1366 = vmatmul.bf16.gmra.mxu0 %v1273
      %v1367 = vpop.f32.mrf.mxu0
      %v1368 = vadd.f32 0.0, %v1367
      %v1369 = vpop.f32.mrf.mxu0
      %v1370 = vadd.f32 0.0, %v1369
      %1371 = vmatmul.bf16.gmra.mxu0 %v1274
      %v1372 = vpop.f32.mrf.mxu0
      %v1373 = vadd.f32 0.0, %v1372
      %v1374 = vpop.f32.mrf.mxu0
      %v1375 = vadd.f32 0.0, %v1374
      %1376 = vdwg.mxu0
      %v1377 = vadd.f32 %v1275, %v1358
      %v1378 = vadd.f32 %v1276, %v1360
      %v1379 = vadd.f32 %v1277, %v1363
      %v1380 = vadd.f32 %v1278, %v1365
      %v1381 = vadd.f32 %v1279, %v1368
      %v1382 = vadd.f32 %v1280, %v1370
      %v1383 = vadd.f32 %v1281, %v1373
      %v1384 = vadd.f32 %v1282, %v1375
      %1385 = vst [vmem:[#allocation3] sm:$0xff] %v1377
      %1386 = vst [vmem:[#allocation3 + $0x8] sm:$0xff] %v1378
      %1387 = vst [vmem:[#allocation3 + $0x10] sm:$0xff] %v1379
      %1388 = vst [vmem:[#allocation3 + $0x18] sm:$0xff] %v1380
      %1389 = vst [vmem:[#allocation3 + $0x20] sm:$0xff] %v1381
      %1390 = vst [vmem:[#allocation3 + $0x28] sm:$0xff] %v1382
      %1391 = vst [vmem:[#allocation3 + $0x30] sm:$0xff] %v1383
      %1392 = vst [vmem:[#allocation3 + $0x38] sm:$0xff] %v1384
      %v1393 = vld [vmem:[%s1132 + $0x9] sm:$0xff]
      %v1394 = vld [vmem:[%s1132 + $0x21] sm:$0xff]
      %v1395 = vld [vmem:[%s1132 + $0x39] sm:$0xff]
      %v1396 = vld [vmem:[%s1132 + $0x51] sm:$0xff]
      %v1397 = vld [vmem:[%s1132 + $0x69] sm:$0xff]
      %v1398 = vld [vmem:[%s1132 + $0x81] sm:$0xff]
      %v1399 = vld [vmem:[%s1132 + $0x99] sm:$0xff]
      %v1400 = vld [vmem:[%s1132 + $0xb1] sm:$0xff]
      %v1401 = vpack.c.bf16 %v1394, %v1393
      %v1402 = vpack.c.bf16 %v1396, %v1395
      %v1403 = vpack.c.bf16 %v1398, %v1397
      %v1404 = vpack.c.bf16 %v1400, %v1399
      %v1405 = vld [vmem:[#allocation3] sm:$0xff]
      %v1406 = vld [vmem:[#allocation3 + $0x8] sm:$0xff]
      %v1407 = vld [vmem:[#allocation3 + $0x10] sm:$0xff]
      %v1408 = vld [vmem:[#allocation3 + $0x18] sm:$0xff]
      %v1409 = vld [vmem:[#allocation3 + $0x20] sm:$0xff]
      %v1410 = vld [vmem:[#allocation3 + $0x28] sm:$0xff]
      %v1411 = vld [vmem:[#allocation3 + $0x30] sm:$0xff]
      %v1412 = vld [vmem:[#allocation3 + $0x38] sm:$0xff]
      %s1413 = scalar_lea.vmem %s3, 512
      %v1414 = vld [vmem:[%s1413] sm:$0xf]
      %v1415 = vld [vmem:[%s1413 + $0x4] sm:$0xf]
      %v1416 = vld [vmem:[%s1413 + $0x8] sm:$0xf]
      %v1417 = vld [vmem:[%s1413 + $0xc] sm:$0xf]
      %v1418 = vld [vmem:[%s1413 + $0x10] sm:$0xf]
      %v1419 = vld [vmem:[%s1413 + $0x14] sm:$0xf]
      %v1420 = vld [vmem:[%s1413 + $0x18] sm:$0xf]
      %v1421 = vld [vmem:[%s1413 + $0x1c] sm:$0xf]
      %v1422 = vld [vmem:[%s1413 + $0x20] sm:$0xf]
      %v1423 = vld [vmem:[%s1413 + $0x24] sm:$0xf]
      %v1424 = vld [vmem:[%s1413 + $0x28] sm:$0xf]
      %v1425 = vld [vmem:[%s1413 + $0x2c] sm:$0xf]
      %v1426 = vld [vmem:[%s1413 + $0x30] sm:$0xf]
      %v1427 = vld [vmem:[%s1413 + $0x34] sm:$0xf]
      %v1428 = vld [vmem:[%s1413 + $0x38] sm:$0xf]
      %v1429 = vld [vmem:[%s1413 + $0x3c] sm:$0xf]
      %v1446 = vunpack.c.l.b16 %v1414
      %v1447 = vunpack.c.l.b16 %v1415
      %v1448 = vunpack.c.l.b16 %v1416
      %v1449 = vunpack.c.l.b16 %v1417
      %v1450 = vunpack.c.l.b16 %v1418
      %v1451 = vunpack.c.l.b16 %v1419
      %v1452 = vunpack.c.l.b16 %v1420
      %v1453 = vunpack.c.l.b16 %v1421
      %v1454 = vunpack.c.l.b16 %v1422
      %v1455 = vunpack.c.l.b16 %v1423
      %v1456 = vunpack.c.l.b16 %v1424
      %v1457 = vunpack.c.l.b16 %v1425
      %v1458 = vunpack.c.l.b16 %v1426
      %v1459 = vunpack.c.l.b16 %v1427
      %v1460 = vunpack.c.l.b16 %v1428
      %v1461 = vunpack.c.l.b16 %v1429
      %v1462 = vpack.c.b16 %v1447, %v1446
      %v1463 = vpack.c.b16 %v1449, %v1448
      %v1464 = vpack.c.b16 %v1451, %v1450
      %v1465 = vpack.c.b16 %v1453, %v1452
      %v1466 = vpack.c.b16 %v1455, %v1454
      %v1467 = vpack.c.b16 %v1457, %v1456
      %v1468 = vpack.c.b16 %v1459, %v1458
      %v1469 = vpack.c.b16 %v1461, %v1460
      %1478 = vmatpush.bf16.msra.mxu0 %v1469
      %1479 = vmatpush.bf16.msra.mxu0 %v1468
      %1480 = vmatpush.bf16.msra.mxu0 %v1467
      %1481 = vmatpush.bf16.msra.mxu0 %v1466
      %1482 = vmatpush.bf16.msra.mxu0 %v1465
      %1483 = vmatpush.bf16.msra.mxu0 %v1464
      %1484 = vmatpush.bf16.msra.mxu0 %v1463
      %1485 = vmatpush.bf16.msra.mxu0 %v1462
      %1486 = vmatmul.bf16.gmra.mxu0 %v1401
      %v1487 = vpop.f32.mrf.mxu0
      %v1488 = vadd.f32 0.0, %v1487
      %v1489 = vpop.f32.mrf.mxu0
      %v1490 = vadd.f32 0.0, %v1489
      %1491 = vmatmul.bf16.gmra.mxu0 %v1402
      %v1492 = vpop.f32.mrf.mxu0
      %v1493 = vadd.f32 0.0, %v1492
      %v1494 = vpop.f32.mrf.mxu0
      %v1495 = vadd.f32 0.0, %v1494
      %1496 = vmatmul.bf16.gmra.mxu0 %v1403
      %v1497 = vpop.f32.mrf.mxu0
      %v1498 = vadd.f32 0.0, %v1497
      %v1499 = vpop.f32.mrf.mxu0
      %v1500 = vadd.f32 0.0, %v1499
      %1501 = vmatmul.bf16.gmra.mxu0 %v1404
      %v1502 = vpop.f32.mrf.mxu0
      %v1503 = vadd.f32 0.0, %v1502
      %v1504 = vpop.f32.mrf.mxu0
      %v1505 = vadd.f32 0.0, %v1504
      %1506 = vdwg.mxu0
      %v1507 = vadd.f32 %v1405, %v1488
      %v1508 = vadd.f32 %v1406, %v1490
      %v1509 = vadd.f32 %v1407, %v1493
      %v1510 = vadd.f32 %v1408, %v1495
      %v1511 = vadd.f32 %v1409, %v1498
      %v1512 = vadd.f32 %v1410, %v1500
      %v1513 = vadd.f32 %v1411, %v1503
      %v1514 = vadd.f32 %v1412, %v1505
      %1515 = vst [vmem:[#allocation3] sm:$0xff] %v1507
      %1516 = vst [vmem:[#allocation3 + $0x8] sm:$0xff] %v1508
      %1517 = vst [vmem:[#allocation3 + $0x10] sm:$0xff] %v1509
      %1518 = vst [vmem:[#allocation3 + $0x18] sm:$0xff] %v1510
      %1519 = vst [vmem:[#allocation3 + $0x20] sm:$0xff] %v1511
      %1520 = vst [vmem:[#allocation3 + $0x28] sm:$0xff] %v1512
      %1521 = vst [vmem:[#allocation3 + $0x30] sm:$0xff] %v1513
      %1522 = vst [vmem:[#allocation3 + $0x38] sm:$0xff] %v1514
      %v1523 = vld [vmem:[#allocation3] sm:$0xff]
      %v1524 = vld [vmem:[#allocation3 + $0x8] sm:$0xff]
      %v1525 = vld [vmem:[#allocation3 + $0x10] sm:$0xff]
      %v1526 = vld [vmem:[#allocation3 + $0x18] sm:$0xff]
      %v1527 = vld [vmem:[#allocation3 + $0x20] sm:$0xff]
      %v1528 = vld [vmem:[#allocation3 + $0x28] sm:$0xff]
      %v1529 = vld [vmem:[#allocation3 + $0x30] sm:$0xff]
      %v1530 = vld [vmem:[#allocation3 + $0x38] sm:$0xff]
      %v1531 = vld [vmem:[%s4] sm:$0x1]
      %v1533 = vperm.slane %v1531, 0
      %v1535 = vadd.f32 %v1523, %v1533
      %v1536 = vadd.f32 %v1524, %v1533
      %v1537 = vadd.f32 %v1525, %v1533
      %v1538 = vadd.f32 %v1526, %v1533
      %v1539 = vadd.f32 %v1527, %v1533
      %v1540 = vadd.f32 %v1528, %v1533
      %v1541 = vadd.f32 %v1529, %v1533
      %v1542 = vadd.f32 %v1530, %v1533
      %1543 = vst [vmem:[%s260] sm:$0xff] %v1535
      %1544 = vst [vmem:[%s260 + $0x8] sm:$0xff] %v1536
      %1545 = vst [vmem:[%s260 + $0x10] sm:$0xff] %v1537
      %1546 = vst [vmem:[%s260 + $0x18] sm:$0xff] %v1538
      %1547 = vst [vmem:[%s260 + $0x20] sm:$0xff] %v1539
      %1548 = vst [vmem:[%s260 + $0x28] sm:$0xff] %v1540
      %1549 = vst [vmem:[%s260 + $0x30] sm:$0xff] %v1541
      %1550 = vst [vmem:[%s260 + $0x38] sm:$0xff] %v1542
      %v1551 = vadd.f32 %v1535, %v1536
      %v1552 = vadd.f32 %v1551, %v1537
      %v1553 = vadd.f32 %v1552, %v1538
      %v1554 = vadd.f32 %v1553, %v1539
      %v1555 = vadd.f32 %v1554, %v1540
      %v1556 = vadd.f32 %v1555, %v1541
      %v1557 = vadd.f32 %v1556, %v1542
      %v1558 = vrot.slane %v1557, 4
      %v1559 = vadd.f32 %v1557, %v1558
      %v1560 = vrot.slane %v1559, 2
      %v1561 = vadd.f32 %v1559, %v1560
      %v1562 = vrot.slane %v1561, 1
      %v1563 = vadd.f32 %v1561, %v1562
      %v1564 = vmul.f32 %v1535, %v1535
      %v1565 = vmul.f32 %v1536, %v1536
      %v1566 = vmul.f32 %v1537, %v1537
      %v1567 = vmul.f32 %v1538, %v1538
      %v1568 = vmul.f32 %v1539, %v1539
      %v1569 = vmul.f32 %v1540, %v1540
      %v1570 = vmul.f32 %v1541, %v1541
      %v1571 = vmul.f32 %v1542, %v1542
      %v1572 = vadd.f32 %v1564, %v1565
      %v1573 = vadd.f32 %v1572, %v1566
      %v1574 = vadd.f32 %v1573, %v1567
      %v1575 = vadd.f32 %v1574, %v1568
      %v1576 = vadd.f32 %v1575, %v1569
      %v1577 = vadd.f32 %v1576, %v1570
      %v1578 = vadd.f32 %v1577, %v1571
      %v1579 = vrot.slane %v1578, 4
      %v1580 = vadd.f32 %v1578, %v1579
      %v1581 = vrot.slane %v1580, 2
      %v1582 = vadd.f32 %v1580, %v1581
      %v1583 = vrot.slane %v1582, 1
      %v1584 = vadd.f32 %v1582, %v1583
      %v1585 = vlaneseq
      %v1586 = vshrl.u32 %v1585, 7
      %vm1587 = vcmp.eq.s32.totalorder %v1586, 0
      %v1588 = vsel %vm1587, %v1563, 0.0
      %vm1589 = vcmp.eq.s32.totalorder %v1586, 1
      %v1590 = vsel %vm1589, %v1584, 0.0
      %v1591 = vadd.f32 %v1588, %v1590
      %1592 = vst [vmem:[%s265] sm:$0xff] %v1591
      %s1593 = smul.u32 8, %s18
      %p1594 = scmp.lt.s32.totalorder %s1593, 15
      %s1595 = scalar_select %p1594, %s1593, 15
      %s1596 = smul.addr %s1595, 8
      %s1597 = scalar_lea.vmem %s5, %s1596
      %p1598 = scmp.lt.s32.totalorder %s18, 1
      %s1599 = scalar_select %p1598, %s18, 1
      %s1600 = smul.addr %s1599, 8
      %s1601 = scalar_lea.vmem %s6, %s1600
      // Predicated region
      $region41: #{conv_block_forward.4} parent=39 // pred_check
        %p1602 = pneg %p146
      $region42: #{conv_block_forward.4} parent=39 // pred_check_branch
        %1604 = sbr.rel (%p1602) target = $region44
      $region43: #{conv_block_forward.4} parent=39 // pred_region
        %s1605 = smul.u32 8, %s18
      $region44: #{conv_block_forward.4} parent=39 // pred_fallthru
        _
      // Predicated region
      $region45: #{conv_block_forward.4} parent=39 // pred_check
        %p1606 = pneg %p172
      $region46: #{conv_block_forward.4} parent=39 // pred_check_branch
        %1608 = sbr.rel (%p1606) target = $region48
      $region47: #{conv_block_forward.4} parent=39 // pred_region
        _
      $region48: #{conv_block_forward.4} parent=39 // pred_fallthru
        _
    $region40: #{conv_block_forward.4} parent=5 // pred_fallthru
      _
    %p1609 = scmp.le.s32.totalorder 2, %s13
    // Predicated region
    $region49: #{conv_block_forward.4} parent=5 // pred_check
      %p1610 = pneg %p1609
    $region50: #{conv_block_forward.4} parent=5 // pred_check_branch
      %1612 = sbr.rel (%p1610) target = $region52
    $region51: #{conv_block_forward.4} parent=5 // pred_region
      %s1613 = ssub.s32 %s13, 2
      // Predicated region
      $region53: #{conv_block_forward.4} parent=51 // pred_check
        %p1614 = pneg %p152
      $region54: #{conv_block_forward.4} parent=51 // pred_check_branch
        %1616 = sbr.rel (%p1614) target = $region56
      $region55: #{conv_block_forward.4} parent=51 // pred_region
        %s1617 = smul.u32 8, %s19
        %p1618 = scmp.lt.s32.totalorder %s1617, 15
        %s1619 = scalar_select %p1618, %s1617, 15
        %s1620 = smul.addr %s1619, 8
        %s1621 = scalar_lea.vmem %s5, %s1620
      $region56: #{conv_block_forward.4} parent=51 // pred_fallthru
        _
      // Predicated region
      $region57: #{conv_block_forward.4} parent=51 // pred_check
        %p1622 = pneg %p178
      $region58: #{conv_block_forward.4} parent=51 // pred_check_branch
        %1624 = sbr.rel (%p1622) target = $region60
      $region59: #{conv_block_forward.4} parent=51 // pred_region
        %p1625 = scmp.lt.s32.totalorder %s19, 1
        %s1626 = scalar_select %p1625, %s19, 1
        %s1627 = smul.addr %s1626, 8
        %s1628 = scalar_lea.vmem %s6, %s1627
      $region60: #{conv_block_forward.4} parent=51 // pred_fallthru
        _
    $region52: #{conv_block_forward.4} parent=5 // pred_fallthru
      _
  $region6: #{conv_block_forward.4} parent=0 // loop_footer
    %s17 = sadd.s32 1, %s13
  $region7: #{conv_block_forward.4} parent=0 // loop_footer_branch
    %12 = sbr.rel target = $region3
  $region8: #{conv_block_forward.4} parent=0 // loop_exit
    _

// kernel: conv_block_forward.3
$region0: #{conv_block_forward.3}
  #allocation0 [shape = 'u32[]', space=smem, size = 0x4, offset = 0x4, fixed_abs, tag = 'smem constant byte address 0x4 - core index']
  #allocation1 [shape = 'u32[72,128]{1,0:T(1,128)}', space=vmem, size = 0x9000, scoped, tag = 'internal scratch']
  #allocation2 [shape = 'f32[11,17,128]{2,1,0:T(8,128)}', space=vmem, size = 0x21000, scoped, tag = 'scratch operand']
  #allocation3 [shape = 'f32[64,128]{1,0:T(8,128)}', space=vmem, size = 0x8000, scoped, tag = 'scratch operand']
  %s0 = inlined_call_operand.vmem [shape: f32[2,8,8,128], index: 0, kind: input, shape index: {}]
  %s1 = inlined_call_operand.vmem [shape: bf16[16,128,128], index: 1, kind: input, shape index: {}]
  %s2 = inlined_call_operand.vmem [shape: f32[1,128], index: 2, kind: input, shape index: {}]
  %s3 = inlined_call_operand.vmem [shape: bf16[128,128], index: 3, kind: output, shape index: {0}]
  %s4 = inlined_call_operand.vmem [shape: f32[16,128], index: 4, kind: output, shape index: {1}]
  %5 = xla_tuple %s3, %s4
  %s6 = sld [smem:[#allocation0]]
  $region53: #{conv_block_forward.3} parent=0
    _
  %s8 = ssub.s32 1, %s6
  %s9 = scalar_select 0, %s8, %s6
  loop: start=0, step=1, limit=4
  $region2: #{conv_block_forward.3} parent=0 // loop_pre_header
    _
  $region3: #{conv_block_forward.3} parent=0 // loop_header
    %s11 = sphi 0, %s15
    %p12 = scmp.ge.s32.totalorder %s11, 4
    %s21 = sphi 0, %s23
    %s24 = sphi 0, %s21
    %s25 = sphi 0, %s24
    %s41 = sphi 0, %s25
    %s45 = sphi 0, %s45
    %s47 = sphi 0, %s45
    %s48 = sphi 0, %s47
    %s62 = sphi 0, %s48
    %s66 = sphi 0, %s66
    %s68 = sphi 0, %s66
    %s69 = sphi 0, %s68
    %s83 = sphi 0, %s69
    %s89 = sphi 0, %s91
    %s92 = sphi 0, %s89
    %s93 = sphi 0, %s92
    %s109 = sphi 0, %s93
    %s115 = sphi 0, %s117
    %s118 = sphi 0, %s115
    %s119 = sphi 0, %s118
    %s135 = sphi 0, %s119
  $region4: #{conv_block_forward.3} parent=0 // loop_header_branch
    %14 = sbr.rel (%p12) target = $region8
  $region5: #{conv_block_forward.3} parent=0 // loop_body
    %s16 = ssub.s32 %s11, 1
    %s17 = ssub.s32 %s11, 2
    %s18 = sadd.s32 %s11, 1
    %s19 = ssub.s32 %s11, %s18
    %p20 = scmp.eq.s32.totalorder %s19, 0
    %s22 = sadd.s32 %s21, 1
    %s23 = scalar_select %p20, %s21, %s22
    %p26 = pneg %p20
    %p27 = scmp.eq.s32.totalorder %s11, 1
    %p28 = por %p26, %p27
    %p29 = scmp.ne.s32.totalorder %s21, %s24
    %p30 = scmp.eq.s32.totalorder %s11, 0
    %p31 = por %p29, %p30
    %p32 = scmp.ne.s32.totalorder %s21, %s24
    %p33 = scmp.eq.s32.totalorder %s16, 1
    %p34 = por %p32, %p33
    %p35 = scmp.ne.s32.totalorder %s24, %s25
    %p36 = scmp.eq.s32.totalorder %s16, 0
    %p37 = por %p35, %p36
    %p38 = scmp.ne.s32.totalorder %s24, %s25
    %p39 = scmp.eq.s32.totalorder %s17, 1
    %p40 = por %p38, %p39
    %p42 = scmp.ne.s32.totalorder %s25, %s41
    %p43 = scmp.eq.s32.totalorder %s17, 0
    %p44 = por %p42, %p43
    %s46 = sadd.s32 %s45, 1
    %p49 = scmp.eq.s32.totalorder %s11, 1
    %p50 = scmp.ne.s32.totalorder %s45, %s47
    %p51 = scmp.eq.s32.totalorder %s11, 0
    %p52 = por %p50, %p51
    %p53 = scmp.ne.s32.totalorder %s45, %s47
    %p54 = scmp.eq.s32.totalorder %s16, 1
    %p55 = por %p53, %p54
    %p56 = scmp.ne.s32.totalorder %s47, %s48
    %p57 = scmp.eq.s32.totalorder %s16, 0
    %p58 = por %p56, %p57
    %p59 = scmp.ne.s32.totalorder %s47, %s48
    %p60 = scmp.eq.s32.totalorder %s17, 1
    %p61 = por %p59, %p60
    %p63 = scmp.ne.s32.totalorder %s48, %s62
    %p64 = scmp.eq.s32.totalorder %s17, 0
    %p65 = por %p63, %p64
    %s67 = sadd.s32 %s66, 1
    %p70 = scmp.eq.s32.totalorder %s11, 1
    %p71 = scmp.ne.s32.totalorder %s66, %s68
    %p72 = scmp.eq.s32.totalorder %s11, 0
    %p73 = por %p71, %p72
    %p74 = scmp.ne.s32.totalorder %s66, %s68
    %p75 = scmp.eq.s32.totalorder %s16, 1
    %p76 = por %p74, %p75
    %p77 = scmp.ne.s32.totalorder %s68, %s69
    %p78 = scmp.eq.s32.totalorder %s16, 0
    %p79 = por %p77, %p78
    %p80 = scmp.ne.s32.totalorder %s68, %s69
    %p81 = scmp.eq.s32.totalorder %s17, 1
    %p82 = por %p80, %p81
    %p84 = scmp.ne.s32.totalorder %s69, %s83
    %p85 = scmp.eq.s32.totalorder %s17, 0
    %p86 = por %p84, %p85
    %s87 = ssub.s32 %s11, %s18
    %p88 = scmp.eq.s32.totalorder %s87, 0
    %s90 = sadd.s32 %s89, 1
    %s91 = scalar_select %p88, %s89, %s90
    %p94 = pneg %p88
    %p95 = scmp.eq.s32.totalorder %s11, 1
    %p96 = por %p94, %p95
    %p97 = scmp.ne.s32.totalorder %s89, %s92
    %p98 = scmp.eq.s32.totalorder %s11, 0
    %p99 = por %p97, %p98
    %p100 = scmp.ne.s32.totalorder %s89, %s92
    %p101 = scmp.eq.s32.totalorder %s16, 1
    %p102 = por %p100, %p101
    %p103 = scmp.ne.s32.totalorder %s92, %s93
    %p104 = scmp.eq.s32.totalorder %s16, 0
    %p105 = por %p103, %p104
    %p106 = scmp.ne.s32.totalorder %s92, %s93
    %p107 = scmp.eq.s32.totalorder %s17, 1
    %p108 = por %p106, %p107
    %p110 = scmp.ne.s32.totalorder %s93, %s109
    %p111 = scmp.eq.s32.totalorder %s17, 0
    %p112 = por %p110, %p111
    %s113 = ssub.s32 %s11, %s18
    %p114 = scmp.eq.s32.totalorder %s113, 0
    %s116 = sadd.s32 %s115, 1
    %s117 = scalar_select %p114, %s115, %s116
    %p120 = pneg %p114
    %p121 = scmp.eq.s32.totalorder %s11, 1
    %p122 = por %p120, %p121
    %p123 = scmp.ne.s32.totalorder %s115, %s118
    %p124 = scmp.eq.s32.totalorder %s11, 0
    %p125 = por %p123, %p124
    %p126 = scmp.ne.s32.totalorder %s115, %s118
    %p127 = scmp.eq.s32.totalorder %s16, 1
    %p128 = por %p126, %p127
    %p129 = scmp.ne.s32.totalorder %s118, %s119
    %p130 = scmp.eq.s32.totalorder %s16, 0
    %p131 = por %p129, %p130
    %p132 = scmp.ne.s32.totalorder %s118, %s119
    %p133 = scmp.eq.s32.totalorder %s17, 1
    %p134 = por %p132, %p133
    %p136 = scmp.ne.s32.totalorder %s119, %s135
    %p137 = scmp.eq.s32.totalorder %s17, 0
    %p138 = por %p136, %p137
    %p139 = scmp.le.s32.totalorder 1, %s11
    %p140 = scmp.lt.s32.totalorder %s11, 3
    %p141 = pnand %p139, %p140
    %p142 = pneg %p141
    // Predicated region
    $region9: #{conv_block_forward.3} parent=5 // pred_check
      _
    $region10: #{conv_block_forward.3} parent=5 // pred_check_branch
      %144 = sbr.rel (%p141) target = $region12
    $region11: #{conv_block_forward.3} parent=5 // pred_region
      %s145 = ssub.s32 %s11, 1
      // Predicated region
      $region13: #{conv_block_forward.3} parent=11 // pred_check
        %p146 = pneg %p58
      $region14: #{conv_block_forward.3} parent=11 // pred_check_branch
        %148 = sbr.rel (%p146) target = $region16
      $region15: #{conv_block_forward.3} parent=11 // pred_region
        _
      $region16: #{conv_block_forward.3} parent=11 // pred_fallthru
        _
      // Predicated region
      $region17: #{conv_block_forward.3} parent=11 // pred_check
        %p149 = pneg %p79
      $region18: #{conv_block_forward.3} parent=11 // pred_check_branch
        %151 = sbr.rel (%p149) target = $region20
      $region19: #{conv_block_forward.3} parent=11 // pred_region
        _
      $region20: #{conv_block_forward.3} parent=11 // pred_fallthru
        _
    $region12: #{conv_block_forward.3} parent=5 // pred_fallthru
      _
    %p152 = scmp.lt.s32.totalorder %s11, 2
    // Predicated region
    $region21: #{conv_block_forward.3} parent=5 // pred_check
      %p153 = pneg %p152
    $region22: #{conv_block_forward.3} parent=5 // pred_check_branch
      %155 = sbr.rel (%p153) target = $region24
    $region23: #{conv_block_forward.3} parent=5 // pred_region
      // Predicated region
      $region25: #{conv_block_forward.3} parent=23 // pred_check
        %p156 = pneg %p31
      $region26: #{conv_block_forward.3} parent=23 // pred_check_branch
        %158 = sbr.rel (%p156) target = $region28
      $region27: #{conv_block_forward.3} parent=23 // pred_region
        %p159 = scmp.lt.s32.totalorder %s11, 1
        %s160 = scalar_select %p159, %s11, 1
        %s161 = smul.addr %s160, 8
        %s162 = smul.addr %s161, 8
        %s163 = scalar_lea.vmem %s0, %s162
      $region28: #{conv_block_forward.3} parent=23 // pred_fallthru
        _
    $region24: #{conv_block_forward.3} parent=5 // pred_fallthru
      _
    %p164 = scmp.le.s32.totalorder 1, %s11
    %p165 = scmp.lt.s32.totalorder %s11, 3
    %p166 = pnand %p164, %p165
    %p167 = pneg %p166
    // Predicated region
    $region29: #{conv_block_forward.3} parent=5 // pred_check
      _
    $region30: #{conv_block_forward.3} parent=5 // pred_check_branch
      %169 = sbr.rel (%p166) target = $region32
    $region31: #{conv_block_forward.3} parent=5 // pred_region
      %s170 = ssub.s32 %s11, 1
      %p171 = scmp.lt.s32.totalorder %s16, 1
      %s172 = scalar_select %p171, %s16, 1
      %s173 = smul.addr %s172, 8
      %s174 = smul.addr %s173, 8
      %s175 = scalar_lea.vmem %s0, %s174
      %p176 = pneg %p37
      %p177 = pneg %p34
      %p178 = pneg %p58
      %p179 = pneg %p55
      %p180 = pneg %p79
      %p181 = pneg %p76
      %p182 = pneg %p105
      %p183 = pneg %p102
      %s184 = smul.u32 8, %s16
      %p185 = scmp.lt.s32.totalorder %s184, 15
      %s186 = scalar_select %p185, %s184, 15
      %s187 = smul.addr %s186, 4
      %s188 = scalar_lea.vmem %s3, %s187
      %p189 = pneg %p131
      %p190 = pneg %p128
      %p191 = scmp.lt.s32.totalorder %s16, 1
      %s192 = scalar_select %p191, %s16, 1
      %s193 = smul.addr %s192, 8
      %s194 = scalar_lea.vmem %s4, %s193
      %p195 = scmp.lt.s32.totalorder %s16, 1
      %s196 = scalar_select %p195, %s16, 1
      %s197 = smul.addr %s196, 8
      %s198 = smul.addr %s197, 8
      %s199 = scalar_lea.vmem %s0, %s198
      %s200 = smul.u32 8, %s16
      %p201 = scmp.lt.s32.totalorder %s200, 15
      %s202 = scalar_select %p201, %s200, 15
      %s203 = smul.addr %s202, 4
      %s204 = scalar_lea.vmem %s3, %s203
      %s205 = smul.u32 8, %s16
      %p206 = scmp.lt.s32.totalorder %s16, 1
      %s207 = scalar_select %p206, %s16, 1
      %s208 = smul.addr %s207, 8
      %s209 = scalar_lea.vmem %s4, %s208
      %210 = vst [vmem:[#allocation2] sm:$0xff] 0.0
      %211 = vst [vmem:[#allocation2 + $0x8] sm:$0xff] 0.0
      %212 = vst [vmem:[#allocation2 + $0x10] sm:$0x1] 0.0
      %213 = vst [vmem:[#allocation2 + $0x18] sm:$0xff] 0.0
      %214 = vst [vmem:[#allocation2 + $0x20] sm:$0xff] 0.0
      %215 = vst [vmem:[#allocation2 + $0x28] sm:$0x1] 0.0
      %216 = vst [vmem:[#allocation2 + $0x30] sm:$0xff] 0.0
      %217 = vst [vmem:[#allocation2 + $0x38] sm:$0xff] 0.0
      %218 = vst [vmem:[#allocation2 + $0x40] sm:$0x1] 0.0
      %219 = vst [vmem:[#allocation2 + $0x48] sm:$0xff] 0.0
      %220 = vst [vmem:[#allocation2 + $0x50] sm:$0xff] 0.0
      %221 = vst [vmem:[#allocation2 + $0x58] sm:$0x1] 0.0
      %222 = vst [vmem:[#allocation2 + $0x60] sm:$0xff] 0.0
      %223 = vst [vmem:[#allocation2 + $0x68] sm:$0xff] 0.0
      %224 = vst [vmem:[#allocation2 + $0x70] sm:$0x1] 0.0
      %225 = vst [vmem:[#allocation2 + $0x78] sm:$0xff] 0.0
      %226 = vst [vmem:[#allocation2 + $0x80] sm:$0xff] 0.0
      %227 = vst [vmem:[#allocation2 + $0x88] sm:$0x1] 0.0
      %228 = vst [vmem:[#allocation2 + $0x90] sm:$0xff] 0.0
      %229 = vst [vmem:[#allocation2 + $0x98] sm:$0xff] 0.0
      %230 = vst [vmem:[#allocation2 + $0xa0] sm:$0x1] 0.0
      %231 = vst [vmem:[#allocation2 + $0xa8] sm:$0xff] 0.0
      %232 = vst [vmem:[#allocation2 + $0xb0] sm:$0xff] 0.0
      %233 = vst [vmem:[#allocation2 + $0xb8] sm:$0x1] 0.0
      %234 = vst [vmem:[#allocation2 + $0xc0] sm:$0xff] 0.0
      %235 = vst [vmem:[#allocation2 + $0xc8] sm:$0xff] 0.0
      %236 = vst [vmem:[#allocation2 + $0xd0] sm:$0x1] 0.0
      %237 = vst [vmem:[#allocation2 + $0xd8] sm:$0xff] 0.0
      %238 = vst [vmem:[#allocation2 + $0xe0] sm:$0xff] 0.0
      %239 = vst [vmem:[#allocation2 + $0xe8] sm:$0x1] 0.0
      %240 = vst [vmem:[#allocation2 + $0xf0] sm:$0xff] 0.0
      %241 = vst [vmem:[#allocation2 + $0xf8] sm:$0xff] 0.0
      %242 = vst [vmem:[#allocation2 + $0x100] sm:$0x1] 0.0
      %v243 = vld [vmem:[%s199] sm:$0xff]
      %v244 = vld [vmem:[%s199 + $0x8] sm:$0xff]
      %v245 = vld [vmem:[%s199 + $0x10] sm:$0xff]
      %v246 = vld [vmem:[%s199 + $0x18] sm:$0xff]
      %v247 = vld [vmem:[%s199 + $0x20] sm:$0xff]
      %v248 = vld [vmem:[%s199 + $0x28] sm:$0xff]
      %v249 = vld [vmem:[%s199 + $0x30] sm:$0xff]
      %v250 = vld [vmem:[%s199 + $0x38] sm:$0xff]
      %s251 = scalar_lea.vmem [#allocation2], 48
      %252 = vst [vmem:[%s251 + $0x8] sm:$0xff] %v243
      %253 = vst [vmem:[%s251 + $0x20] sm:$0xff] %v244
      %254 = vst [vmem:[%s251 + $0x38] sm:$0xff] %v245
      %255 = vst [vmem:[%s251 + $0x50] sm:$0xff] %v246
      %256 = vst [vmem:[%s251 + $0x68] sm:$0xff] %v247
      %257 = vst [vmem:[%s251 + $0x80] sm:$0xff] %v248
      %258 = vst [vmem:[%s251 + $0x98] sm:$0xff] %v249
      %259 = vst [vmem:[%s251 + $0xb0] sm:$0xff] %v250
      %260 = vst [vmem:[#allocation3] sm:$0xff] 0.0
      %261 = vst [vmem:[#allocation3 + $0x8] sm:$0xff] 0.0
      %262 = vst [vmem:[#allocation3 + $0x10] sm:$0xff] 0.0
      %263 = vst [vmem:[#allocation3 + $0x18] sm:$0xff] 0.0
      %264 = vst [vmem:[#allocation3 + $0x20] sm:$0xff] 0.0
      %265 = vst [vmem:[#allocation3 + $0x28] sm:$0xff] 0.0
      %266 = vst [vmem:[#allocation3 + $0x30] sm:$0xff] 0.0
      %267 = vst [vmem:[#allocation3 + $0x38] sm:$0xff] 0.0
      %v268 = vld [vmem:[#allocation2 + $0x6] sm:$0xff]
      %v269 = vld [vmem:[#allocation2 + $0x1e] sm:$0xff]
      %v270 = vld [vmem:[#allocation2 + $0x36] sm:$0xff]
      %v271 = vld [vmem:[#allocation2 + $0x4e] sm:$0xff]
      %v272 = vld [vmem:[#allocation2 + $0x66] sm:$0xff]
      %v273 = vld [vmem:[#allocation2 + $0x7e] sm:$0xff]
      %v274 = vld [vmem:[#allocation2 + $0x96] sm:$0xff]
      %v275 = vld [vmem:[#allocation2 + $0xae] sm:$0xff]
      %v276 = vpack.c.bf16 %v269, %v268
      %v277 = vpack.c.bf16 %v271, %v270
      %v278 = vpack.c.bf16 %v273, %v272
      %v279 = vpack.c.bf16 %v275, %v274
      %v280 = vld [vmem:[#allocation3] sm:$0xff]
      %v281 = vld [vmem:[#allocation3 + $0x8] sm:$0xff]
      %v282 = vld [vmem:[#allocation3 + $0x10] sm:$0xff]
      %v283 = vld [vmem:[#allocation3 + $0x18] sm:$0xff]
      %v284 = vld [vmem:[#allocation3 + $0x20] sm:$0xff]
      %v285 = vld [vmem:[#allocation3 + $0x28] sm:$0xff]
      %v286 = vld [vmem:[#allocation3 + $0x30] sm:$0xff]
      %v287 = vld [vmem:[#allocation3 + $0x38] sm:$0xff]
      %v288 = vld [vmem:[%s1] sm:$0xf]
      %v289 = vld [vmem:[%s1 + $0x4] sm:$0xf]
      %v290 = vld [vmem:[%s1 + $0x8] sm:$0xf]
      %v291 = vld [vmem:[%s1 + $0xc] sm:$0xf]
      %v292 = vld [vmem:[%s1 + $0x10] sm:$0xf]
      %v293 = vld [vmem:[%s1 + $0x14] sm:$0xf]
      %v294 = vld [vmem:[%s1 + $0x18] sm:$0xf]
      %v295 = vld [vmem:[%s1 + $0x1c] sm:$0xf]
      %v296 = vld [vmem:[%s1 + $0x20] sm:$0xf]
      %v297 = vld [vmem:[%s1 + $0x24] sm:$0xf]
      %v298 = vld [vmem:[%s1 + $0x28] sm:$0xf]
      %v299 = vld [vmem:[%s1 + $0x2c] sm:$0xf]
      %v300 = vld [vmem:[%s1 + $0x30] sm:$0xf]
      %v301 = vld [vmem:[%s1 + $0x34] sm:$0xf]
      %v302 = vld [vmem:[%s1 + $0x38] sm:$0xf]
      %v303 = vld [vmem:[%s1 + $0x3c] sm:$0xf]
      %v320 = vunpack.c.l.b16 %v288
      %v321 = vunpack.c.l.b16 %v289
      %v322 = vunpack.c.l.b16 %v290
      %v323 = vunpack.c.l.b16 %v291
      %v324 = vunpack.c.l.b16 %v292
      %v325 = vunpack.c.l.b16 %v293
      %v326 = vunpack.c.l.b16 %v294
      %v327 = vunpack.c.l.b16 %v295
      %v328 = vunpack.c.l.b16 %v296
      %v329 = vunpack.c.l.b16 %v297
      %v330 = vunpack.c.l.b16 %v298
      %v331 = vunpack.c.l.b16 %v299
      %v332 = vunpack.c.l.b16 %v300
      %v333 = vunpack.c.l.b16 %v301
      %v334 = vunpack.c.l.b16 %v302
      %v335 = vunpack.c.l.b16 %v303
      %v336 = vpack.c.b16 %v321, %v320
      %v337 = vpack.c.b16 %v323, %v322
      %v338 = vpack.c.b16 %v325, %v324
      %v339 = vpack.c.b16 %v327, %v326
      %v340 = vpack.c.b16 %v329, %v328
      %v341 = vpack.c.b16 %v331, %v330
      %v342 = vpack.c.b16 %v333, %v332
      %v343 = vpack.c.b16 %v335, %v334
      %352 = vmatpush.bf16.msra.mxu0 %v343
      %353 = vmatpush.bf16.msra.mxu0 %v342
      %354 = vmatpush.bf16.msra.mxu0 %v341
      %355 = vmatpush.bf16.msra.mxu0 %v340
      %356 = vmatpush.bf16.msra.mxu0 %v339
      %357 = vmatpush.bf16.msra.mxu0 %v338
      %358 = vmatpush.bf16.msra.mxu0 %v337
      %359 = vmatpush.bf16.msra.mxu0 %v336
      %360 = vmatmul.bf16.gmra.mxu0 %v276
      %v361 = vpop.f32.mrf.mxu0
      %v362 = vadd.f32 0.0, %v361
      %v363 = vpop.f32.mrf.mxu0
      %v364 = vadd.f32 0.0, %v363
      %365 = vmatmul.bf16.gmra.mxu0 %v277
      %v366 = vpop.f32.mrf.mxu0
      %v367 = vadd.f32 0.0, %v366
      %v368 = vpop.f32.mrf.mxu0
      %v369 = vadd.f32 0.0, %v368
      %370 = vmatmul.bf16.gmra.mxu0 %v278
      %v371 = vpop.f32.mrf.mxu0
      %v372 = vadd.f32 0.0, %v371
      %v373 = vpop.f32.mrf.mxu0
      %v374 = vadd.f32 0.0, %v373
      %375 = vmatmul.bf16.gmra.mxu0 %v279
      %v376 = vpop.f32.mrf.mxu0
      %v377 = vadd.f32 0.0, %v376
      %v378 = vpop.f32.mrf.mxu0
      %v379 = vadd.f32 0.0, %v378
      %380 = vdwg.mxu0
      %v381 = vadd.f32 %v280, %v362
      %v382 = vadd.f32 %v281, %v364
      %v383 = vadd.f32 %v282, %v367
      %v384 = vadd.f32 %v283, %v369
      %v385 = vadd.f32 %v284, %v372
      %v386 = vadd.f32 %v285, %v374
      %v387 = vadd.f32 %v286, %v377
      %v388 = vadd.f32 %v287, %v379
      %389 = vst [vmem:[#allocation3] sm:$0xff] %v381
      %390 = vst [vmem:[#allocation3 + $0x8] sm:$0xff] %v382
      %391 = vst [vmem:[#allocation3 + $0x10] sm:$0xff] %v383
      %392 = vst [vmem:[#allocation3 + $0x18] sm:$0xff] %v384
      %393 = vst [vmem:[#allocation3 + $0x20] sm:$0xff] %v385
      %394 = vst [vmem:[#allocation3 + $0x28] sm:$0xff] %v386
      %395 = vst [vmem:[#allocation3 + $0x30] sm:$0xff] %v387
      %396 = vst [vmem:[#allocation3 + $0x38] sm:$0xff] %v388
      %v397 = vld [vmem:[#allocation2 + $0x7] sm:$0xff]
      %v398 = vld [vmem:[#allocation2 + $0x1f] sm:$0xff]
      %v399 = vld [vmem:[#allocation2 + $0x37] sm:$0xff]
      %v400 = vld [vmem:[#allocation2 + $0x4f] sm:$0xff]
      %v401 = vld [vmem:[#allocation2 + $0x67] sm:$0xff]
      %v402 = vld [vmem:[#allocation2 + $0x7f] sm:$0xff]
      %v403 = vld [vmem:[#allocation2 + $0x97] sm:$0xff]
      %v404 = vld [vmem:[#allocation2 + $0xaf] sm:$0xff]
      %v405 = vpack.c.bf16 %v398, %v397
      %v406 = vpack.c.bf16 %v400, %v399
      %v407 = vpack.c.bf16 %v402, %v401
      %v408 = vpack.c.bf16 %v404, %v403
      %v409 = vld [vmem:[#allocation3] sm:$0xff]
      %v410 = vld [vmem:[#allocation3 + $0x8] sm:$0xff]
      %v411 = vld [vmem:[#allocation3 + $0x10] sm:$0xff]
      %v412 = vld [vmem:[#allocation3 + $0x18] sm:$0xff]
      %v413 = vld [vmem:[#allocation3 + $0x20] sm:$0xff]
      %v414 = vld [vmem:[#allocation3 + $0x28] sm:$0xff]
      %v415 = vld [vmem:[#allocation3 + $0x30] sm:$0xff]
      %v416 = vld [vmem:[#allocation3 + $0x38] sm:$0xff]
      %s417 = scalar_lea.vmem %s1, 64
      %v418 = vld [vmem:[%s417] sm:$0xf]
      %v419 = vld [vmem:[%s417 + $0x4] sm:$0xf]
      %v420 = vld [vmem:[%s417 + $0x8] sm:$0xf]
      %v421 = vld [vmem:[%s417 + $0xc] sm:$0xf]
      %v422 = vld [vmem:[%s417 + $0x10] sm:$0xf]
      %v423 = vld [vmem:[%s417 + $0x14] sm:$0xf]
      %v424 = vld [vmem:[%s417 + $0x18] sm:$0xf]
      %v425 = vld [vmem:[%s417 + $0x1c] sm:$0xf]
      %v426 = vld [vmem:[%s417 + $0x20] sm:$0xf]
      %v427 = vld [vmem:[%s417 + $0x24] sm:$0xf]
      %v428 = vld [vmem:[%s417 + $0x28] sm:$0xf]
      %v429 = vld [vmem:[%s417 + $0x2c] sm:$0xf]
      %v430 = vld [vmem:[%s417 + $0x30] sm:$0xf]
      %v431 = vld [vmem:[%s417 + $0x34] sm:$0xf]
      %v432 = vld [vmem:[%s417 + $0x38] sm:$0xf]
      %v433 = vld [vmem:[%s417 + $0x3c] sm:$0xf]
      %v450 = vunpack.c.l.b16 %v418
      %v451 = vunpack.c.l.b16 %v419
      %v452 = vunpack.c.l.b16 %v420
      %v453 = vunpack.c.l.b16 %v421
      %v454 = vunpack.c.l.b16 %v422
      %v455 = vunpack.c.l.b16 %v423
      %v456 = vunpack.c.l.b16 %v424
      %v457 = vunpack.c.l.b16 %v425
      %v458 = vunpack.c.l.b16 %v426
      %v459 = vunpack.c.l.b16 %v427
      %v460 = vunpack.c.l.b16 %v428
      %v461 = vunpack.c.l.b16 %v429
      %v462 = vunpack.c.l.b16 %v430
      %v463 = vunpack.c.l.b16 %v431
      %v464 = vunpack.c.l.b16 %v432
      %v465 = vunpack.c.l.b16 %v433
      %v466 = vpack.c.b16 %v451, %v450
      %v467 = vpack.c.b16 %v453, %v452
      %v468 = vpack.c.b16 %v455, %v454
      %v469 = vpack.c.b16 %v457, %v456
      %v470 = vpack.c.b16 %v459, %v458
      %v471 = vpack.c.b16 %v461, %v460
      %v472 = vpack.c.b16 %v463, %v462
      %v473 = vpack.c.b16 %v465, %v464
      %482 = vmatpush.bf16.msra.mxu0 %v473
      %483 = vmatpush.bf16.msra.mxu0 %v472
      %484 = vmatpush.bf16.msra.mxu0 %v471
      %485 = vmatpush.bf16.msra.mxu0 %v470
      %486 = vmatpush.bf16.msra.mxu0 %v469
      %487 = vmatpush.bf16.msra.mxu0 %v468
      %488 = vmatpush.bf16.msra.mxu0 %v467
      %489 = vmatpush.bf16.msra.mxu0 %v466
      %490 = vmatmul.bf16.gmra.mxu0 %v405
      %v491 = vpop.f32.mrf.mxu0
      %v492 = vadd.f32 0.0, %v491
      %v493 = vpop.f32.mrf.mxu0
      %v494 = vadd.f32 0.0, %v493
      %495 = vmatmul.bf16.gmra.mxu0 %v406
      %v496 = vpop.f32.mrf.mxu0
      %v497 = vadd.f32 0.0, %v496
      %v498 = vpop.f32.mrf.mxu0
      %v499 = vadd.f32 0.0, %v498
      %500 = vmatmul.bf16.gmra.mxu0 %v407
      %v501 = vpop.f32.mrf.mxu0
      %v502 = vadd.f32 0.0, %v501
      %v503 = vpop.f32.mrf.mxu0
      %v504 = vadd.f32 0.0, %v503
      %505 = vmatmul.bf16.gmra.mxu0 %v408
      %v506 = vpop.f32.mrf.mxu0
      %v507 = vadd.f32 0.0, %v506
      %v508 = vpop.f32.mrf.mxu0
      %v509 = vadd.f32 0.0, %v508
      %510 = vdwg.mxu0
      %v511 = vadd.f32 %v409, %v492
      %v512 = vadd.f32 %v410, %v494
      %v513 = vadd.f32 %v411, %v497
      %v514 = vadd.f32 %v412, %v499
      %v515 = vadd.f32 %v413, %v502
      %v516 = vadd.f32 %v414, %v504
      %v517 = vadd.f32 %v415, %v507
      %v518 = vadd.f32 %v416, %v509
      %519 = vst [vmem:[#allocation3] sm:$0xff] %v511
      %520 = vst [vmem:[#allocation3 + $0x8] sm:$0xff] %v512
      %521 = vst [vmem:[#allocation3 + $0x10] sm:$0xff] %v513
      %522 = vst [vmem:[#allocation3 + $0x18] sm:$0xff] %v514
      %523 = vst [vmem:[#allocation3 + $0x20] sm:$0xff] %v515
      %524 = vst [vmem:[#allocation3 + $0x28] sm:$0xff] %v516
      %525 = vst [vmem:[#allocation3 + $0x30] sm:$0xff] %v517
      %526 = vst [vmem:[#allocation3 + $0x38] sm:$0xff] %v518
      %v527 = vld [vmem:[#allocation2 + $0x8] sm:$0xff]
      %v528 = vld [vmem:[#allocation2 + $0x20] sm:$0xff]
      %v529 = vld [vmem:[#allocation2 + $0x38] sm:$0xff]
      %v530 = vld [vmem:[#allocation2 + $0x50] sm:$0xff]
      %v531 = vld [vmem:[#allocation2 + $0x68] sm:$0xff]
      %v532 = vld [vmem:[#allocation2 + $0x80] sm:$0xff]
      %v533 = vld [vmem:[#allocation2 + $0x98] sm:$0xff]
      %v534 = vld [vmem:[#allocation2 + $0xb0] sm:$0xff]
      %v535 = vpack.c.bf16 %v528, %v527
      %v536 = vpack.c.bf16 %v530, %v529
      %v537 = vpack.c.bf16 %v532, %v531
      %v538 = vpack.c.bf16 %v534, %v533
      %v539 = vld [vmem:[#allocation3] sm:$0xff]
      %v540 = vld [vmem:[#allocation3 + $0x8] sm:$0xff]
      %v541 = vld [vmem:[#allocation3 + $0x10] sm:$0xff]
      %v542 = vld [vmem:[#allocation3 + $0x18] sm:$0xff]
      %v543 = vld [vmem:[#allocation3 + $0x20] sm:$0xff]
      %v544 = vld [vmem:[#allocation3 + $0x28] sm:$0xff]
      %v545 = vld [vmem:[#allocation3 + $0x30] sm:$0xff]
      %v546 = vld [vmem:[#allocation3 + $0x38] sm:$0xff]
      %s547 = scalar_lea.vmem %s1, 128
      %v548 = vld [vmem:[%s547] sm:$0xf]
      %v549 = vld [vmem:[%s547 + $0x4] sm:$0xf]
      %v550 = vld [vmem:[%s547 + $0x8] sm:$0xf]
      %v551 = vld [vmem:[%s547 + $0xc] sm:$0xf]
      %v552 = vld [vmem:[%s547 + $0x10] sm:$0xf]
      %v553 = vld [vmem:[%s547 + $0x14] sm:$0xf]
      %v554 = vld [vmem:[%s547 + $0x18] sm:$0xf]
      %v555 = vld [vmem:[%s547 + $0x1c] sm:$0xf]
      %v556 = vld [vmem:[%s547 + $0x20] sm:$0xf]
      %v557 = vld [vmem:[%s547 + $0x24] sm:$0xf]
      %v558 = vld [vmem:[%s547 + $0x28] sm:$0xf]
      %v559 = vld [vmem:[%s547 + $0x2c] sm:$0xf]
      %v560 = vld [vmem:[%s547 + $0x30] sm:$0xf]
      %v561 = vld [vmem:[%s547 + $0x34] sm:$0xf]
      %v562 = vld [vmem:[%s547 + $0x38] sm:$0xf]
      %v563 = vld [vmem:[%s547 + $0x3c] sm:$0xf]
      %v580 = vunpack.c.l.b16 %v548
      %v581 = vunpack.c.l.b16 %v549
      %v582 = vunpack.c.l.b16 %v550
      %v583 = vunpack.c.l.b16 %v551
      %v584 = vunpack.c.l.b16 %v552
      %v585 = vunpack.c.l.b16 %v553
      %v586 = vunpack.c.l.b16 %v554
      %v587 = vunpack.c.l.b16 %v555
      %v588 = vunpack.c.l.b16 %v556
      %v589 = vunpack.c.l.b16 %v557
      %v590 = vunpack.c.l.b16 %v558
      %v591 = vunpack.c.l.b16 %v559
      %v592 = vunpack.c.l.b16 %v560
      %v593 = vunpack.c.l.b16 %v561
      %v594 = vunpack.c.l.b16 %v562
      %v595 = vunpack.c.l.b16 %v563
      %v596 = vpack.c.b16 %v581, %v580
      %v597 = vpack.c.b16 %v583, %v582
      %v598 = vpack.c.b16 %v585, %v584
      %v599 = vpack.c.b16 %v587, %v586
      %v600 = vpack.c.b16 %v589, %v588
      %v601 = vpack.c.b16 %v591, %v590
      %v602 = vpack.c.b16 %v593, %v592
      %v603 = vpack.c.b16 %v595, %v594
      %612 = vmatpush.bf16.msra.mxu0 %v603
      %613 = vmatpush.bf16.msra.mxu0 %v602
      %614 = vmatpush.bf16.msra.mxu0 %v601
      %615 = vmatpush.bf16.msra.mxu0 %v600
      %616 = vmatpush.bf16.msra.mxu0 %v599
      %617 = vmatpush.bf16.msra.mxu0 %v598
      %618 = vmatpush.bf16.msra.mxu0 %v597
      %619 = vmatpush.bf16.msra.mxu0 %v596
      %620 = vmatmul.bf16.gmra.mxu0 %v535
      %v621 = vpop.f32.mrf.mxu0
      %v622 = vadd.f32 0.0, %v621
      %v623 = vpop.f32.mrf.mxu0
      %v624 = vadd.f32 0.0, %v623
      %625 = vmatmul.bf16.gmra.mxu0 %v536
      %v626 = vpop.f32.mrf.mxu0
      %v627 = vadd.f32 0.0, %v626
      %v628 = vpop.f32.mrf.mxu0
      %v629 = vadd.f32 0.0, %v628
      %630 = vmatmul.bf16.gmra.mxu0 %v537
      %v631 = vpop.f32.mrf.mxu0
      %v632 = vadd.f32 0.0, %v631
      %v633 = vpop.f32.mrf.mxu0
      %v634 = vadd.f32 0.0, %v633
      %635 = vmatmul.bf16.gmra.mxu0 %v538
      %v636 = vpop.f32.mrf.mxu0
      %v637 = vadd.f32 0.0, %v636
      %v638 = vpop.f32.mrf.mxu0
      %v639 = vadd.f32 0.0, %v638
      %640 = vdwg.mxu0
      %v641 = vadd.f32 %v539, %v622
      %v642 = vadd.f32 %v540, %v624
      %v643 = vadd.f32 %v541, %v627
      %v644 = vadd.f32 %v542, %v629
      %v645 = vadd.f32 %v543, %v632
      %v646 = vadd.f32 %v544, %v634
      %v647 = vadd.f32 %v545, %v637
      %v648 = vadd.f32 %v546, %v639
      %649 = vst [vmem:[#allocation3] sm:$0xff] %v641
      %650 = vst [vmem:[#allocation3 + $0x8] sm:$0xff] %v642
      %651 = vst [vmem:[#allocation3 + $0x10] sm:$0xff] %v643
      %652 = vst [vmem:[#allocation3 + $0x18] sm:$0xff] %v644
      %653 = vst [vmem:[#allocation3 + $0x20] sm:$0xff] %v645
      %654 = vst [vmem:[#allocation3 + $0x28] sm:$0xff] %v646
      %655 = vst [vmem:[#allocation3 + $0x30] sm:$0xff] %v647
      %656 = vst [vmem:[#allocation3 + $0x38] sm:$0xff] %v648
      %v657 = vld [vmem:[#allocation2 + $0x9] sm:$0xff]
      %v658 = vld [vmem:[#allocation2 + $0x21] sm:$0xff]
      %v659 = vld [vmem:[#allocation2 + $0x39] sm:$0xff]
      %v660 = vld [vmem:[#allocation2 + $0x51] sm:$0xff]
      %v661 = vld [vmem:[#allocation2 + $0x69] sm:$0xff]
      %v662 = vld [vmem:[#allocation2 + $0x81] sm:$0xff]
      %v663 = vld [vmem:[#allocation2 + $0x99] sm:$0xff]
      %v664 = vld [vmem:[#allocation2 + $0xb1] sm:$0xff]
      %v665 = vpack.c.bf16 %v658, %v657
      %v666 = vpack.c.bf16 %v660, %v659
      %v667 = vpack.c.bf16 %v662, %v661
      %v668 = vpack.c.bf16 %v664, %v663
      %v669 = vld [vmem:[#allocation3] sm:$0xff]
      %v670 = vld [vmem:[#allocation3 + $0x8] sm:$0xff]
      %v671 = vld [vmem:[#allocation3 + $0x10] sm:$0xff]
      %v672 = vld [vmem:[#allocation3 + $0x18] sm:$0xff]
      %v673 = vld [vmem:[#allocation3 + $0x20] sm:$0xff]
      %v674 = vld [vmem:[#allocation3 + $0x28] sm:$0xff]
      %v675 = vld [vmem:[#allocation3 + $0x30] sm:$0xff]
      %v676 = vld [vmem:[#allocation3 + $0x38] sm:$0xff]
      %s677 = scalar_lea.vmem %s1, 192
      %v678 = vld [vmem:[%s677] sm:$0xf]
      %v679 = vld [vmem:[%s677 + $0x4] sm:$0xf]
      %v680 = vld [vmem:[%s677 + $0x8] sm:$0xf]
      %v681 = vld [vmem:[%s677 + $0xc] sm:$0xf]
      %v682 = vld [vmem:[%s677 + $0x10] sm:$0xf]
      %v683 = vld [vmem:[%s677 + $0x14] sm:$0xf]
      %v684 = vld [vmem:[%s677 + $0x18] sm:$0xf]
      %v685 = vld [vmem:[%s677 + $0x1c] sm:$0xf]
      %v686 = vld [vmem:[%s677 + $0x20] sm:$0xf]
      %v687 = vld [vmem:[%s677 + $0x24] sm:$0xf]
      %v688 = vld [vmem:[%s677 + $0x28] sm:$0xf]
      %v689 = vld [vmem:[%s677 + $0x2c] sm:$0xf]
      %v690 = vld [vmem:[%s677 + $0x30] sm:$0xf]
      %v691 = vld [vmem:[%s677 + $0x34] sm:$0xf]
      %v692 = vld [vmem:[%s677 + $0x38] sm:$0xf]
      %v693 = vld [vmem:[%s677 + $0x3c] sm:$0xf]
      %v710 = vunpack.c.l.b16 %v678
      %v711 = vunpack.c.l.b16 %v679
      %v712 = vunpack.c.l.b16 %v680
      %v713 = vunpack.c.l.b16 %v681
      %v714 = vunpack.c.l.b16 %v682
      %v715 = vunpack.c.l.b16 %v683
      %v716 = vunpack.c.l.b16 %v684
      %v717 = vunpack.c.l.b16 %v685
      %v718 = vunpack.c.l.b16 %v686
      %v719 = vunpack.c.l.b16 %v687
      %v720 = vunpack.c.l.b16 %v688
      %v721 = vunpack.c.l.b16 %v689
      %v722 = vunpack.c.l.b16 %v690
      %v723 = vunpack.c.l.b16 %v691
      %v724 = vunpack.c.l.b16 %v692
      %v725 = vunpack.c.l.b16 %v693
      %v726 = vpack.c.b16 %v711, %v710
      %v727 = vpack.c.b16 %v713, %v712
      %v728 = vpack.c.b16 %v715, %v714
      %v729 = vpack.c.b16 %v717, %v716
      %v730 = vpack.c.b16 %v719, %v718
      %v731 = vpack.c.b16 %v721, %v720
      %v732 = vpack.c.b16 %v723, %v722
      %v733 = vpack.c.b16 %v725, %v724
      %742 = vmatpush.bf16.msra.mxu0 %v733
      %743 = vmatpush.bf16.msra.mxu0 %v732
      %744 = vmatpush.bf16.msra.mxu0 %v731
      %745 = vmatpush.bf16.msra.mxu0 %v730
      %746 = vmatpush.bf16.msra.mxu0 %v729
      %747 = vmatpush.bf16.msra.mxu0 %v728
      %748 = vmatpush.bf16.msra.mxu0 %v727
      %749 = vmatpush.bf16.msra.mxu0 %v726
      %750 = vmatmul.bf16.gmra.mxu0 %v665
      %v751 = vpop.f32.mrf.mxu0
      %v752 = vadd.f32 0.0, %v751
      %v753 = vpop.f32.mrf.mxu0
      %v754 = vadd.f32 0.0, %v753
      %755 = vmatmul.bf16.gmra.mxu0 %v666
      %v756 = vpop.f32.mrf.mxu0
      %v757 = vadd.f32 0.0, %v756
      %v758 = vpop.f32.mrf.mxu0
      %v759 = vadd.f32 0.0, %v758
      %760 = vmatmul.bf16.gmra.mxu0 %v667
      %v761 = vpop.f32.mrf.mxu0
      %v762 = vadd.f32 0.0, %v761
      %v763 = vpop.f32.mrf.mxu0
      %v764 = vadd.f32 0.0, %v763
      %765 = vmatmul.bf16.gmra.mxu0 %v668
      %v766 = vpop.f32.mrf.mxu0
      %v767 = vadd.f32 0.0, %v766
      %v768 = vpop.f32.mrf.mxu0
      %v769 = vadd.f32 0.0, %v768
      %770 = vdwg.mxu0
      %v771 = vadd.f32 %v669, %v752
      %v772 = vadd.f32 %v670, %v754
      %v773 = vadd.f32 %v671, %v757
      %v774 = vadd.f32 %v672, %v759
      %v775 = vadd.f32 %v673, %v762
      %v776 = vadd.f32 %v674, %v764
      %v777 = vadd.f32 %v675, %v767
      %v778 = vadd.f32 %v676, %v769
      %779 = vst [vmem:[#allocation3] sm:$0xff] %v771
      %780 = vst [vmem:[#allocation3 + $0x8] sm:$0xff] %v772
      %781 = vst [vmem:[#allocation3 + $0x10] sm:$0xff] %v773
      %782 = vst [vmem:[#allocation3 + $0x18] sm:$0xff] %v774
      %783 = vst [vmem:[#allocation3 + $0x20] sm:$0xff] %v775
      %784 = vst [vmem:[#allocation3 + $0x28] sm:$0xff] %v776
      %785 = vst [vmem:[#allocation3 + $0x30] sm:$0xff] %v777
      %786 = vst [vmem:[#allocation3 + $0x38] sm:$0xff] %v778
      %s787 = scalar_lea.vmem [#allocation2], 24
      %v788 = vld [vmem:[%s787 + $0x6] sm:$0xff]
      %v789 = vld [vmem:[%s787 + $0x1e] sm:$0xff]
      %v790 = vld [vmem:[%s787 + $0x36] sm:$0xff]
      %v791 = vld [vmem:[%s787 + $0x4e] sm:$0xff]
      %v792 = vld [vmem:[%s787 + $0x66] sm:$0xff]
      %v793 = vld [vmem:[%s787 + $0x7e] sm:$0xff]
      %v794 = vld [vmem:[%s787 + $0x96] sm:$0xff]
      %v795 = vld [vmem:[%s787 + $0xae] sm:$0xff]
      %v796 = vpack.c.bf16 %v789, %v788
      %v797 = vpack.c.bf16 %v791, %v790
      %v798 = vpack.c.bf16 %v793, %v792
      %v799 = vpack.c.bf16 %v795, %v794
      %v800 = vld [vmem:[#allocation3] sm:$0xff]
      %v801 = vld [vmem:[#allocation3 + $0x8] sm:$0xff]
      %v802 = vld [vmem:[#allocation3 + $0x10] sm:$0xff]
      %v803 = vld [vmem:[#allocation3 + $0x18] sm:$0xff]
      %v804 = vld [vmem:[#allocation3 + $0x20] sm:$0xff]
      %v805 = vld [vmem:[#allocation3 + $0x28] sm:$0xff]
      %v806 = vld [vmem:[#allocation3 + $0x30] sm:$0xff]
      %v807 = vld [vmem:[#allocation3 + $0x38] sm:$0xff]
      %s808 = scalar_lea.vmem %s1, 256
      %v809 = vld [vmem:[%s808] sm:$0xf]
      %v810 = vld [vmem:[%s808 + $0x4] sm:$0xf]
      %v811 = vld [vmem:[%s808 + $0x8] sm:$0xf]
      %v812 = vld [vmem:[%s808 + $0xc] sm:$0xf]
      %v813 = vld [vmem:[%s808 + $0x10] sm:$0xf]
      %v814 = vld [vmem:[%s808 + $0x14] sm:$0xf]
      %v815 = vld [vmem:[%s808 + $0x18] sm:$0xf]
      %v816 = vld [vmem:[%s808 + $0x1c] sm:$0xf]
      %v817 = vld [vmem:[%s808 + $0x20] sm:$0xf]
      %v818 = vld [vmem:[%s808 + $0x24] sm:$0xf]
      %v819 = vld [vmem:[%s808 + $0x28] sm:$0xf]
      %v820 = vld [vmem:[%s808 + $0x2c] sm:$0xf]
      %v821 = vld [vmem:[%s808 + $0x30] sm:$0xf]
      %v822 = vld [vmem:[%s808 + $0x34] sm:$0xf]
      %v823 = vld [vmem:[%s808 + $0x38] sm:$0xf]
      %v824 = vld [vmem:[%s808 + $0x3c] sm:$0xf]
      %v841 = vunpack.c.l.b16 %v809
      %v842 = vunpack.c.l.b16 %v810
      %v843 = vunpack.c.l.b16 %v811
      %v844 = vunpack.c.l.b16 %v812
      %v845 = vunpack.c.l.b16 %v813
      %v846 = vunpack.c.l.b16 %v814
      %v847 = vunpack.c.l.b16 %v815
      %v848 = vunpack.c.l.b16 %v816
      %v849 = vunpack.c.l.b16 %v817
      %v850 = vunpack.c.l.b16 %v818
      %v851 = vunpack.c.l.b16 %v819
      %v852 = vunpack.c.l.b16 %v820
      %v853 = vunpack.c.l.b16 %v821
      %v854 = vunpack.c.l.b16 %v822
      %v855 = vunpack.c.l.b16 %v823
      %v856 = vunpack.c.l.b16 %v824
      %v857 = vpack.c.b16 %v842, %v841
      %v858 = vpack.c.b16 %v844, %v843
      %v859 = vpack.c.b16 %v846, %v845
      %v860 = vpack.c.b16 %v848, %v847
      %v861 = vpack.c.b16 %v850, %v849
      %v862 = vpack.c.b16 %v852, %v851
      %v863 = vpack.c.b16 %v854, %v853
      %v864 = vpack.c.b16 %v856, %v855
      %873 = vmatpush.bf16.msra.mxu0 %v864
      %874 = vmatpush.bf16.msra.mxu0 %v863
      %875 = vmatpush.bf16.msra.mxu0 %v862
      %876 = vmatpush.bf16.msra.mxu0 %v861
      %877 = vmatpush.bf16.msra.mxu0 %v860
      %878 = vmatpush.bf16.msra.mxu0 %v859
      %879 = vmatpush.bf16.msra.mxu0 %v858
      %880 = vmatpush.bf16.msra.mxu0 %v857
      %881 = vmatmul.bf16.gmra.mxu0 %v796
      %v882 = vpop.f32.mrf.mxu0
      %v883 = vadd.f32 0.0, %v882
      %v884 = vpop.f32.mrf.mxu0
      %v885 = vadd.f32 0.0, %v884
      %886 = vmatmul.bf16.gmra.mxu0 %v797
      %v887 = vpop.f32.mrf.mxu0
      %v888 = vadd.f32 0.0, %v887
      %v889 = vpop.f32.mrf.mxu0
      %v890 = vadd.f32 0.0, %v889
      %891 = vmatmul.bf16.gmra.mxu0 %v798
      %v892 = vpop.f32.mrf.mxu0
      %v893 = vadd.f32 0.0, %v892
      %v894 = vpop.f32.mrf.mxu0
      %v895 = vadd.f32 0.0, %v894
      %896 = vmatmul.bf16.gmra.mxu0 %v799
      %v897 = vpop.f32.mrf.mxu0
      %v898 = vadd.f32 0.0, %v897
      %v899 = vpop.f32.mrf.mxu0
      %v900 = vadd.f32 0.0, %v899
      %901 = vdwg.mxu0
      %v902 = vadd.f32 %v800, %v883
      %v903 = vadd.f32 %v801, %v885
      %v904 = vadd.f32 %v802, %v888
      %v905 = vadd.f32 %v803, %v890
      %v906 = vadd.f32 %v804, %v893
      %v907 = vadd.f32 %v805, %v895
      %v908 = vadd.f32 %v806, %v898
      %v909 = vadd.f32 %v807, %v900
      %910 = vst [vmem:[#allocation3] sm:$0xff] %v902
      %911 = vst [vmem:[#allocation3 + $0x8] sm:$0xff] %v903
      %912 = vst [vmem:[#allocation3 + $0x10] sm:$0xff] %v904
      %913 = vst [vmem:[#allocation3 + $0x18] sm:$0xff] %v905
      %914 = vst [vmem:[#allocation3 + $0x20] sm:$0xff] %v906
      %915 = vst [vmem:[#allocation3 + $0x28] sm:$0xff] %v907
      %916 = vst [vmem:[#allocation3 + $0x30] sm:$0xff] %v908
      %917 = vst [vmem:[#allocation3 + $0x38] sm:$0xff] %v909
      %v918 = vld [vmem:[%s787 + $0x7] sm:$0xff]
      %v919 = vld [vmem:[%s787 + $0x1f] sm:$0xff]
      %v920 = vld [vmem:[%s787 + $0x37] sm:$0xff]
      %v921 = vld [vmem:[%s787 + $0x4f] sm:$0xff]
      %v922 = vld [vmem:[%s787 + $0x67] sm:$0xff]
      %v923 = vld [vmem:[%s787 + $0x7f] sm:$0xff]
      %v924 = vld [vmem:[%s787 + $0x97] sm:$0xff]
      %v925 = vld [vmem:[%s787 + $0xaf] sm:$0xff]
      %v926 = vpack.c.bf16 %v919, %v918
      %v927 = vpack.c.bf16 %v921, %v920
      %v928 = vpack.c.bf16 %v923, %v922
      %v929 = vpack.c.bf16 %v925, %v924
      %v930 = vld [vmem:[#allocation3] sm:$0xff]
      %v931 = vld [vmem:[#allocation3 + $0x8] sm:$0xff]
      %v932 = vld [vmem:[#allocation3 + $0x10] sm:$0xff]
      %v933 = vld [vmem:[#allocation3 + $0x18] sm:$0xff]
      %v934 = vld [vmem:[#allocation3 + $0x20] sm:$0xff]
      %v935 = vld [vmem:[#allocation3 + $0x28] sm:$0xff]
      %v936 = vld [vmem:[#allocation3 + $0x30] sm:$0xff]
      %v937 = vld [vmem:[#allocation3 + $0x38] sm:$0xff]
      %s938 = scalar_lea.vmem %s1, 320
      %v939 = vld [vmem:[%s938] sm:$0xf]
      %v940 = vld [vmem:[%s938 + $0x4] sm:$0xf]
      %v941 = vld [vmem:[%s938 + $0x8] sm:$0xf]
      %v942 = vld [vmem:[%s938 + $0xc] sm:$0xf]
      %v943 = vld [vmem:[%s938 + $0x10] sm:$0xf]
      %v944 = vld [vmem:[%s938 + $0x14] sm:$0xf]
      %v945 = vld [vmem:[%s938 + $0x18] sm:$0xf]
      %v946 = vld [vmem:[%s938 + $0x1c] sm:$0xf]
      %v947 = vld [vmem:[%s938 + $0x20] sm:$0xf]
      %v948 = vld [vmem:[%s938 + $0x24] sm:$0xf]
      %v949 = vld [vmem:[%s938 + $0x28] sm:$0xf]
      %v950 = vld [vmem:[%s938 + $0x2c] sm:$0xf]
      %v951 = vld [vmem:[%s938 + $0x30] sm:$0xf]
      %v952 = vld [vmem:[%s938 + $0x34] sm:$0xf]
      %v953 = vld [vmem:[%s938 + $0x38] sm:$0xf]
      %v954 = vld [vmem:[%s938 + $0x3c] sm:$0xf]
      %v971 = vunpack.c.l.b16 %v939
      %v972 = vunpack.c.l.b16 %v940
      %v973 = vunpack.c.l.b16 %v941
      %v974 = vunpack.c.l.b16 %v942
      %v975 = vunpack.c.l.b16 %v943
      %v976 = vunpack.c.l.b16 %v944
      %v977 = vunpack.c.l.b16 %v945
      %v978 = vunpack.c.l.b16 %v946
      %v979 = vunpack.c.l.b16 %v947
      %v980 = vunpack.c.l.b16 %v948
      %v981 = vunpack.c.l.b16 %v949
      %v982 = vunpack.c.l.b16 %v950
      %v983 = vunpack.c.l.b16 %v951
      %v984 = vunpack.c.l.b16 %v952
      %v985 = vunpack.c.l.b16 %v953
      %v986 = vunpack.c.l.b16 %v954
      %v987 = vpack.c.b16 %v972, %v971
      %v988 = vpack.c.b16 %v974, %v973
      %v989 = vpack.c.b16 %v976, %v975
      %v990 = vpack.c.b16 %v978, %v977
      %v991 = vpack.c.b16 %v980, %v979
      %v992 = vpack.c.b16 %v982, %v981
      %v993 = vpack.c.b16 %v984, %v983
      %v994 = vpack.c.b16 %v986, %v985
      %1003 = vmatpush.bf16.msra.mxu0 %v994
      %1004 = vmatpush.bf16.msra.mxu0 %v993
      %1005 = vmatpush.bf16.msra.mxu0 %v992
      %1006 = vmatpush.bf16.msra.mxu0 %v991
      %1007 = vmatpush.bf16.msra.mxu0 %v990
      %1008 = vmatpush.bf16.msra.mxu0 %v989
      %1009 = vmatpush.bf16.msra.mxu0 %v988
      %1010 = vmatpush.bf16.msra.mxu0 %v987
      %1011 = vmatmul.bf16.gmra.mxu0 %v926
      %v1012 = vpop.f32.mrf.mxu0
      %v1013 = vadd.f32 0.0, %v1012
      %v1014 = vpop.f32.mrf.mxu0
      %v1015 = vadd.f32 0.0, %v1014
      %1016 = vmatmul.bf16.gmra.mxu0 %v927
      %v1017 = vpop.f32.mrf.mxu0
      %v1018 = vadd.f32 0.0, %v1017
      %v1019 = vpop.f32.mrf.mxu0
      %v1020 = vadd.f32 0.0, %v1019
      %1021 = vmatmul.bf16.gmra.mxu0 %v928
      %v1022 = vpop.f32.mrf.mxu0
      %v1023 = vadd.f32 0.0, %v1022
      %v1024 = vpop.f32.mrf.mxu0
      %v1025 = vadd.f32 0.0, %v1024
      %1026 = vmatmul.bf16.gmra.mxu0 %v929
      %v1027 = vpop.f32.mrf.mxu0
      %v1028 = vadd.f32 0.0, %v1027
      %v1029 = vpop.f32.mrf.mxu0
      %v1030 = vadd.f32 0.0, %v1029
      %1031 = vdwg.mxu0
      %v1032 = vadd.f32 %v930, %v1013
      %v1033 = vadd.f32 %v931, %v1015
      %v1034 = vadd.f32 %v932, %v1018
      %v1035 = vadd.f32 %v933, %v1020
      %v1036 = vadd.f32 %v934, %v1023
      %v1037 = vadd.f32 %v935, %v1025
      %v1038 = vadd.f32 %v936, %v1028
      %v1039 = vadd.f32 %v937, %v1030
      %1040 = vst [vmem:[#allocation3] sm:$0xff] %v1032
      %1041 = vst [vmem:[#allocation3 + $0x8] sm:$0xff] %v1033
      %1042 = vst [vmem:[#allocation3 + $0x10] sm:$0xff] %v1034
      %1043 = vst [vmem:[#allocation3 + $0x18] sm:$0xff] %v1035
      %1044 = vst [vmem:[#allocation3 + $0x20] sm:$0xff] %v1036
      %1045 = vst [vmem:[#allocation3 + $0x28] sm:$0xff] %v1037
      %1046 = vst [vmem:[#allocation3 + $0x30] sm:$0xff] %v1038
      %1047 = vst [vmem:[#allocation3 + $0x38] sm:$0xff] %v1039
      %v1048 = vld [vmem:[%s787 + $0x8] sm:$0xff]
      %v1049 = vld [vmem:[%s787 + $0x20] sm:$0xff]
      %v1050 = vld [vmem:[%s787 + $0x38] sm:$0xff]
      %v1051 = vld [vmem:[%s787 + $0x50] sm:$0xff]
      %v1052 = vld [vmem:[%s787 + $0x68] sm:$0xff]
      %v1053 = vld [vmem:[%s787 + $0x80] sm:$0xff]
      %v1054 = vld [vmem:[%s787 + $0x98] sm:$0xff]
      %v1055 = vld [vmem:[%s787 + $0xb0] sm:$0xff]
      %v1056 = vpack.c.bf16 %v1049, %v1048
      %v1057 = vpack.c.bf16 %v1051, %v1050
      %v1058 = vpack.c.bf16 %v1053, %v1052
      %v1059 = vpack.c.bf16 %v1055, %v1054
      %v1060 = vld [vmem:[#allocation3] sm:$0xff]
      %v1061 = vld [vmem:[#allocation3 + $0x8] sm:$0xff]
      %v1062 = vld [vmem:[#allocation3 + $0x10] sm:$0xff]
      %v1063 = vld [vmem:[#allocation3 + $0x18] sm:$0xff]
      %v1064 = vld [vmem:[#allocation3 + $0x20] sm:$0xff]
      %v1065 = vld [vmem:[#allocation3 + $0x28] sm:$0xff]
      %v1066 = vld [vmem:[#allocation3 + $0x30] sm:$0xff]
      %v1067 = vld [vmem:[#allocation3 + $0x38] sm:$0xff]
      %s1068 = scalar_lea.vmem %s1, 384
      %v1069 = vld [vmem:[%s1068] sm:$0xf]
      %v1070 = vld [vmem:[%s1068 + $0x4] sm:$0xf]
      %v1071 = vld [vmem:[%s1068 + $0x8] sm:$0xf]
      %v1072 = vld [vmem:[%s1068 + $0xc] sm:$0xf]
      %v1073 = vld [vmem:[%s1068 + $0x10] sm:$0xf]
      %v1074 = vld [vmem:[%s1068 + $0x14] sm:$0xf]
      %v1075 = vld [vmem:[%s1068 + $0x18] sm:$0xf]
      %v1076 = vld [vmem:[%s1068 + $0x1c] sm:$0xf]
      %v1077 = vld [vmem:[%s1068 + $0x20] sm:$0xf]
      %v1078 = vld [vmem:[%s1068 + $0x24] sm:$0xf]
      %v1079 = vld [vmem:[%s1068 + $0x28] sm:$0xf]
      %v1080 = vld [vmem:[%s1068 + $0x2c] sm:$0xf]
      %v1081 = vld [vmem:[%s1068 + $0x30] sm:$0xf]
      %v1082 = vld [vmem:[%s1068 + $0x34] sm:$0xf]
      %v1083 = vld [vmem:[%s1068 + $0x38] sm:$0xf]
      %v1084 = vld [vmem:[%s1068 + $0x3c] sm:$0xf]
      %v1101 = vunpack.c.l.b16 %v1069
      %v1102 = vunpack.c.l.b16 %v1070
      %v1103 = vunpack.c.l.b16 %v1071
      %v1104 = vunpack.c.l.b16 %v1072
      %v1105 = vunpack.c.l.b16 %v1073
      %v1106 = vunpack.c.l.b16 %v1074
      %v1107 = vunpack.c.l.b16 %v1075
      %v1108 = vunpack.c.l.b16 %v1076
      %v1109 = vunpack.c.l.b16 %v1077
      %v1110 = vunpack.c.l.b16 %v1078
      %v1111 = vunpack.c.l.b16 %v1079
      %v1112 = vunpack.c.l.b16 %v1080
      %v1113 = vunpack.c.l.b16 %v1081
      %v1114 = vunpack.c.l.b16 %v1082
      %v1115 = vunpack.c.l.b16 %v1083
      %v1116 = vunpack.c.l.b16 %v1084
      %v1117 = vpack.c.b16 %v1102, %v1101
      %v1118 = vpack.c.b16 %v1104, %v1103
      %v1119 = vpack.c.b16 %v1106, %v1105
      %v1120 = vpack.c.b16 %v1108, %v1107
      %v1121 = vpack.c.b16 %v1110, %v1109
      %v1122 = vpack.c.b16 %v1112, %v1111
      %v1123 = vpack.c.b16 %v1114, %v1113
      %v1124 = vpack.c.b16 %v1116, %v1115
      %1133 = vmatpush.bf16.msra.mxu0 %v1124
      %1134 = vmatpush.bf16.msra.mxu0 %v1123
      %1135 = vmatpush.bf16.msra.mxu0 %v1122
      %1136 = vmatpush.bf16.msra.mxu0 %v1121
      %1137 = vmatpush.bf16.msra.mxu0 %v1120
      %1138 = vmatpush.bf16.msra.mxu0 %v1119
      %1139 = vmatpush.bf16.msra.mxu0 %v1118
      %1140 = vmatpush.bf16.msra.mxu0 %v1117
      %1141 = vmatmul.bf16.gmra.mxu0 %v1056
      %v1142 = vpop.f32.mrf.mxu0
      %v1143 = vadd.f32 0.0, %v1142
      %v1144 = vpop.f32.mrf.mxu0
      %v1145 = vadd.f32 0.0, %v1144
      %1146 = vmatmul.bf16.gmra.mxu0 %v1057
      %v1147 = vpop.f32.mrf.mxu0
      %v1148 = vadd.f32 0.0, %v1147
      %v1149 = vpop.f32.mrf.mxu0
      %v1150 = vadd.f32 0.0, %v1149
      %1151 = vmatmul.bf16.gmra.mxu0 %v1058
      %v1152 = vpop.f32.mrf.mxu0
      %v1153 = vadd.f32 0.0, %v1152
      %v1154 = vpop.f32.mrf.mxu0
      %v1155 = vadd.f32 0.0, %v1154
      %1156 = vmatmul.bf16.gmra.mxu0 %v1059
      %v1157 = vpop.f32.mrf.mxu0
      %v1158 = vadd.f32 0.0, %v1157
      %v1159 = vpop.f32.mrf.mxu0
      %v1160 = vadd.f32 0.0, %v1159
      %1161 = vdwg.mxu0
      %v1162 = vadd.f32 %v1060, %v1143
      %v1163 = vadd.f32 %v1061, %v1145
      %v1164 = vadd.f32 %v1062, %v1148
      %v1165 = vadd.f32 %v1063, %v1150
      %v1166 = vadd.f32 %v1064, %v1153
      %v1167 = vadd.f32 %v1065, %v1155
      %v1168 = vadd.f32 %v1066, %v1158
      %v1169 = vadd.f32 %v1067, %v1160
      %1170 = vst [vmem:[#allocation3] sm:$0xff] %v1162
      %1171 = vst [vmem:[#allocation3 + $0x8] sm:$0xff] %v1163
      %1172 = vst [vmem:[#allocation3 + $0x10] sm:$0xff] %v1164
      %1173 = vst [vmem:[#allocation3 + $0x18] sm:$0xff] %v1165
      %1174 = vst [vmem:[#allocation3 + $0x20] sm:$0xff] %v1166
      %1175 = vst [vmem:[#allocation3 + $0x28] sm:$0xff] %v1167
      %1176 = vst [vmem:[#allocation3 + $0x30] sm:$0xff] %v1168
      %1177 = vst [vmem:[#allocation3 + $0x38] sm:$0xff] %v1169
      %v1178 = vld [vmem:[%s787 + $0x9] sm:$0xff]
      %v1179 = vld [vmem:[%s787 + $0x21] sm:$0xff]
      %v1180 = vld [vmem:[%s787 + $0x39] sm:$0xff]
      %v1181 = vld [vmem:[%s787 + $0x51] sm:$0xff]
      %v1182 = vld [vmem:[%s787 + $0x69] sm:$0xff]
      %v1183 = vld [vmem:[%s787 + $0x81] sm:$0xff]
      %v1184 = vld [vmem:[%s787 + $0x99] sm:$0xff]
      %v1185 = vld [vmem:[%s787 + $0xb1] sm:$0xff]
      %v1186 = vpack.c.bf16 %v1179, %v1178
      %v1187 = vpack.c.bf16 %v1181, %v1180
      %v1188 = vpack.c.bf16 %v1183, %v1182
      %v1189 = vpack.c.bf16 %v1185, %v1184
      %v1190 = vld [vmem:[#allocation3] sm:$0xff]
      %v1191 = vld [vmem:[#allocation3 + $0x8] sm:$0xff]
      %v1192 = vld [vmem:[#allocation3 + $0x10] sm:$0xff]
      %v1193 = vld [vmem:[#allocation3 + $0x18] sm:$0xff]
      %v1194 = vld [vmem:[#allocation3 + $0x20] sm:$0xff]
      %v1195 = vld [vmem:[#allocation3 + $0x28] sm:$0xff]
      %v1196 = vld [vmem:[#allocation3 + $0x30] sm:$0xff]
      %v1197 = vld [vmem:[#allocation3 + $0x38] sm:$0xff]
      %s1198 = scalar_lea.vmem %s1, 448
      %v1199 = vld [vmem:[%s1198] sm:$0xf]
      %v1200 = vld [vmem:[%s1198 + $0x4] sm:$0xf]
      %v1201 = vld [vmem:[%s1198 + $0x8] sm:$0xf]
      %v1202 = vld [vmem:[%s1198 + $0xc] sm:$0xf]
      %v1203 = vld [vmem:[%s1198 + $0x10] sm:$0xf]
      %v1204 = vld [vmem:[%s1198 + $0x14] sm:$0xf]
      %v1205 = vld [vmem:[%s1198 + $0x18] sm:$0xf]
      %v1206 = vld [vmem:[%s1198 + $0x1c] sm:$0xf]
      %v1207 = vld [vmem:[%s1198 + $0x20] sm:$0xf]
      %v1208 = vld [vmem:[%s1198 + $0x24] sm:$0xf]
      %v1209 = vld [vmem:[%s1198 + $0x28] sm:$0xf]
      %v1210 = vld [vmem:[%s1198 + $0x2c] sm:$0xf]
      %v1211 = vld [vmem:[%s1198 + $0x30] sm:$0xf]
      %v1212 = vld [vmem:[%s1198 + $0x34] sm:$0xf]
      %v1213 = vld [vmem:[%s1198 + $0x38] sm:$0xf]
      %v1214 = vld [vmem:[%s1198 + $0x3c] sm:$0xf]
      %v1231 = vunpack.c.l.b16 %v1199
      %v1232 = vunpack.c.l.b16 %v1200
      %v1233 = vunpack.c.l.b16 %v1201
      %v1234 = vunpack.c.l.b16 %v1202
      %v1235 = vunpack.c.l.b16 %v1203
      %v1236 = vunpack.c.l.b16 %v1204
      %v1237 = vunpack.c.l.b16 %v1205
      %v1238 = vunpack.c.l.b16 %v1206
      %v1239 = vunpack.c.l.b16 %v1207
      %v1240 = vunpack.c.l.b16 %v1208
      %v1241 = vunpack.c.l.b16 %v1209
      %v1242 = vunpack.c.l.b16 %v1210
      %v1243 = vunpack.c.l.b16 %v1211
      %v1244 = vunpack.c.l.b16 %v1212
      %v1245 = vunpack.c.l.b16 %v1213
      %v1246 = vunpack.c.l.b16 %v1214
      %v1247 = vpack.c.b16 %v1232, %v1231
      %v1248 = vpack.c.b16 %v1234, %v1233
      %v1249 = vpack.c.b16 %v1236, %v1235
      %v1250 = vpack.c.b16 %v1238, %v1237
      %v1251 = vpack.c.b16 %v1240, %v1239
      %v1252 = vpack.c.b16 %v1242, %v1241
      %v1253 = vpack.c.b16 %v1244, %v1243
      %v1254 = vpack.c.b16 %v1246, %v1245
      %1263 = vmatpush.bf16.msra.mxu0 %v1254
      %1264 = vmatpush.bf16.msra.mxu0 %v1253
      %1265 = vmatpush.bf16.msra.mxu0 %v1252
      %1266 = vmatpush.bf16.msra.mxu0 %v1251
      %1267 = vmatpush.bf16.msra.mxu0 %v1250
      %1268 = vmatpush.bf16.msra.mxu0 %v1249
      %1269 = vmatpush.bf16.msra.mxu0 %v1248
      %1270 = vmatpush.bf16.msra.mxu0 %v1247
      %1271 = vmatmul.bf16.gmra.mxu0 %v1186
      %v1272 = vpop.f32.mrf.mxu0
      %v1273 = vadd.f32 0.0, %v1272
      %v1274 = vpop.f32.mrf.mxu0
      %v1275 = vadd.f32 0.0, %v1274
      %1276 = vmatmul.bf16.gmra.mxu0 %v1187
      %v1277 = vpop.f32.mrf.mxu0
      %v1278 = vadd.f32 0.0, %v1277
      %v1279 = vpop.f32.mrf.mxu0
      %v1280 = vadd.f32 0.0, %v1279
      %1281 = vmatmul.bf16.gmra.mxu0 %v1188
      %v1282 = vpop.f32.mrf.mxu0
      %v1283 = vadd.f32 0.0, %v1282
      %v1284 = vpop.f32.mrf.mxu0
      %v1285 = vadd.f32 0.0, %v1284
      %1286 = vmatmul.bf16.gmra.mxu0 %v1189
      %v1287 = vpop.f32.mrf.mxu0
      %v1288 = vadd.f32 0.0, %v1287
      %v1289 = vpop.f32.mrf.mxu0
      %v1290 = vadd.f32 0.0, %v1289
      %1291 = vdwg.mxu0
      %v1292 = vadd.f32 %v1190, %v1273
      %v1293 = vadd.f32 %v1191, %v1275
      %v1294 = vadd.f32 %v1192, %v1278
      %v1295 = vadd.f32 %v1193, %v1280
      %v1296 = vadd.f32 %v1194, %v1283
      %v1297 = vadd.f32 %v1195, %v1285
      %v1298 = vadd.f32 %v1196, %v1288
      %v1299 = vadd.f32 %v1197, %v1290
      %1300 = vst [vmem:[#allocation3] sm:$0xff] %v1292
      %1301 = vst [vmem:[#allocation3 + $0x8] sm:$0xff] %v1293
      %1302 = vst [vmem:[#allocation3 + $0x10] sm:$0xff] %v1294
      %1303 = vst [vmem:[#allocation3 + $0x18] sm:$0xff] %v1295
      %1304 = vst [vmem:[#allocation3 + $0x20] sm:$0xff] %v1296
      %1305 = vst [vmem:[#allocation3 + $0x28] sm:$0xff] %v1297
      %1306 = vst [vmem:[#allocation3 + $0x30] sm:$0xff] %v1298
      %1307 = vst [vmem:[#allocation3 + $0x38] sm:$0xff] %v1299
      %v1308 = vld [vmem:[%s251 + $0x6] sm:$0xff]
      %v1309 = vld [vmem:[%s251 + $0x1e] sm:$0xff]
      %v1310 = vld [vmem:[%s251 + $0x36] sm:$0xff]
      %v1311 = vld [vmem:[%s251 + $0x4e] sm:$0xff]
      %v1312 = vld [vmem:[%s251 + $0x66] sm:$0xff]
      %v1313 = vld [vmem:[%s251 + $0x7e] sm:$0xff]
      %v1314 = vld [vmem:[%s251 + $0x96] sm:$0xff]
      %v1315 = vld [vmem:[%s251 + $0xae] sm:$0xff]
      %v1316 = vpack.c.bf16 %v1309, %v1308
      %v1317 = vpack.c.bf16 %v1311, %v1310
      %v1318 = vpack.c.bf16 %v1313, %v1312
      %v1319 = vpack.c.bf16 %v1315, %v1314
      %v1320 = vld [vmem:[#allocation3] sm:$0xff]
      %v1321 = vld [vmem:[#allocation3 + $0x8] sm:$0xff]
      %v1322 = vld [vmem:[#allocation3 + $0x10] sm:$0xff]
      %v1323 = vld [vmem:[#allocation3 + $0x18] sm:$0xff]
      %v1324 = vld [vmem:[#allocation3 + $0x20] sm:$0xff]
      %v1325 = vld [vmem:[#allocation3 + $0x28] sm:$0xff]
      %v1326 = vld [vmem:[#allocation3 + $0x30] sm:$0xff]
      %v1327 = vld [vmem:[#allocation3 + $0x38] sm:$0xff]
      %s1328 = scalar_lea.vmem %s1, 512
      %v1329 = vld [vmem:[%s1328] sm:$0xf]
      %v1330 = vld [vmem:[%s1328 + $0x4] sm:$0xf]
      %v1331 = vld [vmem:[%s1328 + $0x8] sm:$0xf]
      %v1332 = vld [vmem:[%s1328 + $0xc] sm:$0xf]
      %v1333 = vld [vmem:[%s1328 + $0x10] sm:$0xf]
      %v1334 = vld [vmem:[%s1328 + $0x14] sm:$0xf]
      %v1335 = vld [vmem:[%s1328 + $0x18] sm:$0xf]
      %v1336 = vld [vmem:[%s1328 + $0x1c] sm:$0xf]
      %v1337 = vld [vmem:[%s1328 + $0x20] sm:$0xf]
      %v1338 = vld [vmem:[%s1328 + $0x24] sm:$0xf]
      %v1339 = vld [vmem:[%s1328 + $0x28] sm:$0xf]
      %v1340 = vld [vmem:[%s1328 + $0x2c] sm:$0xf]
      %v1341 = vld [vmem:[%s1328 + $0x30] sm:$0xf]
      %v1342 = vld [vmem:[%s1328 + $0x34] sm:$0xf]
      %v1343 = vld [vmem:[%s1328 + $0x38] sm:$0xf]
      %v1344 = vld [vmem:[%s1328 + $0x3c] sm:$0xf]
      %v1361 = vunpack.c.l.b16 %v1329
      %v1362 = vunpack.c.l.b16 %v1330
      %v1363 = vunpack.c.l.b16 %v1331
      %v1364 = vunpack.c.l.b16 %v1332
      %v1365 = vunpack.c.l.b16 %v1333
      %v1366 = vunpack.c.l.b16 %v1334
      %v1367 = vunpack.c.l.b16 %v1335
      %v1368 = vunpack.c.l.b16 %v1336
      %v1369 = vunpack.c.l.b16 %v1337
      %v1370 = vunpack.c.l.b16 %v1338
      %v1371 = vunpack.c.l.b16 %v1339
      %v1372 = vunpack.c.l.b16 %v1340
      %v1373 = vunpack.c.l.b16 %v1341
      %v1374 = vunpack.c.l.b16 %v1342
      %v1375 = vunpack.c.l.b16 %v1343
      %v1376 = vunpack.c.l.b16 %v1344
      %v1377 = vpack.c.b16 %v1362, %v1361
      %v1378 = vpack.c.b16 %v1364, %v1363
      %v1379 = vpack.c.b16 %v1366, %v1365
      %v1380 = vpack.c.b16 %v1368, %v1367
      %v1381 = vpack.c.b16 %v1370, %v1369
      %v1382 = vpack.c.b16 %v1372, %v1371
      %v1383 = vpack.c.b16 %v1374, %v1373
      %v1384 = vpack.c.b16 %v1376, %v1375
      %1393 = vmatpush.bf16.msra.mxu0 %v1384
      %1394 = vmatpush.bf16.msra.mxu0 %v1383
      %1395 = vmatpush.bf16.msra.mxu0 %v1382
      %1396 = vmatpush.bf16.msra.mxu0 %v1381
      %1397 = vmatpush.bf16.msra.mxu0 %v1380
      %1398 = vmatpush.bf16.msra.mxu0 %v1379
      %1399 = vmatpush.bf16.msra.mxu0 %v1378
      %1400 = vmatpush.bf16.msra.mxu0 %v1377
      %1401 = vmatmul.bf16.gmra.mxu0 %v1316
      %v1402 = vpop.f32.mrf.mxu0
      %v1403 = vadd.f32 0.0, %v1402
      %v1404 = vpop.f32.mrf.mxu0
      %v1405 = vadd.f32 0.0, %v1404
      %1406 = vmatmul.bf16.gmra.mxu0 %v1317
      %v1407 = vpop.f32.mrf.mxu0
      %v1408 = vadd.f32 0.0, %v1407
      %v1409 = vpop.f32.mrf.mxu0
      %v1410 = vadd.f32 0.0, %v1409
      %1411 = vmatmul.bf16.gmra.mxu0 %v1318
      %v1412 = vpop.f32.mrf.mxu0
      %v1413 = vadd.f32 0.0, %v1412
      %v1414 = vpop.f32.mrf.mxu0
      %v1415 = vadd.f32 0.0, %v1414
      %1416 = vmatmul.bf16.gmra.mxu0 %v1319
      %v1417 = vpop.f32.mrf.mxu0
      %v1418 = vadd.f32 0.0, %v1417
      %v1419 = vpop.f32.mrf.mxu0
      %v1420 = vadd.f32 0.0, %v1419
      %1421 = vdwg.mxu0
      %v1422 = vadd.f32 %v1320, %v1403
      %v1423 = vadd.f32 %v1321, %v1405
      %v1424 = vadd.f32 %v1322, %v1408
      %v1425 = vadd.f32 %v1323, %v1410
      %v1426 = vadd.f32 %v1324, %v1413
      %v1427 = vadd.f32 %v1325, %v1415
      %v1428 = vadd.f32 %v1326, %v1418
      %v1429 = vadd.f32 %v1327, %v1420
      %1430 = vst [vmem:[#allocation3] sm:$0xff] %v1422
      %1431 = vst [vmem:[#allocation3 + $0x8] sm:$0xff] %v1423
      %1432 = vst [vmem:[#allocation3 + $0x10] sm:$0xff] %v1424
      %1433 = vst [vmem:[#allocation3 + $0x18] sm:$0xff] %v1425
      %1434 = vst [vmem:[#allocation3 + $0x20] sm:$0xff] %v1426
      %1435 = vst [vmem:[#allocation3 + $0x28] sm:$0xff] %v1427
      %1436 = vst [vmem:[#allocation3 + $0x30] sm:$0xff] %v1428
      %1437 = vst [vmem:[#allocation3 + $0x38] sm:$0xff] %v1429
      %v1438 = vld [vmem:[%s251 + $0x7] sm:$0xff]
      %v1439 = vld [vmem:[%s251 + $0x1f] sm:$0xff]
      %v1440 = vld [vmem:[%s251 + $0x37] sm:$0xff]
      %v1441 = vld [vmem:[%s251 + $0x4f] sm:$0xff]
      %v1442 = vld [vmem:[%s251 + $0x67] sm:$0xff]
      %v1443 = vld [vmem:[%s251 + $0x7f] sm:$0xff]
      %v1444 = vld [vmem:[%s251 + $0x97] sm:$0xff]
      %v1445 = vld [vmem:[%s251 + $0xaf] sm:$0xff]
      %v1446 = vpack.c.bf16 %v1439, %v1438
      %v1447 = vpack.c.bf16 %v1441, %v1440
      %v1448 = vpack.c.bf16 %v1443, %v1442
      %v1449 = vpack.c.bf16 %v1445, %v1444
      %v1450 = vld [vmem:[#allocation3] sm:$0xff]
      %v1451 = vld [vmem:[#allocation3 + $0x8] sm:$0xff]
      %v1452 = vld [vmem:[#allocation3 + $0x10] sm:$0xff]
      %v1453 = vld [vmem:[#allocation3 + $0x18] sm:$0xff]
      %v1454 = vld [vmem:[#allocation3 + $0x20] sm:$0xff]
      %v1455 = vld [vmem:[#allocation3 + $0x28] sm:$0xff]
      %v1456 = vld [vmem:[#allocation3 + $0x30] sm:$0xff]
      %v1457 = vld [vmem:[#allocation3 + $0x38] sm:$0xff]
      %s1458 = scalar_lea.vmem %s1, 576
      %v1459 = vld [vmem:[%s1458] sm:$0xf]
      %v1460 = vld [vmem:[%s1458 + $0x4] sm:$0xf]
      %v1461 = vld [vmem:[%s1458 + $0x8] sm:$0xf]
      %v1462 = vld [vmem:[%s1458 + $0xc] sm:$0xf]
      %v1463 = vld [vmem:[%s1458 + $0x10] sm:$0xf]
      %v1464 = vld [vmem:[%s1458 + $0x14] sm:$0xf]
      %v1465 = vld [vmem:[%s1458 + $0x18] sm:$0xf]
      %v1466 = vld [vmem:[%s1458 + $0x1c] sm:$0xf]
      %v1467 = vld [vmem:[%s1458 + $0x20] sm:$0xf]
      %v1468 = vld [vmem:[%s1458 + $0x24] sm:$0xf]
      %v1469 = vld [vmem:[%s1458 + $0x28] sm:$0xf]
      %v1470 = vld [vmem:[%s1458 + $0x2c] sm:$0xf]
      %v1471 = vld [vmem:[%s1458 + $0x30] sm:$0xf]
      %v1472 = vld [vmem:[%s1458 + $0x34] sm:$0xf]
      %v1473 = vld [vmem:[%s1458 + $0x38] sm:$0xf]
      %v1474 = vld [vmem:[%s1458 + $0x3c] sm:$0xf]
      %v1491 = vunpack.c.l.b16 %v1459
      %v1492 = vunpack.c.l.b16 %v1460
      %v1493 = vunpack.c.l.b16 %v1461
      %v1494 = vunpack.c.l.b16 %v1462
      %v1495 = vunpack.c.l.b16 %v1463
      %v1496 = vunpack.c.l.b16 %v1464
      %v1497 = vunpack.c.l.b16 %v1465
      %v1498 = vunpack.c.l.b16 %v1466
      %v1499 = vunpack.c.l.b16 %v1467
      %v1500 = vunpack.c.l.b16 %v1468
      %v1501 = vunpack.c.l.b16 %v1469
      %v1502 = vunpack.c.l.b16 %v1470
      %v1503 = vunpack.c.l.b16 %v1471
      %v1504 = vunpack.c.l.b16 %v1472
      %v1505 = vunpack.c.l.b16 %v1473
      %v1506 = vunpack.c.l.b16 %v1474
      %v1507 = vpack.c.b16 %v1492, %v1491
      %v1508 = vpack.c.b16 %v1494, %v1493
      %v1509 = vpack.c.b16 %v1496, %v1495
      %v1510 = vpack.c.b16 %v1498, %v1497
      %v1511 = vpack.c.b16 %v1500, %v1499
      %v1512 = vpack.c.b16 %v1502, %v1501
      %v1513 = vpack.c.b16 %v1504, %v1503
      %v1514 = vpack.c.b16 %v1506, %v1505
      %1523 = vmatpush.bf16.msra.mxu0 %v1514
      %1524 = vmatpush.bf16.msra.mxu0 %v1513
      %1525 = vmatpush.bf16.msra.mxu0 %v1512
      %1526 = vmatpush.bf16.msra.mxu0 %v1511
      %1527 = vmatpush.bf16.msra.mxu0 %v1510
      %1528 = vmatpush.bf16.msra.mxu0 %v1509
      %1529 = vmatpush.bf16.msra.mxu0 %v1508
      %1530 = vmatpush.bf16.msra.mxu0 %v1507
      %1531 = vmatmul.bf16.gmra.mxu0 %v1446
      %v1532 = vpop.f32.mrf.mxu0
      %v1533 = vadd.f32 0.0, %v1532
      %v1534 = vpop.f32.mrf.mxu0
      %v1535 = vadd.f32 0.0, %v1534
      %1536 = vmatmul.bf16.gmra.mxu0 %v1447
      %v1537 = vpop.f32.mrf.mxu0
      %v1538 = vadd.f32 0.0, %v1537
      %v1539 = vpop.f32.mrf.mxu0
      %v1540 = vadd.f32 0.0, %v1539
      %1541 = vmatmul.bf16.gmra.mxu0 %v1448
      %v1542 = vpop.f32.mrf.mxu0
      %v1543 = vadd.f32 0.0, %v1542
      %v1544 = vpop.f32.mrf.mxu0
      %v1545 = vadd.f32 0.0, %v1544
      %1546 = vmatmul.bf16.gmra.mxu0 %v1449
      %v1547 = vpop.f32.mrf.mxu0
      %v1548 = vadd.f32 0.0, %v1547
      %v1549 = vpop.f32.mrf.mxu0
      %v1550 = vadd.f32 0.0, %v1549
      %1551 = vdwg.mxu0
      %v1552 = vadd.f32 %v1450, %v1533
      %v1553 = vadd.f32 %v1451, %v1535
      %v1554 = vadd.f32 %v1452, %v1538
      %v1555 = vadd.f32 %v1453, %v1540
      %v1556 = vadd.f32 %v1454, %v1543
      %v1557 = vadd.f32 %v1455, %v1545
      %v1558 = vadd.f32 %v1456, %v1548
      %v1559 = vadd.f32 %v1457, %v1550
      %1560 = vst [vmem:[#allocation3] sm:$0xff] %v1552
      %1561 = vst [vmem:[#allocation3 + $0x8] sm:$0xff] %v1553
      %1562 = vst [vmem:[#allocation3 + $0x10] sm:$0xff] %v1554
      %1563 = vst [vmem:[#allocation3 + $0x18] sm:$0xff] %v1555
      %1564 = vst [vmem:[#allocation3 + $0x20] sm:$0xff] %v1556
      %1565 = vst [vmem:[#allocation3 + $0x28] sm:$0xff] %v1557
      %1566 = vst [vmem:[#allocation3 + $0x30] sm:$0xff] %v1558
      %1567 = vst [vmem:[#allocation3 + $0x38] sm:$0xff] %v1559
      %v1568 = vld [vmem:[%s251 + $0x8] sm:$0xff]
      %v1569 = vld [vmem:[%s251 + $0x20] sm:$0xff]
      %v1570 = vld [vmem:[%s251 + $0x38] sm:$0xff]
      %v1571 = vld [vmem:[%s251 + $0x50] sm:$0xff]
      %v1572 = vld [vmem:[%s251 + $0x68] sm:$0xff]
      %v1573 = vld [vmem:[%s251 + $0x80] sm:$0xff]
      %v1574 = vld [vmem:[%s251 + $0x98] sm:$0xff]
      %v1575 = vld [vmem:[%s251 + $0xb0] sm:$0xff]
      %v1576 = vpack.c.bf16 %v1569, %v1568
      %v1577 = vpack.c.bf16 %v1571, %v1570
      %v1578 = vpack.c.bf16 %v1573, %v1572
      %v1579 = vpack.c.bf16 %v1575, %v1574
      %v1580 = vld [vmem:[#allocation3] sm:$0xff]
      %v1581 = vld [vmem:[#allocation3 + $0x8] sm:$0xff]
      %v1582 = vld [vmem:[#allocation3 + $0x10] sm:$0xff]
      %v1583 = vld [vmem:[#allocation3 + $0x18] sm:$0xff]
      %v1584 = vld [vmem:[#allocation3 + $0x20] sm:$0xff]
      %v1585 = vld [vmem:[#allocation3 + $0x28] sm:$0xff]
      %v1586 = vld [vmem:[#allocation3 + $0x30] sm:$0xff]
      %v1587 = vld [vmem:[#allocation3 + $0x38] sm:$0xff]
      %s1588 = scalar_lea.vmem %s1, 640
      %v1589 = vld [vmem:[%s1588] sm:$0xf]
      %v1590 = vld [vmem:[%s1588 + $0x4] sm:$0xf]
      %v1591 = vld [vmem:[%s1588 + $0x8] sm:$0xf]
      %v1592 = vld [vmem:[%s1588 + $0xc] sm:$0xf]
      %v1593 = vld [vmem:[%s1588 + $0x10] sm:$0xf]
      %v1594 = vld [vmem:[%s1588 + $0x14] sm:$0xf]
      %v1595 = vld [vmem:[%s1588 + $0x18] sm:$0xf]
      %v1596 = vld [vmem:[%s1588 + $0x1c] sm:$0xf]
      %v1597 = vld [vmem:[%s1588 + $0x20] sm:$0xf]
      %v1598 = vld [vmem:[%s1588 + $0x24] sm:$0xf]
      %v1599 = vld [vmem:[%s1588 + $0x28] sm:$0xf]
      %v1600 = vld [vmem:[%s1588 + $0x2c] sm:$0xf]
      %v1601 = vld [vmem:[%s1588 + $0x30] sm:$0xf]
      %v1602 = vld [vmem:[%s1588 + $0x34] sm:$0xf]
      %v1603 = vld [vmem:[%s1588 + $0x38] sm:$0xf]
      %v1604 = vld [vmem:[%s1588 + $0x3c] sm:$0xf]
      %v1621 = vunpack.c.l.b16 %v1589
      %v1622 = vunpack.c.l.b16 %v1590
      %v1623 = vunpack.c.l.b16 %v1591
      %v1624 = vunpack.c.l.b16 %v1592
      %v1625 = vunpack.c.l.b16 %v1593
      %v1626 = vunpack.c.l.b16 %v1594
      %v1627 = vunpack.c.l.b16 %v1595
      %v1628 = vunpack.c.l.b16 %v1596
      %v1629 = vunpack.c.l.b16 %v1597
      %v1630 = vunpack.c.l.b16 %v1598
      %v1631 = vunpack.c.l.b16 %v1599
      %v1632 = vunpack.c.l.b16 %v1600
      %v1633 = vunpack.c.l.b16 %v1601
      %v1634 = vunpack.c.l.b16 %v1602
      %v1635 = vunpack.c.l.b16 %v1603
      %v1636 = vunpack.c.l.b16 %v1604
      %v1637 = vpack.c.b16 %v1622, %v1621
      %v1638 = vpack.c.b16 %v1624, %v1623
      %v1639 = vpack.c.b16 %v1626, %v1625
      %v1640 = vpack.c.b16 %v1628, %v1627
      %v1641 = vpack.c.b16 %v1630, %v1629
      %v1642 = vpack.c.b16 %v1632, %v1631
      %v1643 = vpack.c.b16 %v1634, %v1633
      %v1644 = vpack.c.b16 %v1636, %v1635
      %1653 = vmatpush.bf16.msra.mxu0 %v1644
      %1654 = vmatpush.bf16.msra.mxu0 %v1643
      %1655 = vmatpush.bf16.msra.mxu0 %v1642
      %1656 = vmatpush.bf16.msra.mxu0 %v1641
      %1657 = vmatpush.bf16.msra.mxu0 %v1640
      %1658 = vmatpush.bf16.msra.mxu0 %v1639
      %1659 = vmatpush.bf16.msra.mxu0 %v1638
      %1660 = vmatpush.bf16.msra.mxu0 %v1637
      %1661 = vmatmul.bf16.gmra.mxu0 %v1576
      %v1662 = vpop.f32.mrf.mxu0
      %v1663 = vadd.f32 0.0, %v1662
      %v1664 = vpop.f32.mrf.mxu0
      %v1665 = vadd.f32 0.0, %v1664
      %1666 = vmatmul.bf16.gmra.mxu0 %v1577
      %v1667 = vpop.f32.mrf.mxu0
      %v1668 = vadd.f32 0.0, %v1667
      %v1669 = vpop.f32.mrf.mxu0
      %v1670 = vadd.f32 0.0, %v1669
      %1671 = vmatmul.bf16.gmra.mxu0 %v1578
      %v1672 = vpop.f32.mrf.mxu0
      %v1673 = vadd.f32 0.0, %v1672
      %v1674 = vpop.f32.mrf.mxu0
      %v1675 = vadd.f32 0.0, %v1674
      %1676 = vmatmul.bf16.gmra.mxu0 %v1579
      %v1677 = vpop.f32.mrf.mxu0
      %v1678 = vadd.f32 0.0, %v1677
      %v1679 = vpop.f32.mrf.mxu0
      %v1680 = vadd.f32 0.0, %v1679
      %1681 = vdwg.mxu0
      %v1682 = vadd.f32 %v1580, %v1663
      %v1683 = vadd.f32 %v1581, %v1665
      %v1684 = vadd.f32 %v1582, %v1668
      %v1685 = vadd.f32 %v1583, %v1670
      %v1686 = vadd.f32 %v1584, %v1673
      %v1687 = vadd.f32 %v1585, %v1675
      %v1688 = vadd.f32 %v1586, %v1678
      %v1689 = vadd.f32 %v1587, %v1680
      %1690 = vst [vmem:[#allocation3] sm:$0xff] %v1682
      %1691 = vst [vmem:[#allocation3 + $0x8] sm:$0xff] %v1683
      %1692 = vst [vmem:[#allocation3 + $0x10] sm:$0xff] %v1684
      %1693 = vst [vmem:[#allocation3 + $0x18] sm:$0xff] %v1685
      %1694 = vst [vmem:[#allocation3 + $0x20] sm:$0xff] %v1686
      %1695 = vst [vmem:[#allocation3 + $0x28] sm:$0xff] %v1687
      %1696 = vst [vmem:[#allocation3 + $0x30] sm:$0xff] %v1688
      %1697 = vst [vmem:[#allocation3 + $0x38] sm:$0xff] %v1689
      %v1698 = vld [vmem:[%s251 + $0x9] sm:$0xff]
      %v1699 = vld [vmem:[%s251 + $0x21] sm:$0xff]
      %v1700 = vld [vmem:[%s251 + $0x39] sm:$0xff]
      %v1701 = vld [vmem:[%s251 + $0x51] sm:$0xff]
      %v1702 = vld [vmem:[%s251 + $0x69] sm:$0xff]
      %v1703 = vld [vmem:[%s251 + $0x81] sm:$0xff]
      %v1704 = vld [vmem:[%s251 + $0x99] sm:$0xff]
      %v1705 = vld [vmem:[%s251 + $0xb1] sm:$0xff]
      %v1706 = vpack.c.bf16 %v1699, %v1698
      %v1707 = vpack.c.bf16 %v1701, %v1700
      %v1708 = vpack.c.bf16 %v1703, %v1702
      %v1709 = vpack.c.bf16 %v1705, %v1704
      %v1710 = vld [vmem:[#allocation3] sm:$0xff]
      %v1711 = vld [vmem:[#allocation3 + $0x8] sm:$0xff]
      %v1712 = vld [vmem:[#allocation3 + $0x10] sm:$0xff]
      %v1713 = vld [vmem:[#allocation3 + $0x18] sm:$0xff]
      %v1714 = vld [vmem:[#allocation3 + $0x20] sm:$0xff]
      %v1715 = vld [vmem:[#allocation3 + $0x28] sm:$0xff]
      %v1716 = vld [vmem:[#allocation3 + $0x30] sm:$0xff]
      %v1717 = vld [vmem:[#allocation3 + $0x38] sm:$0xff]
      %s1718 = scalar_lea.vmem %s1, 704
      %v1719 = vld [vmem:[%s1718] sm:$0xf]
      %v1720 = vld [vmem:[%s1718 + $0x4] sm:$0xf]
      %v1721 = vld [vmem:[%s1718 + $0x8] sm:$0xf]
      %v1722 = vld [vmem:[%s1718 + $0xc] sm:$0xf]
      %v1723 = vld [vmem:[%s1718 + $0x10] sm:$0xf]
      %v1724 = vld [vmem:[%s1718 + $0x14] sm:$0xf]
      %v1725 = vld [vmem:[%s1718 + $0x18] sm:$0xf]
      %v1726 = vld [vmem:[%s1718 + $0x1c] sm:$0xf]
      %v1727 = vld [vmem:[%s1718 + $0x20] sm:$0xf]
      %v1728 = vld [vmem:[%s1718 + $0x24] sm:$0xf]
      %v1729 = vld [vmem:[%s1718 + $0x28] sm:$0xf]
      %v1730 = vld [vmem:[%s1718 + $0x2c] sm:$0xf]
      %v1731 = vld [vmem:[%s1718 + $0x30] sm:$0xf]
      %v1732 = vld [vmem:[%s1718 + $0x34] sm:$0xf]
      %v1733 = vld [vmem:[%s1718 + $0x38] sm:$0xf]
      %v1734 = vld [vmem:[%s1718 + $0x3c] sm:$0xf]
      %v1751 = vunpack.c.l.b16 %v1719
      %v1752 = vunpack.c.l.b16 %v1720
      %v1753 = vunpack.c.l.b16 %v1721
      %v1754 = vunpack.c.l.b16 %v1722
      %v1755 = vunpack.c.l.b16 %v1723
      %v1756 = vunpack.c.l.b16 %v1724
      %v1757 = vunpack.c.l.b16 %v1725
      %v1758 = vunpack.c.l.b16 %v1726
      %v1759 = vunpack.c.l.b16 %v1727
      %v1760 = vunpack.c.l.b16 %v1728
      %v1761 = vunpack.c.l.b16 %v1729
      %v1762 = vunpack.c.l.b16 %v1730
      %v1763 = vunpack.c.l.b16 %v1731
      %v1764 = vunpack.c.l.b16 %v1732
      %v1765 = vunpack.c.l.b16 %v1733
      %v1766 = vunpack.c.l.b16 %v1734
      %v1767 = vpack.c.b16 %v1752, %v1751
      %v1768 = vpack.c.b16 %v1754, %v1753
      %v1769 = vpack.c.b16 %v1756, %v1755
      %v1770 = vpack.c.b16 %v1758, %v1757
      %v1771 = vpack.c.b16 %v1760, %v1759
      %v1772 = vpack.c.b16 %v1762, %v1761
      %v1773 = vpack.c.b16 %v1764, %v1763
      %v1774 = vpack.c.b16 %v1766, %v1765
      %1783 = vmatpush.bf16.msra.mxu0 %v1774
      %1784 = vmatpush.bf16.msra.mxu0 %v1773
      %1785 = vmatpush.bf16.msra.mxu0 %v1772
      %1786 = vmatpush.bf16.msra.mxu0 %v1771
      %1787 = vmatpush.bf16.msra.mxu0 %v1770
      %1788 = vmatpush.bf16.msra.mxu0 %v1769
      %1789 = vmatpush.bf16.msra.mxu0 %v1768
      %1790 = vmatpush.bf16.msra.mxu0 %v1767
      %1791 = vmatmul.bf16.gmra.mxu0 %v1706
      %v1792 = vpop.f32.mrf.mxu0
      %v1793 = vadd.f32 0.0, %v1792
      %v1794 = vpop.f32.mrf.mxu0
      %v1795 = vadd.f32 0.0, %v1794
      %1796 = vmatmul.bf16.gmra.mxu0 %v1707
      %v1797 = vpop.f32.mrf.mxu0
      %v1798 = vadd.f32 0.0, %v1797
      %v1799 = vpop.f32.mrf.mxu0
      %v1800 = vadd.f32 0.0, %v1799
      %1801 = vmatmul.bf16.gmra.mxu0 %v1708
      %v1802 = vpop.f32.mrf.mxu0
      %v1803 = vadd.f32 0.0, %v1802
      %v1804 = vpop.f32.mrf.mxu0
      %v1805 = vadd.f32 0.0, %v1804
      %1806 = vmatmul.bf16.gmra.mxu0 %v1709
      %v1807 = vpop.f32.mrf.mxu0
      %v1808 = vadd.f32 0.0, %v1807
      %v1809 = vpop.f32.mrf.mxu0
      %v1810 = vadd.f32 0.0, %v1809
      %1811 = vdwg.mxu0
      %v1812 = vadd.f32 %v1710, %v1793
      %v1813 = vadd.f32 %v1711, %v1795
      %v1814 = vadd.f32 %v1712, %v1798
      %v1815 = vadd.f32 %v1713, %v1800
      %v1816 = vadd.f32 %v1714, %v1803
      %v1817 = vadd.f32 %v1715, %v1805
      %v1818 = vadd.f32 %v1716, %v1808
      %v1819 = vadd.f32 %v1717, %v1810
      %1820 = vst [vmem:[#allocation3] sm:$0xff] %v1812
      %1821 = vst [vmem:[#allocation3 + $0x8] sm:$0xff] %v1813
      %1822 = vst [vmem:[#allocation3 + $0x10] sm:$0xff] %v1814
      %1823 = vst [vmem:[#allocation3 + $0x18] sm:$0xff] %v1815
      %1824 = vst [vmem:[#allocation3 + $0x20] sm:$0xff] %v1816
      %1825 = vst [vmem:[#allocation3 + $0x28] sm:$0xff] %v1817
      %1826 = vst [vmem:[#allocation3 + $0x30] sm:$0xff] %v1818
      %1827 = vst [vmem:[#allocation3 + $0x38] sm:$0xff] %v1819
      %s1828 = scalar_lea.vmem [#allocation2], 72
      %v1829 = vld [vmem:[%s1828 + $0x6] sm:$0xff]
      %v1830 = vld [vmem:[%s1828 + $0x1e] sm:$0xff]
      %v1831 = vld [vmem:[%s1828 + $0x36] sm:$0xff]
      %v1832 = vld [vmem:[%s1828 + $0x4e] sm:$0xff]
      %v1833 = vld [vmem:[%s1828 + $0x66] sm:$0xff]
      %v1834 = vld [vmem:[%s1828 + $0x7e] sm:$0xff]
      %v1835 = vld [vmem:[%s1828 + $0x96] sm:$0xff]
      %v1836 = vld [vmem:[%s1828 + $0xae] sm:$0xff]
      %v1837 = vpack.c.bf16 %v1830, %v1829
      %v1838 = vpack.c.bf16 %v1832, %v1831
      %v1839 = vpack.c.bf16 %v1834, %v1833
      %v1840 = vpack.c.bf16 %v1836, %v1835
      %v1841 = vld [vmem:[#allocation3] sm:$0xff]
      %v1842 = vld [vmem:[#allocation3 + $0x8] sm:$0xff]
      %v1843 = vld [vmem:[#allocation3 + $0x10] sm:$0xff]
      %v1844 = vld [vmem:[#allocation3 + $0x18] sm:$0xff]
      %v1845 = vld [vmem:[#allocation3 + $0x20] sm:$0xff]
      %v1846 = vld [vmem:[#allocation3 + $0x28] sm:$0xff]
      %v1847 = vld [vmem:[#allocation3 + $0x30] sm:$0xff]
      %v1848 = vld [vmem:[#allocation3 + $0x38] sm:$0xff]
      %s1849 = scalar_lea.vmem %s1, 768
      %v1850 = vld [vmem:[%s1849] sm:$0xf]
      %v1851 = vld [vmem:[%s1849 + $0x4] sm:$0xf]
      %v1852 = vld [vmem:[%s1849 + $0x8] sm:$0xf]
      %v1853 = vld [vmem:[%s1849 + $0xc] sm:$0xf]
      %v1854 = vld [vmem:[%s1849 + $0x10] sm:$0xf]
      %v1855 = vld [vmem:[%s1849 + $0x14] sm:$0xf]
      %v1856 = vld [vmem:[%s1849 + $0x18] sm:$0xf]
      %v1857 = vld [vmem:[%s1849 + $0x1c] sm:$0xf]
      %v1858 = vld [vmem:[%s1849 + $0x20] sm:$0xf]
      %v1859 = vld [vmem:[%s1849 + $0x24] sm:$0xf]
      %v1860 = vld [vmem:[%s1849 + $0x28] sm:$0xf]
      %v1861 = vld [vmem:[%s1849 + $0x2c] sm:$0xf]
      %v1862 = vld [vmem:[%s1849 + $0x30] sm:$0xf]
      %v1863 = vld [vmem:[%s1849 + $0x34] sm:$0xf]
      %v1864 = vld [vmem:[%s1849 + $0x38] sm:$0xf]
      %v1865 = vld [vmem:[%s1849 + $0x3c] sm:$0xf]
      %v1882 = vunpack.c.l.b16 %v1850
      %v1883 = vunpack.c.l.b16 %v1851
      %v1884 = vunpack.c.l.b16 %v1852
      %v1885 = vunpack.c.l.b16 %v1853
      %v1886 = vunpack.c.l.b16 %v1854
      %v1887 = vunpack.c.l.b16 %v1855
      %v1888 = vunpack.c.l.b16 %v1856
      %v1889 = vunpack.c.l.b16 %v1857
      %v1890 = vunpack.c.l.b16 %v1858
      %v1891 = vunpack.c.l.b16 %v1859
      %v1892 = vunpack.c.l.b16 %v1860
      %v1893 = vunpack.c.l.b16 %v1861
      %v1894 = vunpack.c.l.b16 %v1862
      %v1895 = vunpack.c.l.b16 %v1863
      %v1896 = vunpack.c.l.b16 %v1864
      %v1897 = vunpack.c.l.b16 %v1865
      %v1898 = vpack.c.b16 %v1883, %v1882
      %v1899 = vpack.c.b16 %v1885, %v1884
      %v1900 = vpack.c.b16 %v1887, %v1886
      %v1901 = vpack.c.b16 %v1889, %v1888
      %v1902 = vpack.c.b16 %v1891, %v1890
      %v1903 = vpack.c.b16 %v1893, %v1892
      %v1904 = vpack.c.b16 %v1895, %v1894
      %v1905 = vpack.c.b16 %v1897, %v1896
      %1914 = vmatpush.bf16.msra.mxu0 %v1905
      %1915 = vmatpush.bf16.msra.mxu0 %v1904
      %1916 = vmatpush.bf16.msra.mxu0 %v1903
      %1917 = vmatpush.bf16.msra.mxu0 %v1902
      %1918 = vmatpush.bf16.msra.mxu0 %v1901
      %1919 = vmatpush.bf16.msra.mxu0 %v1900
      %1920 = vmatpush.bf16.msra.mxu0 %v1899
      %1921 = vmatpush.bf16.msra.mxu0 %v1898
      %1922 = vmatmul.bf16.gmra.mxu0 %v1837
      %v1923 = vpop.f32.mrf.mxu0
      %v1924 = vadd.f32 0.0, %v1923
      %v1925 = vpop.f32.mrf.mxu0
      %v1926 = vadd.f32 0.0, %v1925
      %1927 = vmatmul.bf16.gmra.mxu0 %v1838
      %v1928 = vpop.f32.mrf.mxu0
      %v1929 = vadd.f32 0.0, %v1928
      %v1930 = vpop.f32.mrf.mxu0
      %v1931 = vadd.f32 0.0, %v1930
      %1932 = vmatmul.bf16.gmra.mxu0 %v1839
      %v1933 = vpop.f32.mrf.mxu0
      %v1934 = vadd.f32 0.0, %v1933
      %v1935 = vpop.f32.mrf.mxu0
      %v1936 = vadd.f32 0.0, %v1935
      %1937 = vmatmul.bf16.gmra.mxu0 %v1840
      %v1938 = vpop.f32.mrf.mxu0
      %v1939 = vadd.f32 0.0, %v1938
      %v1940 = vpop.f32.mrf.mxu0
      %v1941 = vadd.f32 0.0, %v1940
      %1942 = vdwg.mxu0
      %v1943 = vadd.f32 %v1841, %v1924
      %v1944 = vadd.f32 %v1842, %v1926
      %v1945 = vadd.f32 %v1843, %v1929
      %v1946 = vadd.f32 %v1844, %v1931
      %v1947 = vadd.f32 %v1845, %v1934
      %v1948 = vadd.f32 %v1846, %v1936
      %v1949 = vadd.f32 %v1847, %v1939
      %v1950 = vadd.f32 %v1848, %v1941
      %1951 = vst [vmem:[#allocation3] sm:$0xff] %v1943
      %1952 = vst [vmem:[#allocation3 + $0x8] sm:$0xff] %v1944
      %1953 = vst [vmem:[#allocation3 + $0x10] sm:$0xff] %v1945
      %1954 = vst [vmem:[#allocation3 + $0x18] sm:$0xff] %v1946
      %1955 = vst [vmem:[#allocation3 + $0x20] sm:$0xff] %v1947
      %1956 = vst [vmem:[#allocation3 + $0x28] sm:$0xff] %v1948
      %1957 = vst [vmem:[#allocation3 + $0x30] sm:$0xff] %v1949
      %1958 = vst [vmem:[#allocation3 + $0x38] sm:$0xff] %v1950
      %v1959 = vld [vmem:[%s1828 + $0x7] sm:$0xff]
      %v1960 = vld [vmem:[%s1828 + $0x1f] sm:$0xff]
      %v1961 = vld [vmem:[%s1828 + $0x37] sm:$0xff]
      %v1962 = vld [vmem:[%s1828 + $0x4f] sm:$0xff]
      %v1963 = vld [vmem:[%s1828 + $0x67] sm:$0xff]
      %v1964 = vld [vmem:[%s1828 + $0x7f] sm:$0xff]
      %v1965 = vld [vmem:[%s1828 + $0x97] sm:$0xff]
      %v1966 = vld [vmem:[%s1828 + $0xaf] sm:$0xff]
      %v1967 = vpack.c.bf16 %v1960, %v1959
      %v1968 = vpack.c.bf16 %v1962, %v1961
      %v1969 = vpack.c.bf16 %v1964, %v1963
      %v1970 = vpack.c.bf16 %v1966, %v1965
      %v1971 = vld [vmem:[#allocation3] sm:$0xff]
      %v1972 = vld [vmem:[#allocation3 + $0x8] sm:$0xff]
      %v1973 = vld [vmem:[#allocation3 + $0x10] sm:$0xff]
      %v1974 = vld [vmem:[#allocation3 + $0x18] sm:$0xff]
      %v1975 = vld [vmem:[#allocation3 + $0x20] sm:$0xff]
      %v1976 = vld [vmem:[#allocation3 + $0x28] sm:$0xff]
      %v1977 = vld [vmem:[#allocation3 + $0x30] sm:$0xff]
      %v1978 = vld [vmem:[#allocation3 + $0x38] sm:$0xff]
      %s1979 = scalar_lea.vmem %s1, 832
      %v1980 = vld [vmem:[%s1979] sm:$0xf]
      %v1981 = vld [vmem:[%s1979 + $0x4] sm:$0xf]
      %v1982 = vld [vmem:[%s1979 + $0x8] sm:$0xf]
      %v1983 = vld [vmem:[%s1979 + $0xc] sm:$0xf]
      %v1984 = vld [vmem:[%s1979 + $0x10] sm:$0xf]
      %v1985 = vld [vmem:[%s1979 + $0x14] sm:$0xf]
      %v1986 = vld [vmem:[%s1979 + $0x18] sm:$0xf]
      %v1987 = vld [vmem:[%s1979 + $0x1c] sm:$0xf]
      %v1988 = vld [vmem:[%s1979 + $0x20] sm:$0xf]
      %v1989 = vld [vmem:[%s1979 + $0x24] sm:$0xf]
      %v1990 = vld [vmem:[%s1979 + $0x28] sm:$0xf]
      %v1991 = vld [vmem:[%s1979 + $0x2c] sm:$0xf]
      %v1992 = vld [vmem:[%s1979 + $0x30] sm:$0xf]
      %v1993 = vld [vmem:[%s1979 + $0x34] sm:$0xf]
      %v1994 = vld [vmem:[%s1979 + $0x38] sm:$0xf]
      %v1995 = vld [vmem:[%s1979 + $0x3c] sm:$0xf]
      %v2012 = vunpack.c.l.b16 %v1980
      %v2013 = vunpack.c.l.b16 %v1981
      %v2014 = vunpack.c.l.b16 %v1982
      %v2015 = vunpack.c.l.b16 %v1983
      %v2016 = vunpack.c.l.b16 %v1984
      %v2017 = vunpack.c.l.b16 %v1985
      %v2018 = vunpack.c.l.b16 %v1986
      %v2019 = vunpack.c.l.b16 %v1987
      %v2020 = vunpack.c.l.b16 %v1988
      %v2021 = vunpack.c.l.b16 %v1989
      %v2022 = vunpack.c.l.b16 %v1990
      %v2023 = vunpack.c.l.b16 %v1991
      %v2024 = vunpack.c.l.b16 %v1992
      %v2025 = vunpack.c.l.b16 %v1993
      %v2026 = vunpack.c.l.b16 %v1994
      %v2027 = vunpack.c.l.b16 %v1995
      %v2028 = vpack.c.b16 %v2013, %v2012
      %v2029 = vpack.c.b16 %v2015, %v2014
      %v2030 = vpack.c.b16 %v2017, %v2016
      %v2031 = vpack.c.b16 %v2019, %v2018
      %v2032 = vpack.c.b16 %v2021, %v2020
      %v2033 = vpack.c.b16 %v2023, %v2022
      %v2034 = vpack.c.b16 %v2025, %v2024
      %v2035 = vpack.c.b16 %v2027, %v2026
      %2044 = vmatpush.bf16.msra.mxu0 %v2035
      %2045 = vmatpush.bf16.msra.mxu0 %v2034
      %2046 = vmatpush.bf16.msra.mxu0 %v2033
      %2047 = vmatpush.bf16.msra.mxu0 %v2032
      %2048 = vmatpush.bf16.msra.mxu0 %v2031
      %2049 = vmatpush.bf16.msra.mxu0 %v2030
      %2050 = vmatpush.bf16.msra.mxu0 %v2029
      %2051 = vmatpush.bf16.msra.mxu0 %v2028
      %2052 = vmatmul.bf16.gmra.mxu0 %v1967
      %v2053 = vpop.f32.mrf.mxu0
      %v2054 = vadd.f32 0.0, %v2053
      %v2055 = vpop.f32.mrf.mxu0
      %v2056 = vadd.f32 0.0, %v2055
      %2057 = vmatmul.bf16.gmra.mxu0 %v1968
      %v2058 = vpop.f32.mrf.mxu0
      %v2059 = vadd.f32 0.0, %v2058
      %v2060 = vpop.f32.mrf.mxu0
      %v2061 = vadd.f32 0.0, %v2060
      %2062 = vmatmul.bf16.gmra.mxu0 %v1969
      %v2063 = vpop.f32.mrf.mxu0
      %v2064 = vadd.f32 0.0, %v2063
      %v2065 = vpop.f32.mrf.mxu0
      %v2066 = vadd.f32 0.0, %v2065
      %2067 = vmatmul.bf16.gmra.mxu0 %v1970
      %v2068 = vpop.f32.mrf.mxu0
      %v2069 = vadd.f32 0.0, %v2068
      %v2070 = vpop.f32.mrf.mxu0
      %v2071 = vadd.f32 0.0, %v2070
      %2072 = vdwg.mxu0
      %v2073 = vadd.f32 %v1971, %v2054
      %v2074 = vadd.f32 %v1972, %v2056
      %v2075 = vadd.f32 %v1973, %v2059
      %v2076 = vadd.f32 %v1974, %v2061
      %v2077 = vadd.f32 %v1975, %v2064
      %v2078 = vadd.f32 %v1976, %v2066
      %v2079 = vadd.f32 %v1977, %v2069
      %v2080 = vadd.f32 %v1978, %v2071
      %2081 = vst [vmem:[#allocation3] sm:$0xff] %v2073
      %2082 = vst [vmem:[#allocation3 + $0x8] sm:$0xff] %v2074
      %2083 = vst [vmem:[#allocation3 + $0x10] sm:$0xff] %v2075
      %2084 = vst [vmem:[#allocation3 + $0x18] sm:$0xff] %v2076
      %2085 = vst [vmem:[#allocation3 + $0x20] sm:$0xff] %v2077
      %2086 = vst [vmem:[#allocation3 + $0x28] sm:$0xff] %v2078
      %2087 = vst [vmem:[#allocation3 + $0x30] sm:$0xff] %v2079
      %2088 = vst [vmem:[#allocation3 + $0x38] sm:$0xff] %v2080
      %v2089 = vld [vmem:[%s1828 + $0x8] sm:$0xff]
      %v2090 = vld [vmem:[%s1828 + $0x20] sm:$0xff]
      %v2091 = vld [vmem:[%s1828 + $0x38] sm:$0xff]
      %v2092 = vld [vmem:[%s1828 + $0x50] sm:$0xff]
      %v2093 = vld [vmem:[%s1828 + $0x68] sm:$0xff]
      %v2094 = vld [vmem:[%s1828 + $0x80] sm:$0xff]
      %v2095 = vld [vmem:[%s1828 + $0x98] sm:$0xff]
      %v2096 = vld [vmem:[%s1828 + $0xb0] sm:$0xff]
      %v2097 = vpack.c.bf16 %v2090, %v2089
      %v2098 = vpack.c.bf16 %v2092, %v2091
      %v2099 = vpack.c.bf16 %v2094, %v2093
      %v2100 = vpack.c.bf16 %v2096, %v2095
      %v2101 = vld [vmem:[#allocation3] sm:$0xff]
      %v2102 = vld [vmem:[#allocation3 + $0x8] sm:$0xff]
      %v2103 = vld [vmem:[#allocation3 + $0x10] sm:$0xff]
      %v2104 = vld [vmem:[#allocation3 + $0x18] sm:$0xff]
      %v2105 = vld [vmem:[#allocation3 + $0x20] sm:$0xff]
      %v2106 = vld [vmem:[#allocation3 + $0x28] sm:$0xff]
      %v2107 = vld [vmem:[#allocation3 + $0x30] sm:$0xff]
      %v2108 = vld [vmem:[#allocation3 + $0x38] sm:$0xff]
      %s2109 = scalar_lea.vmem %s1, 896
      %v2110 = vld [vmem:[%s2109] sm:$0xf]
      %v2111 = vld [vmem:[%s2109 + $0x4] sm:$0xf]
      %v2112 = vld [vmem:[%s2109 + $0x8] sm:$0xf]
      %v2113 = vld [vmem:[%s2109 + $0xc] sm:$0xf]
      %v2114 = vld [vmem:[%s2109 + $0x10] sm:$0xf]
      %v2115 = vld [vmem:[%s2109 + $0x14] sm:$0xf]
      %v2116 = vld [vmem:[%s2109 + $0x18] sm:$0xf]
      %v2117 = vld [vmem:[%s2109 + $0x1c] sm:$0xf]
      %v2118 = vld [vmem:[%s2109 + $0x20] sm:$0xf]
      %v2119 = vld [vmem:[%s2109 + $0x24] sm:$0xf]
      %v2120 = vld [vmem:[%s2109 + $0x28] sm:$0xf]
      %v2121 = vld [vmem:[%s2109 + $0x2c] sm:$0xf]
      %v2122 = vld [vmem:[%s2109 + $0x30] sm:$0xf]
      %v2123 = vld [vmem:[%s2109 + $0x34] sm:$0xf]
      %v2124 = vld [vmem:[%s2109 + $0x38] sm:$0xf]
      %v2125 = vld [vmem:[%s2109 + $0x3c] sm:$0xf]
      %v2142 = vunpack.c.l.b16 %v2110
      %v2143 = vunpack.c.l.b16 %v2111
      %v2144 = vunpack.c.l.b16 %v2112
      %v2145 = vunpack.c.l.b16 %v2113
      %v2146 = vunpack.c.l.b16 %v2114
      %v2147 = vunpack.c.l.b16 %v2115
      %v2148 = vunpack.c.l.b16 %v2116
      %v2149 = vunpack.c.l.b16 %v2117
      %v2150 = vunpack.c.l.b16 %v2118
      %v2151 = vunpack.c.l.b16 %v2119
      %v2152 = vunpack.c.l.b16 %v2120
      %v2153 = vunpack.c.l.b16 %v2121
      %v2154 = vunpack.c.l.b16 %v2122
      %v2155 = vunpack.c.l.b16 %v2123
      %v2156 = vunpack.c.l.b16 %v2124
      %v2157 = vunpack.c.l.b16 %v2125
      %v2158 = vpack.c.b16 %v2143, %v2142
      %v2159 = vpack.c.b16 %v2145, %v2144
      %v2160 = vpack.c.b16 %v2147, %v2146
      %v2161 = vpack.c.b16 %v2149, %v2148
      %v2162 = vpack.c.b16 %v2151, %v2150
      %v2163 = vpack.c.b16 %v2153, %v2152
      %v2164 = vpack.c.b16 %v2155, %v2154
      %v2165 = vpack.c.b16 %v2157, %v2156
      %2174 = vmatpush.bf16.msra.mxu0 %v2165
      %2175 = vmatpush.bf16.msra.mxu0 %v2164
      %2176 = vmatpush.bf16.msra.mxu0 %v2163
      %2177 = vmatpush.bf16.msra.mxu0 %v2162
      %2178 = vmatpush.bf16.msra.mxu0 %v2161
      %2179 = vmatpush.bf16.msra.mxu0 %v2160
      %2180 = vmatpush.bf16.msra.mxu0 %v2159
      %2181 = vmatpush.bf16.msra.mxu0 %v2158
      %2182 = vmatmul.bf16.gmra.mxu0 %v2097
      %v2183 = vpop.f32.mrf.mxu0
      %v2184 = vadd.f32 0.0, %v2183
      %v2185 = vpop.f32.mrf.mxu0
      %v2186 = vadd.f32 0.0, %v2185
      %2187 = vmatmul.bf16.gmra.mxu0 %v2098
      %v2188 = vpop.f32.mrf.mxu0
      %v2189 = vadd.f32 0.0, %v2188
      %v2190 = vpop.f32.mrf.mxu0
      %v2191 = vadd.f32 0.0, %v2190
      %2192 = vmatmul.bf16.gmra.mxu0 %v2099
      %v2193 = vpop.f32.mrf.mxu0
      %v2194 = vadd.f32 0.0, %v2193
      %v2195 = vpop.f32.mrf.mxu0
      %v2196 = vadd.f32 0.0, %v2195
      %2197 = vmatmul.bf16.gmra.mxu0 %v2100
      %v2198 = vpop.f32.mrf.mxu0
      %v2199 = vadd.f32 0.0, %v2198
      %v2200 = vpop.f32.mrf.mxu0
      %v2201 = vadd.f32 0.0, %v2200
      %2202 = vdwg.mxu0
      %v2203 = vadd.f32 %v2101, %v2184
      %v2204 = vadd.f32 %v2102, %v2186
      %v2205 = vadd.f32 %v2103, %v2189
      %v2206 = vadd.f32 %v2104, %v2191
      %v2207 = vadd.f32 %v2105, %v2194
      %v2208 = vadd.f32 %v2106, %v2196
      %v2209 = vadd.f32 %v2107, %v2199
      %v2210 = vadd.f32 %v2108, %v2201
      %2211 = vst [vmem:[#allocation3] sm:$0xff] %v2203
      %2212 = vst [vmem:[#allocation3 + $0x8] sm:$0xff] %v2204
      %2213 = vst [vmem:[#allocation3 + $0x10] sm:$0xff] %v2205
      %2214 = vst [vmem:[#allocation3 + $0x18] sm:$0xff] %v2206
      %2215 = vst [vmem:[#allocation3 + $0x20] sm:$0xff] %v2207
      %2216 = vst [vmem:[#allocation3 + $0x28] sm:$0xff] %v2208
      %2217 = vst [vmem:[#allocation3 + $0x30] sm:$0xff] %v2209
      %2218 = vst [vmem:[#allocation3 + $0x38] sm:$0xff] %v2210
      %v2219 = vld [vmem:[%s1828 + $0x9] sm:$0xff]
      %v2220 = vld [vmem:[%s1828 + $0x21] sm:$0xff]
      %v2221 = vld [vmem:[%s1828 + $0x39] sm:$0xff]
      %v2222 = vld [vmem:[%s1828 + $0x51] sm:$0xff]
      %v2223 = vld [vmem:[%s1828 + $0x69] sm:$0xff]
      %v2224 = vld [vmem:[%s1828 + $0x81] sm:$0xff]
      %v2225 = vld [vmem:[%s1828 + $0x99] sm:$0xff]
      %v2226 = vld [vmem:[%s1828 + $0xb1] sm:$0xff]
      %v2227 = vpack.c.bf16 %v2220, %v2219
      %v2228 = vpack.c.bf16 %v2222, %v2221
      %v2229 = vpack.c.bf16 %v2224, %v2223
      %v2230 = vpack.c.bf16 %v2226, %v2225
      %v2231 = vld [vmem:[#allocation3] sm:$0xff]
      %v2232 = vld [vmem:[#allocation3 + $0x8] sm:$0xff]
      %v2233 = vld [vmem:[#allocation3 + $0x10] sm:$0xff]
      %v2234 = vld [vmem:[#allocation3 + $0x18] sm:$0xff]
      %v2235 = vld [vmem:[#allocation3 + $0x20] sm:$0xff]
      %v2236 = vld [vmem:[#allocation3 + $0x28] sm:$0xff]
      %v2237 = vld [vmem:[#allocation3 + $0x30] sm:$0xff]
      %v2238 = vld [vmem:[#allocation3 + $0x38] sm:$0xff]
      %s2239 = scalar_lea.vmem %s1, 960
      %v2240 = vld [vmem:[%s2239] sm:$0xf]
      %v2241 = vld [vmem:[%s2239 + $0x4] sm:$0xf]
      %v2242 = vld [vmem:[%s2239 + $0x8] sm:$0xf]
      %v2243 = vld [vmem:[%s2239 + $0xc] sm:$0xf]
      %v2244 = vld [vmem:[%s2239 + $0x10] sm:$0xf]
      %v2245 = vld [vmem:[%s2239 + $0x14] sm:$0xf]
      %v2246 = vld [vmem:[%s2239 + $0x18] sm:$0xf]
      %v2247 = vld [vmem:[%s2239 + $0x1c] sm:$0xf]
      %v2248 = vld [vmem:[%s2239 + $0x20] sm:$0xf]
      %v2249 = vld [vmem:[%s2239 + $0x24] sm:$0xf]
      %v2250 = vld [vmem:[%s2239 + $0x28] sm:$0xf]
      %v2251 = vld [vmem:[%s2239 + $0x2c] sm:$0xf]
      %v2252 = vld [vmem:[%s2239 + $0x30] sm:$0xf]
      %v2253 = vld [vmem:[%s2239 + $0x34] sm:$0xf]
      %v2254 = vld [vmem:[%s2239 + $0x38] sm:$0xf]
      %v2255 = vld [vmem:[%s2239 + $0x3c] sm:$0xf]
      %v2272 = vunpack.c.l.b16 %v2240
      %v2273 = vunpack.c.l.b16 %v2241
      %v2274 = vunpack.c.l.b16 %v2242
      %v2275 = vunpack.c.l.b16 %v2243
      %v2276 = vunpack.c.l.b16 %v2244
      %v2277 = vunpack.c.l.b16 %v2245
      %v2278 = vunpack.c.l.b16 %v2246
      %v2279 = vunpack.c.l.b16 %v2247
      %v2280 = vunpack.c.l.b16 %v2248
      %v2281 = vunpack.c.l.b16 %v2249
      %v2282 = vunpack.c.l.b16 %v2250
      %v2283 = vunpack.c.l.b16 %v2251
      %v2284 = vunpack.c.l.b16 %v2252
      %v2285 = vunpack.c.l.b16 %v2253
      %v2286 = vunpack.c.l.b16 %v2254
      %v2287 = vunpack.c.l.b16 %v2255
      %v2288 = vpack.c.b16 %v2273, %v2272
      %v2289 = vpack.c.b16 %v2275, %v2274
      %v2290 = vpack.c.b16 %v2277, %v2276
      %v2291 = vpack.c.b16 %v2279, %v2278
      %v2292 = vpack.c.b16 %v2281, %v2280
      %v2293 = vpack.c.b16 %v2283, %v2282
      %v2294 = vpack.c.b16 %v2285, %v2284
      %v2295 = vpack.c.b16 %v2287, %v2286
      %2304 = vmatpush.bf16.msra.mxu0 %v2295
      %2305 = vmatpush.bf16.msra.mxu0 %v2294
      %2306 = vmatpush.bf16.msra.mxu0 %v2293
      %2307 = vmatpush.bf16.msra.mxu0 %v2292
      %2308 = vmatpush.bf16.msra.mxu0 %v2291
      %2309 = vmatpush.bf16.msra.mxu0 %v2290
      %2310 = vmatpush.bf16.msra.mxu0 %v2289
      %2311 = vmatpush.bf16.msra.mxu0 %v2288
      %2312 = vmatmul.bf16.gmra.mxu0 %v2227
      %v2313 = vpop.f32.mrf.mxu0
      %v2314 = vadd.f32 0.0, %v2313
      %v2315 = vpop.f32.mrf.mxu0
      %v2316 = vadd.f32 0.0, %v2315
      %2317 = vmatmul.bf16.gmra.mxu0 %v2228
      %v2318 = vpop.f32.mrf.mxu0
      %v2319 = vadd.f32 0.0, %v2318
      %v2320 = vpop.f32.mrf.mxu0
      %v2321 = vadd.f32 0.0, %v2320
      %2322 = vmatmul.bf16.gmra.mxu0 %v2229
      %v2323 = vpop.f32.mrf.mxu0
      %v2324 = vadd.f32 0.0, %v2323
      %v2325 = vpop.f32.mrf.mxu0
      %v2326 = vadd.f32 0.0, %v2325
      %2327 = vmatmul.bf16.gmra.mxu0 %v2230
      %v2328 = vpop.f32.mrf.mxu0
      %v2329 = vadd.f32 0.0, %v2328
      %v2330 = vpop.f32.mrf.mxu0
      %v2331 = vadd.f32 0.0, %v2330
      %2332 = vdwg.mxu0
      %v2333 = vadd.f32 %v2231, %v2314
      %v2334 = vadd.f32 %v2232, %v2316
      %v2335 = vadd.f32 %v2233, %v2319
      %v2336 = vadd.f32 %v2234, %v2321
      %v2337 = vadd.f32 %v2235, %v2324
      %v2338 = vadd.f32 %v2236, %v2326
      %v2339 = vadd.f32 %v2237, %v2329
      %v2340 = vadd.f32 %v2238, %v2331
      %2341 = vst [vmem:[#allocation3] sm:$0xff] %v2333
      %2342 = vst [vmem:[#allocation3 + $0x8] sm:$0xff] %v2334
      %2343 = vst [vmem:[#allocation3 + $0x10] sm:$0xff] %v2335
      %2344 = vst [vmem:[#allocation3 + $0x18] sm:$0xff] %v2336
      %2345 = vst [vmem:[#allocation3 + $0x20] sm:$0xff] %v2337
      %2346 = vst [vmem:[#allocation3 + $0x28] sm:$0xff] %v2338
      %2347 = vst [vmem:[#allocation3 + $0x30] sm:$0xff] %v2339
      %2348 = vst [vmem:[#allocation3 + $0x38] sm:$0xff] %v2340
      %v2349 = vld [vmem:[#allocation3] sm:$0xff]
      %v2350 = vld [vmem:[#allocation3 + $0x8] sm:$0xff]
      %v2351 = vld [vmem:[#allocation3 + $0x10] sm:$0xff]
      %v2352 = vld [vmem:[#allocation3 + $0x18] sm:$0xff]
      %v2353 = vld [vmem:[#allocation3 + $0x20] sm:$0xff]
      %v2354 = vld [vmem:[#allocation3 + $0x28] sm:$0xff]
      %v2355 = vld [vmem:[#allocation3 + $0x30] sm:$0xff]
      %v2356 = vld [vmem:[#allocation3 + $0x38] sm:$0xff]
      %v2357 = vld [vmem:[%s2] sm:$0x1]
      %v2359 = vperm.slane %v2357, 0
      %v2361 = vadd.f32 %v2349, %v2359
      %v2362 = vadd.f32 %v2350, %v2359
      %v2363 = vadd.f32 %v2351, %v2359
      %v2364 = vadd.f32 %v2352, %v2359
      %v2365 = vadd.f32 %v2353, %v2359
      %v2366 = vadd.f32 %v2354, %v2359
      %v2367 = vadd.f32 %v2355, %v2359
      %v2368 = vadd.f32 %v2356, %v2359
      %vm2369 = vcmp.ge.f32.partialorder %v2361, 0.0
      %vm2370 = vcmp.ge.f32.partialorder %v2362, 0.0
      %vm2371 = vcmp.ge.f32.partialorder %v2363, 0.0
      %vm2372 = vcmp.ge.f32.partialorder %v2364, 0.0
      %vm2373 = vcmp.ge.f32.partialorder %v2365, 0.0
      %vm2374 = vcmp.ge.f32.partialorder %v2366, 0.0
      %vm2375 = vcmp.ge.f32.partialorder %v2367, 0.0
      %vm2376 = vcmp.ge.f32.partialorder %v2368, 0.0
      %v2377 = vmul.f32 %v2361, 0.2
      %v2378 = vmul.f32 %v2362, 0.2
      %v2379 = vmul.f32 %v2363, 0.2
      %v2380 = vmul.f32 %v2364, 0.2
      %v2381 = vmul.f32 %v2365, 0.2
      %v2382 = vmul.f32 %v2366, 0.2
      %v2383 = vmul.f32 %v2367, 0.2
      %v2384 = vmul.f32 %v2368, 0.2
      %v2385 = vsel %vm2369, %v2361, %v2377
      %v2386 = vsel %vm2370, %v2362, %v2378
      %v2387 = vsel %vm2371, %v2363, %v2379
      %v2388 = vsel %vm2372, %v2364, %v2380
      %v2389 = vsel %vm2373, %v2365, %v2381
      %v2390 = vsel %vm2374, %v2366, %v2382
      %v2391 = vsel %vm2375, %v2367, %v2383
      %v2392 = vsel %vm2376, %v2368, %v2384
      %v2393 = vpack.c.bf16 %v2385, %v2385
      %v2394 = vpack.c.bf16 %v2386, %v2386
      %v2395 = vpack.c.bf16 %v2387, %v2387
      %v2396 = vpack.c.bf16 %v2388, %v2388
      %v2397 = vpack.c.bf16 %v2389, %v2389
      %v2398 = vpack.c.bf16 %v2390, %v2390
      %v2399 = vpack.c.bf16 %v2391, %v2391
      %v2400 = vpack.c.bf16 %v2392, %v2392
      %2401 = vst [vmem:[%s204] sm:$0xf] %v2393
      %2402 = vst [vmem:[%s204 + $0x4] sm:$0xf] %v2394
      %2403 = vst [vmem:[%s204 + $0x8] sm:$0xf] %v2395
      %2404 = vst [vmem:[%s204 + $0xc] sm:$0xf] %v2396
      %2405 = vst [vmem:[%s204 + $0x10] sm:$0xf] %v2397
      %2406 = vst [vmem:[%s204 + $0x14] sm:$0xf] %v2398
      %2407 = vst [vmem:[%s204 + $0x18] sm:$0xf] %v2399
      %2408 = vst [vmem:[%s204 + $0x1c] sm:$0xf] %v2400
      %v2409 = vunpack.c.l.bf16 %v2393
      %v2410 = vunpack.c.l.bf16 %v2394
      %v2411 = vunpack.c.l.bf16 %v2395
      %v2412 = vunpack.c.l.bf16 %v2396
      %v2413 = vunpack.c.l.bf16 %v2397
      %v2414 = vunpack.c.l.bf16 %v2398
      %v2415 = vunpack.c.l.bf16 %v2399
      %v2416 = vunpack.c.l.bf16 %v2400
      %v2417 = vadd.f32 %v2409, %v2410
      %v2418 = vadd.f32 %v2417, %v2411
      %v2419 = vadd.f32 %v2418, %v2412
      %v2420 = vadd.f32 %v2419, %v2413
      %v2421 = vadd.f32 %v2420, %v2414
      %v2422 = vadd.f32 %v2421, %v2415
      %v2423 = vadd.f32 %v2422, %v2416
      %v2424 = vrot.slane %v2423, 4
      %v2425 = vadd.f32 %v2423, %v2424
      %v2426 = vrot.slane %v2425, 2
      %v2427 = vadd.f32 %v2425, %v2426
      %v2428 = vrot.slane %v2427, 1
      %v2429 = vadd.f32 %v2427, %v2428
      %v2430 = vmul.f32 %v2409, %v2409
      %v2431 = vmul.f32 %v2410, %v2410
      %v2432 = vmul.f32 %v2411, %v2411
      %v2433 = vmul.f32 %v2412, %v2412
      %v2434 = vmul.f32 %v2413, %v2413
      %v2435 = vmul.f32 %v2414, %v2414
      %v2436 = vmul.f32 %v2415, %v2415
      %v2437 = vmul.f32 %v2416, %v2416
      %v2438 = vadd.f32 %v2430, %v2431
      %v2439 = vadd.f32 %v2438, %v2432
      %v2440 = vadd.f32 %v2439, %v2433
      %v2441 = vadd.f32 %v2440, %v2434
      %v2442 = vadd.f32 %v2441, %v2435
      %v2443 = vadd.f32 %v2442, %v2436
      %v2444 = vadd.f32 %v2443, %v2437
      %v2445 = vrot.slane %v2444, 4
      %v2446 = vadd.f32 %v2444, %v2445
      %v2447 = vrot.slane %v2446, 2
      %v2448 = vadd.f32 %v2446, %v2447
      %v2449 = vrot.slane %v2448, 1
      %v2450 = vadd.f32 %v2448, %v2449
      %v2451 = vlaneseq
      %v2452 = vshrl.u32 %v2451, 7
      %vm2453 = vcmp.eq.s32.totalorder %v2452, 0
      %v2454 = vsel %vm2453, %v2429, 0.0
      %vm2455 = vcmp.eq.s32.totalorder %v2452, 1
      %v2456 = vsel %vm2455, %v2450, 0.0
      %v2457 = vadd.f32 %v2454, %v2456
      %2458 = vst [vmem:[%s209] sm:$0xff] %v2457
      %s2459 = smul.u32 8, %s16
      %p2460 = scmp.lt.s32.totalorder %s2459, 15
      %s2461 = scalar_select %p2460, %s2459, 15
      %s2462 = smul.addr %s2461, 4
      %s2463 = scalar_lea.vmem %s3, %s2462
      %p2464 = scmp.lt.s32.totalorder %s16, 1
      %s2465 = scalar_select %p2464, %s16, 1
      %s2466 = smul.addr %s2465, 8
      %s2467 = scalar_lea.vmem %s4, %s2466
      // Predicated region
      $region33: #{conv_block_forward.3} parent=31 // pred_check
        %p2468 = pneg %p102
      $region34: #{conv_block_forward.3} parent=31 // pred_check_branch
        %2470 = sbr.rel (%p2468) target = $region36
      $region35: #{conv_block_forward.3} parent=31 // pred_region
        %s2471 = smul.u32 8, %s16
      $region36: #{conv_block_forward.3} parent=31 // pred_fallthru
        _
      // Predicated region
      $region37: #{conv_block_forward.3} parent=31 // pred_check
        %p2472 = pneg %p128
      $region38: #{conv_block_forward.3} parent=31 // pred_check_branch
        %2474 = sbr.rel (%p2472) target = $region40
      $region39: #{conv_block_forward.3} parent=31 // pred_region
        _
      $region40: #{conv_block_forward.3} parent=31 // pred_fallthru
        _
    $region32: #{conv_block_forward.3} parent=5 // pred_fallthru
      _
    %p2475 = scmp.le.s32.totalorder 2, %s11
    // Predicated region
    $region41: #{conv_block_forward.3} parent=5 // pred_check
      %p2476 = pneg %p2475
    $region42: #{conv_block_forward.3} parent=5 // pred_check_branch
      %2478 = sbr.rel (%p2476) target = $region44
    $region43: #{conv_block_forward.3} parent=5 // pred_region
      %s2479 = ssub.s32 %s11, 2
      // Predicated region
      $region45: #{conv_block_forward.3} parent=43 // pred_check
        %p2480 = pneg %p108
      $region46: #{conv_block_forward.3} parent=43 // pred_check_branch
        %2482 = sbr.rel (%p2480) target = $region48
      $region47: #{conv_block_forward.3} parent=43 // pred_region
        %s2483 = smul.u32 8, %s17
        %p2484 = scmp.lt.s32.totalorder %s2483, 15
        %s2485 = scalar_select %p2484, %s2483, 15
        %s2486 = smul.addr %s2485, 4
        %s2487 = scalar_lea.vmem %s3, %s2486
      $region48: #{conv_block_forward.3} parent=43 // pred_fallthru
        _
      // Predicated region
      $region49: #{conv_block_forward.3} parent=43 // pred_check
        %p2488 = pneg %p134
      $region50: #{conv_block_forward.3} parent=43 // pred_check_branch
        %2490 = sbr.rel (%p2488) target = $region52
      $region51: #{conv_block_forward.3} parent=43 // pred_region
        %p2491 = scmp.lt.s32.totalorder %s17, 1
        %s2492 = scalar_select %p2491, %s17, 1
        %s2493 = smul.addr %s2492, 8
        %s2494 = scalar_lea.vmem %s4, %s2493
      $region52: #{conv_block_forward.3} parent=43 // pred_fallthru
        _
    $region44: #{conv_block_forward.3} parent=5 // pred_fallthru
      _
  $region6: #{conv_block_forward.3} parent=0 // loop_footer
    %s15 = sadd.s32 1, %s11
  $region7: #{conv_block_forward.3} parent=0 // loop_footer_branch
    %10 = sbr.rel target = $region3
  $region8: #{conv_block_forward.3} parent=0 // loop_exit
    _

</llo_original>
